<compile_context>
chip_gen: v6e
topology: v6e:2x2x1
jax: 0.10.0
libtpu: 0.0.40
codegen_flags: <defaults>
</compile_context>

<pallas_src>
import functools

import jax
import jax.numpy as jnp
from jax.experimental import pallas as pl
from jax.experimental.pallas import tpu as pltpu


def conv_stats_kernel(xp_ref, w_ref, y_ref, stats_ref, acc_ref, *,
                      k, stride, out_h, out_w):
    """One (image, Cout-tile) block: conv + partial BN statistics.

    xp_ref    : (1, Hp, Wp, Cin)   zero-padded NHWC input (bf16)
    w_ref     : (k, k, Cin, TCO)   HWIO weight tile (bf16, Cout zero-padded)
    y_ref     : (1, OH*OW, TCO)    conv output tile (f32)
    stats_ref : (1, 2, TCO)        [sum, sum of squares] over this tile (f32)
    acc_ref   : (OH*OW, TCO)       fp32 VMEM accumulator scratch
    """
    cin = xp_ref.shape[-1]
    rows = out_h * out_w

    acc_ref[...] = jnp.zeros_like(acc_ref)

    # k*k shifted tap windows -> MXU matmuls (bf16 operands, fp32 accumulate).
    for dy in range(k):          # static python loops -> unrolled
        for dx in range(k):
            if stride == 1:
                # Load the offset window straight from the ref: the vld does
                # the offset, no full-tensor relayout per tap.
                xs = xp_ref[0, pl.ds(dy, out_h), pl.ds(dx, out_w), :]
            else:
                # TODO(synk): push stride into the DMA (strided pl.ds /
                # space-to-depth in the wrapper) instead of value-slicing.
                span_h = (out_h - 1) * stride + 1
                span_w = (out_w - 1) * stride + 1
                xs = xp_ref[0, pl.ds(dy, span_h), pl.ds(dx, span_w), :]
                xs = xs[::stride, ::stride, :]
            xs = xs.reshape(rows, cin)                       # bf16
            acc_ref[...] += jnp.dot(xs, w_ref[dy, dx],       # bf16 x bf16
                                    preferred_element_type=jnp.float32)

    acc = acc_ref[...]
    y_ref[...] = acc[None].astype(y_ref.dtype)

    s1 = jnp.sum(acc, axis=0, keepdims=True)          # (1, TCO)
    s2 = jnp.sum(acc * acc, axis=0, keepdims=True)    # (1, TCO)
    stats_ref[...] = jnp.concatenate([s1, s2], axis=0)[None]


def bn_lrelu_kernel(y_ref, scale_ref, shift_ref, o_ref, *, neg_slope):
    """Elementwise BN apply + LeakyReLU on one (image, Cout-tile) block.

    y_ref     : (1, OH*OW, TCO) f32 conv output
    scale_ref : (1, TCO)  per-channel gamma * rsqrt(var + eps)
    shift_ref : (1, TCO)  per-channel beta - mean * scale
    """
    z = y_ref[...] * scale_ref[...] + shift_ref[...]
    o_ref[...] = jnp.where(z > 0, z, neg_slope * z).astype(o_ref.dtype)


def conv_unit(x_nchw, weight_oihw, gamma, beta, *, stride=1,
              eps=1e-5, neg_slope=0.1):
    """Pallas implementation of ConvUnit.forward. Input/output are NCHW f32."""
    cout, cin, k, _ = weight_oihw.shape
    n, cin_x, h, w_in = x_nchw.shape
    assert cin_x == cin
    pad = k // 2
    out_h = (h + 2 * pad - k) // stride + 1
    out_w = (w_in + 2 * pad - k) // stride + 1
    rows = out_h * out_w
    hp, wp = h + 2 * pad, w_in + 2 * pad

    TCO = 128                                   # lane-dense Cout tile
    cout_pad = ((cout + TCO - 1) // TCO) * TCO
    n_ct = cout_pad // TCO

    # ---- wrapper glue: layout conversion + padding (bf16 halves DMA bytes) --
    # TODO(synk): keep adjacent layers NHWC to drop the two transposes, and
    # handle the k//2 halo in-kernel to avoid the jnp.pad HBM pass.
    x_nhwc = jnp.transpose(x_nchw, (0, 2, 3, 1)).astype(jnp.bfloat16)
    xp = jnp.pad(x_nhwc, ((0, 0), (pad, pad), (pad, pad), (0, 0)))
    w_hwio = jnp.transpose(weight_oihw, (2, 3, 1, 0)).astype(jnp.bfloat16)
    w_hwio = jnp.pad(w_hwio, ((0, 0), (0, 0), (0, 0), (0, cout_pad - cout)))

    cparams = pltpu.CompilerParams(
        dimension_semantics=("parallel", "parallel"),   # both axes independent
        vmem_limit_bytes=32 * 1024 * 1024)              # safe on v5e/v6e/v7x

    # ---- pass 1: conv + per-(image, Cout-tile) partial BN statistics -------
    kern1 = functools.partial(conv_stats_kernel, k=k, stride=stride,
                              out_h=out_h, out_w=out_w)
    conv_flat, stats = pl.pallas_call(
        kern1,
        out_shape=(jax.ShapeDtypeStruct((n, rows, cout_pad), jnp.float32),
                   jax.ShapeDtypeStruct((n, 2, cout_pad), jnp.float32)),
        grid_spec=pltpu.PrefetchScalarGridSpec(
            num_scalar_prefetch=0,
            grid=(n, n_ct),
            in_specs=[
                pl.BlockSpec((1, hp, wp, cin), lambda i, c: (i, 0, 0, 0)),
                pl.BlockSpec((k, k, cin, TCO), lambda i, c: (0, 0, 0, c)),
            ],
            out_specs=(
                pl.BlockSpec((1, rows, TCO), lambda i, c: (i, 0, c)),
                pl.BlockSpec((1, 2, TCO), lambda i, c: (i, 0, c)),
            ),
            scratch_shapes=[pltpu.VMEM((rows, TCO), jnp.float32)]),
        compiler_params=cparams,
    )(xp, w_hwio)

    # ---- tiny per-channel reduction + scale/shift precompute (glue) --------
    count = float(n * rows)
    stats_sum = jnp.sum(stats, axis=0)                     # (2, cout_pad)
    mean = stats_sum[0] / count
    var = jnp.maximum(stats_sum[1] / count - mean * mean, 0.0)
    gamma_p = jnp.pad(gamma.astype(jnp.float32), (0, cout_pad - cout))
    beta_p = jnp.pad(beta.astype(jnp.float32), (0, cout_pad - cout))
    scale_v = gamma_p * jax.lax.rsqrt(var + eps)
    shift_v = beta_p - mean * scale_v
    scale2 = scale_v.reshape(1, cout_pad)
    shift2 = shift_v.reshape(1, cout_pad)

    # ---- pass 2: BN finalize + LeakyReLU (elementwise, lane-dense) ---------
    kern2 = functools.partial(bn_lrelu_kernel, neg_slope=neg_slope)
    out_flat = pl.pallas_call(
        kern2,
        out_shape=jax.ShapeDtypeStruct((n, rows, cout_pad), jnp.float32),
        grid_spec=pltpu.PrefetchScalarGridSpec(
            num_scalar_prefetch=0,
            grid=(n, n_ct),
            in_specs=[
                pl.BlockSpec((1, rows, TCO), lambda i, c: (i, 0, c)),
                pl.BlockSpec((1, TCO), lambda i, c: (0, c)),
                pl.BlockSpec((1, TCO), lambda i, c: (0, c)),
            ],
            out_specs=pl.BlockSpec((1, rows, TCO), lambda i, c: (i, 0, c))),
        compiler_params=cparams,
    )(conv_flat, scale2, shift2)

    out_nhwc = out_flat.reshape(n, out_h, out_w, cout_pad)[..., :cout]
    return jnp.transpose(out_nhwc, (0, 3, 1, 2))          # back to NCHW


def _reference(x_nchw, weight_oihw, gamma, beta, *, stride=1, eps=1e-5,
               neg_slope=0.1, conv_dtype=jnp.float32):
    k = weight_oihw.shape[-1]
    pad = k // 2
    y = jax.lax.conv_general_dilated(
        x_nchw.astype(conv_dtype), weight_oihw.astype(conv_dtype),
        window_strides=(stride, stride), padding=((pad, pad), (pad, pad)),
        dimension_numbers=('NCHW', 'OIHW', 'NCHW'),
        preferred_element_type=jnp.float32)
    mean = jnp.mean(y, axis=(0, 2, 3), keepdims=True)
    var = jnp.mean((y - mean) ** 2, axis=(0, 2, 3), keepdims=True)
    y = (y - mean) * jax.lax.rsqrt(var + eps)
    y = y * gamma.reshape(1, -1, 1, 1) + beta.reshape(1, -1, 1, 1)
    return jnp.where(y > 0, y, neg_slope * y)


if __name__ == "__main__":
    key = jax.random.PRNGKey(0)
    kx, kw, kg, kb = jax.random.split(key, 4)

    N, CIN, H, W = 2, 4, 16, 16
    COUT, K, STRIDE = 8, 3, 1

    x = jax.random.normal(kx, (N, CIN, H, W), dtype=jnp.float32)
    weight = jax.random.normal(kw, (COUT, CIN, K, K), dtype=jnp.float32) * 0.1
    gamma = 1.0 + 0.1 * jax.random.normal(kg, (COUT,), dtype=jnp.float32)
    beta = 0.1 * jax.random.normal(kb, (COUT,), dtype=jnp.float32)

    out = jax.block_until_ready(conv_unit(x, weight, gamma, beta, stride=STRIDE))
    assert out.shape == (N, COUT, H, W)

    # Tight check vs a reference using the same bf16 MXU operand precision.
    ref_bf16 = _reference(x, weight, gamma, beta, stride=STRIDE,
                          conv_dtype=jnp.bfloat16)
    assert jnp.allclose(out, ref_bf16, rtol=1e-3, atol=1e-3), \
        "mismatch vs bf16-operand reference"

    # Loose sanity check vs the full-fp32 module semantics (bf16 operand error).
    ref_f32 = _reference(x, weight, gamma, beta, stride=STRIDE,
                         conv_dtype=jnp.float32)
    assert jnp.allclose(out, ref_f32, rtol=1e-1, atol=1e-1), \
        "mismatch vs fp32 reference"

    print("KERNEL_OK")
</pallas_src>

<mosaic_0001>
module attributes {stable_mosaic.version = 11 : i64} {
  func.func @conv_stats_kernel(%arg0: i32, %arg1: i32, %arg2: memref<1x18x18x4xbf16, #tpu.memory_space<vmem>>, %arg3: memref<3x3x4x128xbf16, #tpu.memory_space<vmem>>, %arg4: memref<1x256x128xf32, #tpu.memory_space<vmem>>, %arg5: memref<1x2x128xf32, #tpu.memory_space<vmem>>, %arg6: memref<256x128xf32, #tpu.memory_space<vmem>>) attributes {dimension_semantics = [#tpu.dimension_semantics<parallel>, #tpu.dimension_semantics<parallel>], iteration_bounds = array<i64: 2, 1>, scalar_prefetch = 0 : i64, scratch_operands = 1 : i64, tpu.core_type = #tpu.core_type<tc>, window_params = [{transform_indices = @transform_0, window_bounds = array<i64: 1, 18, 18, 4>}, {transform_indices = @transform_1, window_bounds = array<i64: 3, 3, 4, 128>}, {transform_indices = @transform_2, window_bounds = array<i64: 1, 256, 128>}, {transform_indices = @transform_3, window_bounds = array<i64: 1, 2, 128>}]} {
    %cst = arith.constant 0.000000e+00 : f32
    %0 = vector.broadcast %cst : f32 to vector<256x128xf32>
    %c0 = arith.constant 0 : index
    %c0_0 = arith.constant 0 : index
    %1 = vector.load %arg6[%c0, %c0_0] : memref<256x128xf32, #tpu.memory_space<vmem>>, vector<256x128xf32>
    tpu.vector_store %arg6[%c0, %c0_0], %0 {strides = array<i32>} : memref<256x128xf32, #tpu.memory_space<vmem>>, vector<256x128xf32>,
    %c0_1 = arith.constant 0 : index
    %c0_2 = arith.constant 0 : index
    %c0_3 = arith.constant 0 : index
    %c0_4 = arith.constant 0 : index
    %2 = vector.load %arg2[%c0_1, %c0_2, %c0_3, %c0_4] : memref<1x18x18x4xbf16, #tpu.memory_space<vmem>>, vector<1x16x16x4xbf16>
    %3 = vector.shape_cast %2 : vector<1x16x16x4xbf16> to vector<16x16x4xbf16>
    %4 = vector.shape_cast %3 : vector<16x16x4xbf16> to vector<256x4xbf16>
    %c0_5 = arith.constant 0 : index
    %c0_6 = arith.constant 0 : index
    %5 = vector.load %arg6[%c0_5, %c0_6] : memref<256x128xf32, #tpu.memory_space<vmem>>, vector<256x128xf32>
    %c0_7 = arith.constant 0 : index
    %c0_8 = arith.constant 0 : index
    %c0_9 = arith.constant 0 : index
    %c0_10 = arith.constant 0 : index
    %6 = vector.load %arg3[%c0_7, %c0_8, %c0_9, %c0_10] : memref<3x3x4x128xbf16, #tpu.memory_space<vmem>>, vector<1x1x4x128xbf16>
    %7 = vector.shape_cast %6 : vector<1x1x4x128xbf16> to vector<4x128xbf16>
    %cst_11 = arith.constant dense<0.000000e+00> : vector<256x128xf32>
    %8 = tpu.matmul %4, %7, %cst_11 {dimension_numbers = #tpu.dot_dimension_numbers<[1], [0], [0], [1], [0, 0, 1, 1], [], []>} : vector<256x4xbf16>, vector<4x128xbf16>, vector<256x128xf32> -> vector<256x128xf32>
    %9 = arith.addf %5, %8 : vector<256x128xf32>
    %c0_12 = arith.constant 0 : index
    %c0_13 = arith.constant 0 : index
    %10 = vector.load %arg6[%c0_12, %c0_13] : memref<256x128xf32, #tpu.memory_space<vmem>>, vector<256x128xf32>
    tpu.vector_store %arg6[%c0_12, %c0_13], %9 {strides = array<i32>} : memref<256x128xf32, #tpu.memory_space<vmem>>, vector<256x128xf32>,
    %c0_14 = arith.constant 0 : index
    %c0_15 = arith.constant 0 : index
    %c1 = arith.constant 1 : index
    %c0_16 = arith.constant 0 : index
    %11 = vector.load %arg2[%c0_14, %c0_15, %c1, %c0_16] : memref<1x18x18x4xbf16, #tpu.memory_space<vmem>>, vector<1x16x16x4xbf16>
    %12 = vector.shape_cast %11 : vector<1x16x16x4xbf16> to vector<16x16x4xbf16>
    %13 = vector.shape_cast %12 : vector<16x16x4xbf16> to vector<256x4xbf16>
    %c0_17 = arith.constant 0 : index
    %c0_18 = arith.constant 0 : index
    %14 = vector.load %arg6[%c0_17, %c0_18] : memref<256x128xf32, #tpu.memory_space<vmem>>, vector<256x128xf32>
    %c0_19 = arith.constant 0 : index
    %c1_20 = arith.constant 1 : index
    %c0_21 = arith.constant 0 : index
    %c0_22 = arith.constant 0 : index
    %15 = vector.load %arg3[%c0_19, %c1_20, %c0_21, %c0_22] : memref<3x3x4x128xbf16, #tpu.memory_space<vmem>>, vector<1x1x4x128xbf16>
    %16 = vector.shape_cast %15 : vector<1x1x4x128xbf16> to vector<4x128xbf16>
    %cst_23 = arith.constant dense<0.000000e+00> : vector<256x128xf32>
    %17 = tpu.matmul %13, %16, %cst_23 {dimension_numbers = #tpu.dot_dimension_numbers<[1], [0], [0], [1], [0, 0, 1, 1], [], []>} : vector<256x4xbf16>, vector<4x128xbf16>, vector<256x128xf32> -> vector<256x128xf32>
    %18 = arith.addf %14, %17 : vector<256x128xf32>
    %c0_24 = arith.constant 0 : index
    %c0_25 = arith.constant 0 : index
    %19 = vector.load %arg6[%c0_24, %c0_25] : memref<256x128xf32, #tpu.memory_space<vmem>>, vector<256x128xf32>
    tpu.vector_store %arg6[%c0_24, %c0_25], %18 {strides = array<i32>} : memref<256x128xf32, #tpu.memory_space<vmem>>, vector<256x128xf32>,
    %c0_26 = arith.constant 0 : index
    %c0_27 = arith.constant 0 : index
    %c2 = arith.constant 2 : index
    %c0_28 = arith.constant 0 : index
    %20 = vector.load %arg2[%c0_26, %c0_27, %c2, %c0_28] : memref<1x18x18x4xbf16, #tpu.memory_space<vmem>>, vector<1x16x16x4xbf16>
    %21 = vector.shape_cast %20 : vector<1x16x16x4xbf16> to vector<16x16x4xbf16>
    %22 = vector.shape_cast %21 : vector<16x16x4xbf16> to vector<256x4xbf16>
    %c0_29 = arith.constant 0 : index
    %c0_30 = arith.constant 0 : index
    %23 = vector.load %arg6[%c0_29, %c0_30] : memref<256x128xf32, #tpu.memory_space<vmem>>, vector<256x128xf32>
    %c0_31 = arith.constant 0 : index
    %c2_32 = arith.constant 2 : index
    %c0_33 = arith.constant 0 : index
    %c0_34 = arith.constant 0 : index
    %24 = vector.load %arg3[%c0_31, %c2_32, %c0_33, %c0_34] : memref<3x3x4x128xbf16, #tpu.memory_space<vmem>>, vector<1x1x4x128xbf16>
    %25 = vector.shape_cast %24 : vector<1x1x4x128xbf16> to vector<4x128xbf16>
    %cst_35 = arith.constant dense<0.000000e+00> : vector<256x128xf32>
    %26 = tpu.matmul %22, %25, %cst_35 {dimension_numbers = #tpu.dot_dimension_numbers<[1], [0], [0], [1], [0, 0, 1, 1], [], []>} : vector<256x4xbf16>, vector<4x128xbf16>, vector<256x128xf32> -> vector<256x128xf32>
    %27 = arith.addf %23, %26 : vector<256x128xf32>
    %c0_36 = arith.constant 0 : index
    %c0_37 = arith.constant 0 : index
    %28 = vector.load %arg6[%c0_36, %c0_37] : memref<256x128xf32, #tpu.memory_space<vmem>>, vector<256x128xf32>
    tpu.vector_store %arg6[%c0_36, %c0_37], %27 {strides = array<i32>} : memref<256x128xf32, #tpu.memory_space<vmem>>, vector<256x128xf32>,
    %c0_38 = arith.constant 0 : index
    %c1_39 = arith.constant 1 : index
    %c0_40 = arith.constant 0 : index
    %c0_41 = arith.constant 0 : index
    %29 = vector.load %arg2[%c0_38, %c1_39, %c0_40, %c0_41] : memref<1x18x18x4xbf16, #tpu.memory_space<vmem>>, vector<1x16x16x4xbf16>
    %30 = vector.shape_cast %29 : vector<1x16x16x4xbf16> to vector<16x16x4xbf16>
    %31 = vector.shape_cast %30 : vector<16x16x4xbf16> to vector<256x4xbf16>
    %c0_42 = arith.constant 0 : index
    %c0_43 = arith.constant 0 : index
    %32 = vector.load %arg6[%c0_42, %c0_43] : memref<256x128xf32, #tpu.memory_space<vmem>>, vector<256x128xf32>
    %c1_44 = arith.constant 1 : index
    %c0_45 = arith.constant 0 : index
    %c0_46 = arith.constant 0 : index
    %c0_47 = arith.constant 0 : index
    %33 = vector.load %arg3[%c1_44, %c0_45, %c0_46, %c0_47] : memref<3x3x4x128xbf16, #tpu.memory_space<vmem>>, vector<1x1x4x128xbf16>
    %34 = vector.shape_cast %33 : vector<1x1x4x128xbf16> to vector<4x128xbf16>
    %cst_48 = arith.constant dense<0.000000e+00> : vector<256x128xf32>
    %35 = tpu.matmul %31, %34, %cst_48 {dimension_numbers = #tpu.dot_dimension_numbers<[1], [0], [0], [1], [0, 0, 1, 1], [], []>} : vector<256x4xbf16>, vector<4x128xbf16>, vector<256x128xf32> -> vector<256x128xf32>
    %36 = arith.addf %32, %35 : vector<256x128xf32>
    %c0_49 = arith.constant 0 : index
    %c0_50 = arith.constant 0 : index
    %37 = vector.load %arg6[%c0_49, %c0_50] : memref<256x128xf32, #tpu.memory_space<vmem>>, vector<256x128xf32>
    tpu.vector_store %arg6[%c0_49, %c0_50], %36 {strides = array<i32>} : memref<256x128xf32, #tpu.memory_space<vmem>>, vector<256x128xf32>,
    %c0_51 = arith.constant 0 : index
    %c1_52 = arith.constant 1 : index
    %c1_53 = arith.constant 1 : index
    %c0_54 = arith.constant 0 : index
    %38 = vector.load %arg2[%c0_51, %c1_52, %c1_53, %c0_54] : memref<1x18x18x4xbf16, #tpu.memory_space<vmem>>, vector<1x16x16x4xbf16>
    %39 = vector.shape_cast %38 : vector<1x16x16x4xbf16> to vector<16x16x4xbf16>
    %40 = vector.shape_cast %39 : vector<16x16x4xbf16> to vector<256x4xbf16>
    %c0_55 = arith.constant 0 : index
    %c0_56 = arith.constant 0 : index
    %41 = vector.load %arg6[%c0_55, %c0_56] : memref<256x128xf32, #tpu.memory_space<vmem>>, vector<256x128xf32>
    %c1_57 = arith.constant 1 : index
    %c1_58 = arith.constant 1 : index
    %c0_59 = arith.constant 0 : index
    %c0_60 = arith.constant 0 : index
    %42 = vector.load %arg3[%c1_57, %c1_58, %c0_59, %c0_60] : memref<3x3x4x128xbf16, #tpu.memory_space<vmem>>, vector<1x1x4x128xbf16>
    %43 = vector.shape_cast %42 : vector<1x1x4x128xbf16> to vector<4x128xbf16>
    %cst_61 = arith.constant dense<0.000000e+00> : vector<256x128xf32>
    %44 = tpu.matmul %40, %43, %cst_61 {dimension_numbers = #tpu.dot_dimension_numbers<[1], [0], [0], [1], [0, 0, 1, 1], [], []>} : vector<256x4xbf16>, vector<4x128xbf16>, vector<256x128xf32> -> vector<256x128xf32>
    %45 = arith.addf %41, %44 : vector<256x128xf32>
    %c0_62 = arith.constant 0 : index
    %c0_63 = arith.constant 0 : index
    %46 = vector.load %arg6[%c0_62, %c0_63] : memref<256x128xf32, #tpu.memory_space<vmem>>, vector<256x128xf32>
    tpu.vector_store %arg6[%c0_62, %c0_63], %45 {strides = array<i32>} : memref<256x128xf32, #tpu.memory_space<vmem>>, vector<256x128xf32>,
    %c0_64 = arith.constant 0 : index
    %c1_65 = arith.constant 1 : index
    %c2_66 = arith.constant 2 : index
    %c0_67 = arith.constant 0 : index
    %47 = vector.load %arg2[%c0_64, %c1_65, %c2_66, %c0_67] : memref<1x18x18x4xbf16, #tpu.memory_space<vmem>>, vector<1x16x16x4xbf16>
    %48 = vector.shape_cast %47 : vector<1x16x16x4xbf16> to vector<16x16x4xbf16>
    %49 = vector.shape_cast %48 : vector<16x16x4xbf16> to vector<256x4xbf16>
    %c0_68 = arith.constant 0 : index
    %c0_69 = arith.constant 0 : index
    %50 = vector.load %arg6[%c0_68, %c0_69] : memref<256x128xf32, #tpu.memory_space<vmem>>, vector<256x128xf32>
    %c1_70 = arith.constant 1 : index
    %c2_71 = arith.constant 2 : index
    %c0_72 = arith.constant 0 : index
    %c0_73 = arith.constant 0 : index
    %51 = vector.load %arg3[%c1_70, %c2_71, %c0_72, %c0_73] : memref<3x3x4x128xbf16, #tpu.memory_space<vmem>>, vector<1x1x4x128xbf16>
    %52 = vector.shape_cast %51 : vector<1x1x4x128xbf16> to vector<4x128xbf16>
    %cst_74 = arith.constant dense<0.000000e+00> : vector<256x128xf32>
    %53 = tpu.matmul %49, %52, %cst_74 {dimension_numbers = #tpu.dot_dimension_numbers<[1], [0], [0], [1], [0, 0, 1, 1], [], []>} : vector<256x4xbf16>, vector<4x128xbf16>, vector<256x128xf32> -> vector<256x128xf32>
    %54 = arith.addf %50, %53 : vector<256x128xf32>
    %c0_75 = arith.constant 0 : index
    %c0_76 = arith.constant 0 : index
    %55 = vector.load %arg6[%c0_75, %c0_76] : memref<256x128xf32, #tpu.memory_space<vmem>>, vector<256x128xf32>
    tpu.vector_store %arg6[%c0_75, %c0_76], %54 {strides = array<i32>} : memref<256x128xf32, #tpu.memory_space<vmem>>, vector<256x128xf32>,
    %c0_77 = arith.constant 0 : index
    %c2_78 = arith.constant 2 : index
    %c0_79 = arith.constant 0 : index
    %c0_80 = arith.constant 0 : index
    %56 = vector.load %arg2[%c0_77, %c2_78, %c0_79, %c0_80] : memref<1x18x18x4xbf16, #tpu.memory_space<vmem>>, vector<1x16x16x4xbf16>
    %57 = vector.shape_cast %56 : vector<1x16x16x4xbf16> to vector<16x16x4xbf16>
    %58 = vector.shape_cast %57 : vector<16x16x4xbf16> to vector<256x4xbf16>
    %c0_81 = arith.constant 0 : index
    %c0_82 = arith.constant 0 : index
    %59 = vector.load %arg6[%c0_81, %c0_82] : memref<256x128xf32, #tpu.memory_space<vmem>>, vector<256x128xf32>
    %c2_83 = arith.constant 2 : index
    %c0_84 = arith.constant 0 : index
    %c0_85 = arith.constant 0 : index
    %c0_86 = arith.constant 0 : index
    %60 = vector.load %arg3[%c2_83, %c0_84, %c0_85, %c0_86] : memref<3x3x4x128xbf16, #tpu.memory_space<vmem>>, vector<1x1x4x128xbf16>
    %61 = vector.shape_cast %60 : vector<1x1x4x128xbf16> to vector<4x128xbf16>
    %cst_87 = arith.constant dense<0.000000e+00> : vector<256x128xf32>
    %62 = tpu.matmul %58, %61, %cst_87 {dimension_numbers = #tpu.dot_dimension_numbers<[1], [0], [0], [1], [0, 0, 1, 1], [], []>} : vector<256x4xbf16>, vector<4x128xbf16>, vector<256x128xf32> -> vector<256x128xf32>
    %63 = arith.addf %59, %62 : vector<256x128xf32>
    %c0_88 = arith.constant 0 : index
    %c0_89 = arith.constant 0 : index
    %64 = vector.load %arg6[%c0_88, %c0_89] : memref<256x128xf32, #tpu.memory_space<vmem>>, vector<256x128xf32>
    tpu.vector_store %arg6[%c0_88, %c0_89], %63 {strides = array<i32>} : memref<256x128xf32, #tpu.memory_space<vmem>>, vector<256x128xf32>,
    %c0_90 = arith.constant 0 : index
    %c2_91 = arith.constant 2 : index
    %c1_92 = arith.constant 1 : index
    %c0_93 = arith.constant 0 : index
    %65 = vector.load %arg2[%c0_90, %c2_91, %c1_92, %c0_93] : memref<1x18x18x4xbf16, #tpu.memory_space<vmem>>, vector<1x16x16x4xbf16>
    %66 = vector.shape_cast %65 : vector<1x16x16x4xbf16> to vector<16x16x4xbf16>
    %67 = vector.shape_cast %66 : vector<16x16x4xbf16> to vector<256x4xbf16>
    %c0_94 = arith.constant 0 : index
    %c0_95 = arith.constant 0 : index
    %68 = vector.load %arg6[%c0_94, %c0_95] : memref<256x128xf32, #tpu.memory_space<vmem>>, vector<256x128xf32>
    %c2_96 = arith.constant 2 : index
    %c1_97 = arith.constant 1 : index
    %c0_98 = arith.constant 0 : index
    %c0_99 = arith.constant 0 : index
    %69 = vector.load %arg3[%c2_96, %c1_97, %c0_98, %c0_99] : memref<3x3x4x128xbf16, #tpu.memory_space<vmem>>, vector<1x1x4x128xbf16>
    %70 = vector.shape_cast %69 : vector<1x1x4x128xbf16> to vector<4x128xbf16>
    %cst_100 = arith.constant dense<0.000000e+00> : vector<256x128xf32>
    %71 = tpu.matmul %67, %70, %cst_100 {dimension_numbers = #tpu.dot_dimension_numbers<[1], [0], [0], [1], [0, 0, 1, 1], [], []>} : vector<256x4xbf16>, vector<4x128xbf16>, vector<256x128xf32> -> vector<256x128xf32>
    %72 = arith.addf %68, %71 : vector<256x128xf32>
    %c0_101 = arith.constant 0 : index
    %c0_102 = arith.constant 0 : index
    %73 = vector.load %arg6[%c0_101, %c0_102] : memref<256x128xf32, #tpu.memory_space<vmem>>, vector<256x128xf32>
    tpu.vector_store %arg6[%c0_101, %c0_102], %72 {strides = array<i32>} : memref<256x128xf32, #tpu.memory_space<vmem>>, vector<256x128xf32>,
    %c0_103 = arith.constant 0 : index
    %c2_104 = arith.constant 2 : index
    %c2_105 = arith.constant 2 : index
    %c0_106 = arith.constant 0 : index
    %74 = vector.load %arg2[%c0_103, %c2_104, %c2_105, %c0_106] : memref<1x18x18x4xbf16, #tpu.memory_space<vmem>>, vector<1x16x16x4xbf16>
    %75 = vector.shape_cast %74 : vector<1x16x16x4xbf16> to vector<16x16x4xbf16>
    %76 = vector.shape_cast %75 : vector<16x16x4xbf16> to vector<256x4xbf16>
    %c0_107 = arith.constant 0 : index
    %c0_108 = arith.constant 0 : index
    %77 = vector.load %arg6[%c0_107, %c0_108] : memref<256x128xf32, #tpu.memory_space<vmem>>, vector<256x128xf32>
    %c2_109 = arith.constant 2 : index
    %c2_110 = arith.constant 2 : index
    %c0_111 = arith.constant 0 : index
    %c0_112 = arith.constant 0 : index
    %78 = vector.load %arg3[%c2_109, %c2_110, %c0_111, %c0_112] : memref<3x3x4x128xbf16, #tpu.memory_space<vmem>>, vector<1x1x4x128xbf16>
    %79 = vector.shape_cast %78 : vector<1x1x4x128xbf16> to vector<4x128xbf16>
    %cst_113 = arith.constant dense<0.000000e+00> : vector<256x128xf32>
    %80 = tpu.matmul %76, %79, %cst_113 {dimension_numbers = #tpu.dot_dimension_numbers<[1], [0], [0], [1], [0, 0, 1, 1], [], []>} : vector<256x4xbf16>, vector<4x128xbf16>, vector<256x128xf32> -> vector<256x128xf32>
    %81 = arith.addf %77, %80 : vector<256x128xf32>
    %c0_114 = arith.constant 0 : index
    %c0_115 = arith.constant 0 : index
    %82 = vector.load %arg6[%c0_114, %c0_115] : memref<256x128xf32, #tpu.memory_space<vmem>>, vector<256x128xf32>
    tpu.vector_store %arg6[%c0_114, %c0_115], %81 {strides = array<i32>} : memref<256x128xf32, #tpu.memory_space<vmem>>, vector<256x128xf32>,
    %c0_116 = arith.constant 0 : index
    %c0_117 = arith.constant 0 : index
    %83 = vector.load %arg6[%c0_116, %c0_117] : memref<256x128xf32, #tpu.memory_space<vmem>>, vector<256x128xf32>
    %84 = vector.shape_cast %83 : vector<256x128xf32> to vector<1x256x128xf32>
    %c0_118 = arith.constant 0 : index
    %c0_119 = arith.constant 0 : index
    %c0_120 = arith.constant 0 : index
    %85 = vector.load %arg4[%c0_118, %c0_119, %c0_120] : memref<1x256x128xf32, #tpu.memory_space<vmem>>, vector<1x256x128xf32>
    tpu.vector_store %arg4[%c0_118, %c0_119, %c0_120], %84 {strides = array<i32>} : memref<1x256x128xf32, #tpu.memory_space<vmem>>, vector<1x256x128xf32>,
    %cst_121 = arith.constant dense<0.000000e+00> : vector<128xf32>
    %86 = vector.multi_reduction <add>, %83, %cst_121 [0] : vector<256x128xf32> to vector<128xf32>
    %87 = vector.shape_cast %86 : vector<128xf32> to vector<1x128xf32>
    %88 = arith.mulf %83, %83 : vector<256x128xf32>
    %cst_122 = arith.constant dense<0.000000e+00> : vector<128xf32>
    %89 = vector.multi_reduction <add>, %88, %cst_122 [0] : vector<256x128xf32> to vector<128xf32>
    %90 = vector.shape_cast %89 : vector<128xf32> to vector<1x128xf32>
    %91 = tpu.concatenate %87, %90 in 0 : vector<1x128xf32>, vector<1x128xf32> -> vector<2x128xf32>
    %92 = vector.shape_cast %91 : vector<2x128xf32> to vector<1x2x128xf32>
    %c0_123 = arith.constant 0 : index
    %c0_124 = arith.constant 0 : index
    %c0_125 = arith.constant 0 : index
    %93 = vector.load %arg5[%c0_123, %c0_124, %c0_125] : memref<1x2x128xf32, #tpu.memory_space<vmem>>, vector<1x2x128xf32>
    tpu.vector_store %arg5[%c0_123, %c0_124, %c0_125], %92 {strides = array<i32>} : memref<1x2x128xf32, #tpu.memory_space<vmem>>, vector<1x2x128xf32>,
    return
  }
  func.func @transform_0(%arg0: i32, %arg1: i32) -> (i32, i32, i32, i32) {
    %c0_i32 = arith.constant 0 : i32
    %c0_i32_0 = arith.constant 0 : i32
    %c0_i32_1 = arith.constant 0 : i32
    %c0_i32_2 = arith.constant 0 : i32
    return %arg0, %c0_i32, %c0_i32_0, %c0_i32_1 : i32, i32, i32, i32
  }
  func.func @transform_1(%arg0: i32, %arg1: i32) -> (i32, i32, i32, i32) {
    %c0_i32 = arith.constant 0 : i32
    %c0_i32_0 = arith.constant 0 : i32
    %c0_i32_1 = arith.constant 0 : i32
    %c0_i32_2 = arith.constant 0 : i32
    return %c0_i32, %c0_i32_0, %c0_i32_1, %arg1 : i32, i32, i32, i32
  }
  func.func @transform_2(%arg0: i32, %arg1: i32) -> (i32, i32, i32) {
    %c0_i32 = arith.constant 0 : i32
    %c0_i32_0 = arith.constant 0 : i32
    return %arg0, %c0_i32, %arg1 : i32, i32, i32
  }
  func.func @transform_3(%arg0: i32, %arg1: i32) -> (i32, i32, i32) {
    %c0_i32 = arith.constant 0 : i32
    %c0_i32_0 = arith.constant 0 : i32
    return %arg0, %c0_i32, %arg1 : i32, i32, i32
  }
}

</mosaic_0001>

<llo_original>
// kernel: tpu_custom_call.1
$region0: #{tpu_custom_call.1}
  #allocation0 [shape = 'u32[]', space=smem, size = 0x4, offset = 0x4, fixed_abs, tag = 'smem constant byte address 0x4 - core index']
  #allocation1 [shape = 'u32[144,128]{1,0:T(1,128)}', space=vmem, size = 0x12000, scoped, tag = 'internal scratch']
  #allocation2 [shape = 'f32[256,128]{1,0:T(8,128)}', space=vmem, size = 0x20000, scoped, tag = 'scratch operand']
  %s0 = inlined_call_operand.vmem [shape: bf16[2,18,18,4], index: 0, kind: input, shape index: {}]
  %s1 = inlined_call_operand.vmem [shape: bf16[3,3,4,128], index: 1, kind: input, shape index: {}]
  %s2 = inlined_call_operand.hbm [shape: f32[2,256,128], index: 2, kind: output, shape index: {0}]
  %s3 = inlined_call_operand.hbm [shape: f32[2,2,128], index: 3, kind: output, shape index: {1}]
  %4 = xla_tuple %s2, %s3
  %s5 = sld [smem:[#allocation0]]
  $region49: #{tpu_custom_call.1} parent=0
    _
  %s7 = ssub.s32 1, %s5
  %s8 = scalar_select 0, %s7, %s5
  $region1: #{tpu_custom_call.1} parent=0
    #allocation3 [shape = 'u8[262144]{0}', space=vmem, size = 0x40000, scoped, tag = 'output window, operand 0']
    #allocation4 [shape = 's32[2]{0}', space=sflag, size = 0x8, scoped, tag = 'scoped memory for tpu_custom_call.1']
    #allocation5 [shape = 'u8[2048]{0}', space=vmem, size = 0x800, scoped, tag = 'output window, operand 1']
    #allocation6 [shape = 's32[2]{0}', space=sflag, size = 0x8, scoped, tag = 'scoped memory for tpu_custom_call.1']
    %9 = vsyncpa [#allocation4], 0
    %s10 = scalar_lea.sflag [#allocation4], 1
    %11 = vsyncpa %s10, 0
    %12 = vsyncpa [#allocation6], 0
    %s13 = scalar_lea.sflag [#allocation6], 1
    %14 = vsyncpa %s13, 0
    loop: start=0, step=1, limit=4
    $region2: #{tpu_custom_call.1} parent=1 // loop_pre_header
      _
    $region3: #{tpu_custom_call.1} parent=1 // loop_header
      %s16 = sphi 0, %s20
      %p17 = scmp.ge.s32.totalorder %s16, 4
      %s23 = sphi 0, %s35
      %s24 = sphi 0, %s31
      %s25 = sphi 0, %s23
      %s26 = sphi 0, %s24
      %s27 = sphi 0, %s25
      %s28 = sphi 0, %s26
      %s38 = sphi 0, %s40
      %s41 = sphi 0, %s38
      %s42 = sphi 0, %s41
      %s58 = sphi 0, %s42
      %s64 = sphi 0, %s66
      %s67 = sphi 0, %s64
      %s68 = sphi 0, %s67
      %s84 = sphi 0, %s68
      %s92 = sphi 0, %s94
      %s95 = sphi 0, %s92
      %s96 = sphi 0, %s95
      %s112 = sphi 0, %s96
      %s120 = sphi 0, %s122
      %s123 = sphi 0, %s120
      %s124 = sphi 0, %s123
      %s140 = sphi 0, %s124
    $region4: #{tpu_custom_call.1} parent=1 // loop_header_branch
      %19 = sbr.rel (%p17) target = $region8
    $region5: #{tpu_custom_call.1} parent=1 // loop_body
      %s21 = ssub.s32 %s16, 1
      %s22 = ssub.s32 %s16, 2
      %s29 = sadd.s32 1, %s24
      %p30 = scmp.ge.s32.totalorder %s29, 1
      %s31 = scalar_select %p30, 0, %s29
      %s32 = sadd.s32 1, %s23
      %s33 = scalar_select %p30, %s32, %s23
      %p34 = scmp.ge.s32.totalorder %s33, 2
      %s35 = scalar_select %p34, 0, %s33
      %s36 = ssub.s32 %s23, %s35
      %p37 = scmp.eq.s32.totalorder %s36, 0
      %s39 = sadd.s32 %s38, 1
      %s40 = scalar_select %p37, %s38, %s39
      %p43 = pneg %p37
      %p44 = scmp.eq.s32.totalorder %s16, 1
      %p45 = por %p43, %p44
      %p46 = scmp.ne.s32.totalorder %s38, %s41
      %p47 = scmp.eq.s32.totalorder %s16, 0
      %p48 = por %p46, %p47
      %p49 = scmp.ne.s32.totalorder %s38, %s41
      %p50 = scmp.eq.s32.totalorder %s21, 1
      %p51 = por %p49, %p50
      %p52 = scmp.ne.s32.totalorder %s41, %s42
      %p53 = scmp.eq.s32.totalorder %s21, 0
      %p54 = por %p52, %p53
      %p55 = scmp.ne.s32.totalorder %s41, %s42
      %p56 = scmp.eq.s32.totalorder %s22, 1
      %p57 = por %p55, %p56
      %p59 = scmp.ne.s32.totalorder %s42, %s58
      %p60 = scmp.eq.s32.totalorder %s22, 0
      %p61 = por %p59, %p60
      %s62 = ssub.s32 %s24, %s31
      %p63 = scmp.eq.s32.totalorder %s62, 0
      %s65 = sadd.s32 %s64, 1
      %s66 = scalar_select %p63, %s64, %s65
      %p69 = pneg %p63
      %p70 = scmp.eq.s32.totalorder %s16, 1
      %p71 = por %p69, %p70
      %p72 = scmp.ne.s32.totalorder %s64, %s67
      %p73 = scmp.eq.s32.totalorder %s16, 0
      %p74 = por %p72, %p73
      %p75 = scmp.ne.s32.totalorder %s64, %s67
      %p76 = scmp.eq.s32.totalorder %s21, 1
      %p77 = por %p75, %p76
      %p78 = scmp.ne.s32.totalorder %s67, %s68
      %p79 = scmp.eq.s32.totalorder %s21, 0
      %p80 = por %p78, %p79
      %p81 = scmp.ne.s32.totalorder %s67, %s68
      %p82 = scmp.eq.s32.totalorder %s22, 1
      %p83 = por %p81, %p82
      %p85 = scmp.ne.s32.totalorder %s68, %s84
      %p86 = scmp.eq.s32.totalorder %s22, 0
      %p87 = por %p85, %p86
      %s88 = ssub.s32 %s23, %s35
      %s89 = ssub.s32 %s24, %s31
      %s90 = sor.u32 %s88, %s89
      %p91 = scmp.eq.s32.totalorder %s90, 0
      %s93 = sadd.s32 %s92, 1
      %s94 = scalar_select %p91, %s92, %s93
      %p97 = pneg %p91
      %p98 = scmp.eq.s32.totalorder %s16, 1
      %p99 = por %p97, %p98
      %p100 = scmp.ne.s32.totalorder %s92, %s95
      %p101 = scmp.eq.s32.totalorder %s16, 0
      %p102 = por %p100, %p101
      %p103 = scmp.ne.s32.totalorder %s92, %s95
      %p104 = scmp.eq.s32.totalorder %s21, 1
      %p105 = por %p103, %p104
      %p106 = scmp.ne.s32.totalorder %s95, %s96
      %p107 = scmp.eq.s32.totalorder %s21, 0
      %p108 = por %p106, %p107
      %p109 = scmp.ne.s32.totalorder %s95, %s96
      %p110 = scmp.eq.s32.totalorder %s22, 1
      %p111 = por %p109, %p110
      %p113 = scmp.ne.s32.totalorder %s96, %s112
      %p114 = scmp.eq.s32.totalorder %s22, 0
      %p115 = por %p113, %p114
      %s116 = ssub.s32 %s23, %s35
      %s117 = ssub.s32 %s24, %s31
      %s118 = sor.u32 %s116, %s117
      %p119 = scmp.eq.s32.totalorder %s118, 0
      %s121 = sadd.s32 %s120, 1
      %s122 = scalar_select %p119, %s120, %s121
      %p125 = pneg %p119
      %p126 = scmp.eq.s32.totalorder %s16, 1
      %p127 = por %p125, %p126
      %p128 = scmp.ne.s32.totalorder %s120, %s123
      %p129 = scmp.eq.s32.totalorder %s16, 0
      %p130 = por %p128, %p129
      %p131 = scmp.ne.s32.totalorder %s120, %s123
      %p132 = scmp.eq.s32.totalorder %s21, 1
      %p133 = por %p131, %p132
      %p134 = scmp.ne.s32.totalorder %s123, %s124
      %p135 = scmp.eq.s32.totalorder %s21, 0
      %p136 = por %p134, %p135
      %p137 = scmp.ne.s32.totalorder %s123, %s124
      %p138 = scmp.eq.s32.totalorder %s22, 1
      %p139 = por %p137, %p138
      %p141 = scmp.ne.s32.totalorder %s124, %s140
      %p142 = scmp.eq.s32.totalorder %s22, 0
      %p143 = por %p141, %p142
      %p144 = scmp.le.s32.totalorder 1, %s16
      %p145 = scmp.lt.s32.totalorder %s16, 3
      %p146 = pnand %p144, %p145
      %p147 = pneg %p146
      // Predicated region
      $region9: #{tpu_custom_call.1} parent=5 // pred_check
        _
      $region10: #{tpu_custom_call.1} parent=5 // pred_check_branch
        %149 = sbr.rel (%p146) target = $region12
      $region11: #{tpu_custom_call.1} parent=5 // pred_region
        %s150 = ssub.s32 %s16, 1
        // Predicated region
        $region13: #{tpu_custom_call.1} parent=11 // pred_check
          %p151 = pneg %p80
        $region14: #{tpu_custom_call.1} parent=11 // pred_check_branch
          %153 = sbr.rel (%p151) target = $region16
        $region15: #{tpu_custom_call.1} parent=11 // pred_region
          %p154 = scmp.lt.s32.totalorder %s26, 0
          %s155 = scalar_select %p154, %s26, 0
          %s156 = smul.addr %s155, 2
          %s157 = scalar_lea.vmem %s1, %s156
        $region16: #{tpu_custom_call.1} parent=11 // pred_fallthru
          _
      $region12: #{tpu_custom_call.1} parent=5 // pred_fallthru
        _
      %p158 = scmp.lt.s32.totalorder %s16, 2
      // Predicated region
      $region17: #{tpu_custom_call.1} parent=5 // pred_check
        %p159 = pneg %p158
      $region18: #{tpu_custom_call.1} parent=5 // pred_check_branch
        %161 = sbr.rel (%p159) target = $region20
      $region19: #{tpu_custom_call.1} parent=5 // pred_region
        // Predicated region
        $region21: #{tpu_custom_call.1} parent=19 // pred_check
          %p162 = pneg %p48
        $region22: #{tpu_custom_call.1} parent=19 // pred_check_branch
          %164 = sbr.rel (%p162) target = $region24
        $region23: #{tpu_custom_call.1} parent=19 // pred_region
          %p165 = scmp.lt.s32.totalorder %s23, 1
          %s166 = scalar_select %p165, %s23, 1
          %s167 = smul.addr %s166, 54
          %s168 = smul.addr %s167, 4
          %s169 = scalar_lea.vmem %s0, %s168
        $region24: #{tpu_custom_call.1} parent=19 // pred_fallthru
          _
      $region20: #{tpu_custom_call.1} parent=5 // pred_fallthru
        _
      %p170 = scmp.le.s32.totalorder 1, %s16
      %p171 = scmp.lt.s32.totalorder %s16, 3
      %p172 = pnand %p170, %p171
      %p173 = pneg %p172
      // Predicated region
      $region25: #{tpu_custom_call.1} parent=5 // pred_check
        _
      $region26: #{tpu_custom_call.1} parent=5 // pred_check_branch
        %175 = sbr.rel (%p172) target = $region28
      $region27: #{tpu_custom_call.1} parent=5 // pred_region
        %s176 = ssub.s32 %s16, 1
        %p177 = scmp.lt.s32.totalorder %s25, 1
        %s178 = scalar_select %p177, %s25, 1
        %s179 = smul.addr %s178, 54
        %s180 = smul.addr %s179, 4
        %s181 = scalar_lea.vmem %s0, %s180
        %p182 = pneg %p54
        %p183 = pneg %p51
        %p184 = scmp.lt.s32.totalorder %s26, 0
        %s185 = scalar_select %p184, %s26, 0
        %s186 = smul.addr %s185, 2
        %s187 = scalar_lea.vmem %s1, %s186
        %p188 = pneg %p80
        %p189 = pneg %p77
        %p190 = pneg %p108
        %p191 = pneg %p105
        %s192 = sand.u32 %s95, 1
        %s193 = scalar_lea.sflag [#allocation4], %s192
        %s194 = sand.u32 %s95, 1
        %s195 = smul.addr %s194, 256
        %s196 = scalar_lea.vmem [#allocation3], %s195
        %p197 = pneg %p136
        %p198 = pneg %p133
        %s199 = sand.u32 %s123, 1
        %s200 = scalar_lea.sflag [#allocation6], %s199
        %s201 = sand.u32 %s123, 1
        %s202 = smul.addr %s201, 2
        %s203 = scalar_lea.vmem [#allocation5], %s202
        %p204 = scmp.lt.s32.totalorder %s25, 1
        %s205 = scalar_select %p204, %s25, 1
        %s206 = smul.addr %s205, 54
        %s207 = smul.addr %s206, 4
        %s208 = scalar_lea.vmem %s0, %s207
        %p209 = scmp.lt.s32.totalorder %s26, 0
        %s210 = scalar_select %p209, %s26, 0
        %s211 = smul.addr %s210, 2
        %s212 = scalar_lea.vmem %s1, %s211
        %214 = vst [vmem:[#allocation2] sm:$0xff] 0.0
        %215 = vst [vmem:[#allocation2 + $0x8] sm:$0xff] 0.0
        %216 = vst [vmem:[#allocation2 + $0x10] sm:$0xff] 0.0
        %217 = vst [vmem:[#allocation2 + $0x18] sm:$0xff] 0.0
        %218 = vst [vmem:[#allocation2 + $0x20] sm:$0xff] 0.0
        %219 = vst [vmem:[#allocation2 + $0x28] sm:$0xff] 0.0
        %220 = vst [vmem:[#allocation2 + $0x30] sm:$0xff] 0.0
        %221 = vst [vmem:[#allocation2 + $0x38] sm:$0xff] 0.0
        %222 = vst [vmem:[#allocation2 + $0x40] sm:$0xff] 0.0
        %223 = vst [vmem:[#allocation2 + $0x48] sm:$0xff] 0.0
        %224 = vst [vmem:[#allocation2 + $0x50] sm:$0xff] 0.0
        %225 = vst [vmem:[#allocation2 + $0x58] sm:$0xff] 0.0
        %226 = vst [vmem:[#allocation2 + $0x60] sm:$0xff] 0.0
        %227 = vst [vmem:[#allocation2 + $0x68] sm:$0xff] 0.0
        %228 = vst [vmem:[#allocation2 + $0x70] sm:$0xff] 0.0
        %229 = vst [vmem:[#allocation2 + $0x78] sm:$0xff] 0.0
        %230 = vst [vmem:[#allocation2 + $0x80] sm:$0xff] 0.0
        %231 = vst [vmem:[#allocation2 + $0x88] sm:$0xff] 0.0
        %232 = vst [vmem:[#allocation2 + $0x90] sm:$0xff] 0.0
        %233 = vst [vmem:[#allocation2 + $0x98] sm:$0xff] 0.0
        %234 = vst [vmem:[#allocation2 + $0xa0] sm:$0xff] 0.0
        %235 = vst [vmem:[#allocation2 + $0xa8] sm:$0xff] 0.0
        %236 = vst [vmem:[#allocation2 + $0xb0] sm:$0xff] 0.0
        %237 = vst [vmem:[#allocation2 + $0xb8] sm:$0xff] 0.0
        %238 = vst [vmem:[#allocation2 + $0xc0] sm:$0xff] 0.0
        %239 = vst [vmem:[#allocation2 + $0xc8] sm:$0xff] 0.0
        %240 = vst [vmem:[#allocation2 + $0xd0] sm:$0xff] 0.0
        %241 = vst [vmem:[#allocation2 + $0xd8] sm:$0xff] 0.0
        %242 = vst [vmem:[#allocation2 + $0xe0] sm:$0xff] 0.0
        %243 = vst [vmem:[#allocation2 + $0xe8] sm:$0xff] 0.0
        %244 = vst [vmem:[#allocation2 + $0xf0] sm:$0xff] 0.0
        %245 = vst [vmem:[#allocation2 + $0xf8] sm:$0xff] 0.0
        %v246 = vld [vmem:[%s208] sm:$0xf]
        %v247 = vld [vmem:[%s208 + $0x4] sm:$0xf]
        %v248 = vld [vmem:[%s208 + $0xc] sm:$0xf]
        %v249 = vld [vmem:[%s208 + $0x10] sm:$0xf]
        %v250 = vld [vmem:[%s208 + $0x18] sm:$0xf]
        %v251 = vld [vmem:[%s208 + $0x1c] sm:$0xf]
        %v252 = vld [vmem:[%s208 + $0x24] sm:$0xf]
        %v253 = vld [vmem:[%s208 + $0x28] sm:$0xf]
        %v254 = vld [vmem:[%s208 + $0x30] sm:$0xf]
        %v255 = vld [vmem:[%s208 + $0x34] sm:$0xf]
        %v256 = vld [vmem:[%s208 + $0x3c] sm:$0xf]
        %v257 = vld [vmem:[%s208 + $0x40] sm:$0xf]
        %v258 = vld [vmem:[%s208 + $0x48] sm:$0xf]
        %v259 = vld [vmem:[%s208 + $0x4c] sm:$0xf]
        %v260 = vld [vmem:[%s208 + $0x54] sm:$0xf]
        %v261 = vld [vmem:[%s208 + $0x58] sm:$0xf]
        %v262 = vld [vmem:[%s208 + $0x60] sm:$0xf]
        %v263 = vld [vmem:[%s208 + $0x64] sm:$0xf]
        %v264 = vld [vmem:[%s208 + $0x6c] sm:$0xf]
        %v265 = vld [vmem:[%s208 + $0x70] sm:$0xf]
        %v266 = vld [vmem:[%s208 + $0x78] sm:$0xf]
        %v267 = vld [vmem:[%s208 + $0x7c] sm:$0xf]
        %v268 = vld [vmem:[%s208 + $0x84] sm:$0xf]
        %v269 = vld [vmem:[%s208 + $0x88] sm:$0xf]
        %v270 = vld [vmem:[%s208 + $0x90] sm:$0xf]
        %v271 = vld [vmem:[%s208 + $0x94] sm:$0xf]
        %v272 = vld [vmem:[%s208 + $0x9c] sm:$0xf]
        %v273 = vld [vmem:[%s208 + $0xa0] sm:$0xf]
        %v274 = vld [vmem:[%s208 + $0xa8] sm:$0xf]
        %v275 = vld [vmem:[%s208 + $0xac] sm:$0xf]
        %v276 = vld [vmem:[%s208 + $0xb4] sm:$0xf]
        %v277 = vld [vmem:[%s208 + $0xb8] sm:$0xf]
        %v278 = vld [vmem:[#allocation2] sm:$0xff]
        %v279 = vld [vmem:[#allocation2 + $0x8] sm:$0xff]
        %v280 = vld [vmem:[#allocation2 + $0x10] sm:$0xff]
        %v281 = vld [vmem:[#allocation2 + $0x18] sm:$0xff]
        %v282 = vld [vmem:[#allocation2 + $0x20] sm:$0xff]
        %v283 = vld [vmem:[#allocation2 + $0x28] sm:$0xff]
        %v284 = vld [vmem:[#allocation2 + $0x30] sm:$0xff]
        %v285 = vld [vmem:[#allocation2 + $0x38] sm:$0xff]
        %v286 = vld [vmem:[#allocation2 + $0x40] sm:$0xff]
        %v287 = vld [vmem:[#allocation2 + $0x48] sm:$0xff]
        %v288 = vld [vmem:[#allocation2 + $0x50] sm:$0xff]
        %v289 = vld [vmem:[#allocation2 + $0x58] sm:$0xff]
        %v290 = vld [vmem:[#allocation2 + $0x60] sm:$0xff]
        %v291 = vld [vmem:[#allocation2 + $0x68] sm:$0xff]
        %v292 = vld [vmem:[#allocation2 + $0x70] sm:$0xff]
        %v293 = vld [vmem:[#allocation2 + $0x78] sm:$0xff]
        %v294 = vld [vmem:[#allocation2 + $0x80] sm:$0xff]
        %v295 = vld [vmem:[#allocation2 + $0x88] sm:$0xff]
        %v296 = vld [vmem:[#allocation2 + $0x90] sm:$0xff]
        %v297 = vld [vmem:[#allocation2 + $0x98] sm:$0xff]
        %v298 = vld [vmem:[#allocation2 + $0xa0] sm:$0xff]
        %v299 = vld [vmem:[#allocation2 + $0xa8] sm:$0xff]
        %v300 = vld [vmem:[#allocation2 + $0xb0] sm:$0xff]
        %v301 = vld [vmem:[#allocation2 + $0xb8] sm:$0xff]
        %v302 = vld [vmem:[#allocation2 + $0xc0] sm:$0xff]
        %v303 = vld [vmem:[#allocation2 + $0xc8] sm:$0xff]
        %v304 = vld [vmem:[#allocation2 + $0xd0] sm:$0xff]
        %v305 = vld [vmem:[#allocation2 + $0xd8] sm:$0xff]
        %v306 = vld [vmem:[#allocation2 + $0xe0] sm:$0xff]
        %v307 = vld [vmem:[#allocation2 + $0xe8] sm:$0xff]
        %v308 = vld [vmem:[#allocation2 + $0xf0] sm:$0xff]
        %v309 = vld [vmem:[#allocation2 + $0xf8] sm:$0xff]
        %v310 = vld [vmem:[%s212] sm:$0x3]
        %v343 = vunpack.c.l.b16 %v246
        %v344 = vunpack.c.l.b16 %v247
        %v345 = vunpack.c.l.b16 %v248
        %v346 = vunpack.c.l.b16 %v249
        %v347 = vunpack.c.l.b16 %v250
        %v348 = vunpack.c.l.b16 %v251
        %v349 = vunpack.c.l.b16 %v252
        %v350 = vunpack.c.l.b16 %v253
        %v351 = vunpack.c.l.b16 %v254
        %v352 = vunpack.c.l.b16 %v255
        %v353 = vunpack.c.l.b16 %v256
        %v354 = vunpack.c.l.b16 %v257
        %v355 = vunpack.c.l.b16 %v258
        %v356 = vunpack.c.l.b16 %v259
        %v357 = vunpack.c.l.b16 %v260
        %v358 = vunpack.c.l.b16 %v261
        %v359 = vunpack.c.l.b16 %v262
        %v360 = vunpack.c.l.b16 %v263
        %v361 = vunpack.c.l.b16 %v264
        %v362 = vunpack.c.l.b16 %v265
        %v363 = vunpack.c.l.b16 %v266
        %v364 = vunpack.c.l.b16 %v267
        %v365 = vunpack.c.l.b16 %v268
        %v366 = vunpack.c.l.b16 %v269
        %v367 = vunpack.c.l.b16 %v270
        %v368 = vunpack.c.l.b16 %v271
        %v369 = vunpack.c.l.b16 %v272
        %v370 = vunpack.c.l.b16 %v273
        %v371 = vunpack.c.l.b16 %v274
        %v372 = vunpack.c.l.b16 %v275
        %v373 = vunpack.c.l.b16 %v276
        %v374 = vunpack.c.l.b16 %v277
        %v375 = vpack.c.b16 %v344, %v343
        %v376 = vpack.c.b16 %v346, %v345
        %v377 = vpack.c.b16 %v348, %v347
        %v378 = vpack.c.b16 %v350, %v349
        %v379 = vpack.c.b16 %v352, %v351
        %v380 = vpack.c.b16 %v354, %v353
        %v381 = vpack.c.b16 %v356, %v355
        %v382 = vpack.c.b16 %v358, %v357
        %v383 = vpack.c.b16 %v360, %v359
        %v384 = vpack.c.b16 %v362, %v361
        %v385 = vpack.c.b16 %v364, %v363
        %v386 = vpack.c.b16 %v366, %v365
        %v387 = vpack.c.b16 %v368, %v367
        %v388 = vpack.c.b16 %v370, %v369
        %v389 = vpack.c.b16 %v372, %v371
        %v390 = vpack.c.b16 %v374, %v373
        %vm391 = vcmask 31744
        %v393 = vsel %vm391, %v375, 0
        %v396 = vsel %vm391, %v376, 0
        %v399 = vsel %vm391, %v377, 0
        %v402 = vsel %vm391, %v378, 0
        %v405 = vsel %vm391, %v379, 0
        %v408 = vsel %vm391, %v380, 0
        %v411 = vsel %vm391, %v381, 0
        %v414 = vsel %vm391, %v382, 0
        %v417 = vsel %vm391, %v383, 0
        %v420 = vsel %vm391, %v384, 0
        %v423 = vsel %vm391, %v385, 0
        %v426 = vsel %vm391, %v386, 0
        %v429 = vsel %vm391, %v387, 0
        %v432 = vsel %vm391, %v388, 0
        %v435 = vsel %vm391, %v389, 0
        %v438 = vsel %vm391, %v390, 0
        %vm440 = vcmask 1041408
        %v442 = vsel %vm440, %v310, 0
        %444 = vmatprep.subr.bf16.mxu0 0
        %445 = vmatpush1.bf16.msra.mxu0 0
        %446 = vmatprep.subr.bf16.mxu0 0
        %447 = vmatpush1.bf16.msra.mxu0 0
        %448 = vmatprep.subr.bf16.mxu0 0
        %449 = vmatpush1.bf16.msra.mxu0 0
        %450 = vmatprep.subr.bf16.mxu0 0
        %451 = vmatpush1.bf16.msra.mxu0 0
        %452 = vmatprep.subr.bf16.mxu0 0
        %453 = vmatpush1.bf16.msra.mxu0 0
        %454 = vmatprep.subr.bf16.mxu0 0
        %455 = vmatpush1.bf16.msra.mxu0 0
        %456 = vmatprep.subr.bf16.mxu0 0
        %457 = vmatpush1.bf16.msra.mxu0 0
        %458 = vmatprep.subr.bf16.mxu0 0
        %459 = vmatpush1.bf16.msra.mxu0 %v442
        %460 = vmatprep.subr.bf16.mxu0 0
        %461 = vmatpush2.bf16.msra.mxu0 0
        %462 = vmatprep.subr.bf16.mxu0 0
        %463 = vmatpush2.bf16.msra.mxu0 0
        %464 = vmatprep.subr.bf16.mxu0 0
        %465 = vmatpush2.bf16.msra.mxu0 0
        %466 = vmatprep.subr.bf16.mxu0 0
        %467 = vmatpush2.bf16.msra.mxu0 0
        %468 = vmatprep.subr.bf16.mxu0 0
        %469 = vmatpush2.bf16.msra.mxu0 0
        %470 = vmatprep.subr.bf16.mxu0 0
        %471 = vmatpush2.bf16.msra.mxu0 0
        %472 = vmatprep.subr.bf16.mxu0 0
        %473 = vmatpush2.bf16.msra.mxu0 0
        %474 = vmatprep.subr.bf16.mxu0 0
        %475 = vmatpush2.bf16.msra.mxu0 0
        %476 = vmatprep.mubr.bf16.mxu0 0
        %477 = vmatmul.mubr.bf16.gmra.mxu0 %v393
        %v478 = vpop.f32.mrf.mxu0
        %v479 = vadd.f32 0.0, %v478
        %v480 = vpop.f32.mrf.mxu0
        %v481 = vpop.f32.mrf.mxu0
        %v482 = vadd.f32 0.0, %v481
        %v483 = vpop.f32.mrf.mxu0
        %484 = vmatprep.mubr.bf16.mxu0 0
        %485 = vmatmul.mubr.bf16.gmra.mxu0 %v396
        %v486 = vpop.f32.mrf.mxu0
        %v487 = vadd.f32 0.0, %v486
        %v488 = vpop.f32.mrf.mxu0
        %v489 = vpop.f32.mrf.mxu0
        %v490 = vadd.f32 0.0, %v489
        %v491 = vpop.f32.mrf.mxu0
        %492 = vmatprep.mubr.bf16.mxu0 0
        %493 = vmatmul.mubr.bf16.gmra.mxu0 %v399
        %v494 = vpop.f32.mrf.mxu0
        %v495 = vadd.f32 0.0, %v494
        %v496 = vpop.f32.mrf.mxu0
        %v497 = vpop.f32.mrf.mxu0
        %v498 = vadd.f32 0.0, %v497
        %v499 = vpop.f32.mrf.mxu0
        %500 = vmatprep.mubr.bf16.mxu0 0
        %501 = vmatmul.mubr.bf16.gmra.mxu0 %v402
        %v502 = vpop.f32.mrf.mxu0
        %v503 = vadd.f32 0.0, %v502
        %v504 = vpop.f32.mrf.mxu0
        %v505 = vpop.f32.mrf.mxu0
        %v506 = vadd.f32 0.0, %v505
        %v507 = vpop.f32.mrf.mxu0
        %508 = vmatprep.mubr.bf16.mxu0 0
        %509 = vmatmul.mubr.bf16.gmra.mxu0 %v405
        %v510 = vpop.f32.mrf.mxu0
        %v511 = vadd.f32 0.0, %v510
        %v512 = vpop.f32.mrf.mxu0
        %v513 = vpop.f32.mrf.mxu0
        %v514 = vadd.f32 0.0, %v513
        %v515 = vpop.f32.mrf.mxu0
        %516 = vmatprep.mubr.bf16.mxu0 0
        %517 = vmatmul.mubr.bf16.gmra.mxu0 %v408
        %v518 = vpop.f32.mrf.mxu0
        %v519 = vadd.f32 0.0, %v518
        %v520 = vpop.f32.mrf.mxu0
        %v521 = vpop.f32.mrf.mxu0
        %v522 = vadd.f32 0.0, %v521
        %v523 = vpop.f32.mrf.mxu0
        %524 = vmatprep.mubr.bf16.mxu0 0
        %525 = vmatmul.mubr.bf16.gmra.mxu0 %v411
        %v526 = vpop.f32.mrf.mxu0
        %v527 = vadd.f32 0.0, %v526
        %v528 = vpop.f32.mrf.mxu0
        %v529 = vpop.f32.mrf.mxu0
        %v530 = vadd.f32 0.0, %v529
        %v531 = vpop.f32.mrf.mxu0
        %532 = vmatprep.mubr.bf16.mxu0 0
        %533 = vmatmul.mubr.bf16.gmra.mxu0 %v414
        %v534 = vpop.f32.mrf.mxu0
        %v535 = vadd.f32 0.0, %v534
        %v536 = vpop.f32.mrf.mxu0
        %v537 = vpop.f32.mrf.mxu0
        %v538 = vadd.f32 0.0, %v537
        %v539 = vpop.f32.mrf.mxu0
        %540 = vmatprep.mubr.bf16.mxu0 0
        %541 = vmatmul.mubr.bf16.gmra.mxu0 %v417
        %v542 = vpop.f32.mrf.mxu0
        %v543 = vadd.f32 0.0, %v542
        %v544 = vpop.f32.mrf.mxu0
        %v545 = vpop.f32.mrf.mxu0
        %v546 = vadd.f32 0.0, %v545
        %v547 = vpop.f32.mrf.mxu0
        %548 = vmatprep.mubr.bf16.mxu0 0
        %549 = vmatmul.mubr.bf16.gmra.mxu0 %v420
        %v550 = vpop.f32.mrf.mxu0
        %v551 = vadd.f32 0.0, %v550
        %v552 = vpop.f32.mrf.mxu0
        %v553 = vpop.f32.mrf.mxu0
        %v554 = vadd.f32 0.0, %v553
        %v555 = vpop.f32.mrf.mxu0
        %556 = vmatprep.mubr.bf16.mxu0 0
        %557 = vmatmul.mubr.bf16.gmra.mxu0 %v423
        %v558 = vpop.f32.mrf.mxu0
        %v559 = vadd.f32 0.0, %v558
        %v560 = vpop.f32.mrf.mxu0
        %v561 = vpop.f32.mrf.mxu0
        %v562 = vadd.f32 0.0, %v561
        %v563 = vpop.f32.mrf.mxu0
        %564 = vmatprep.mubr.bf16.mxu0 0
        %565 = vmatmul.mubr.bf16.gmra.mxu0 %v426
        %v566 = vpop.f32.mrf.mxu0
        %v567 = vadd.f32 0.0, %v566
        %v568 = vpop.f32.mrf.mxu0
        %v569 = vpop.f32.mrf.mxu0
        %v570 = vadd.f32 0.0, %v569
        %v571 = vpop.f32.mrf.mxu0
        %572 = vmatprep.mubr.bf16.mxu0 0
        %573 = vmatmul.mubr.bf16.gmra.mxu0 %v429
        %v574 = vpop.f32.mrf.mxu0
        %v575 = vadd.f32 0.0, %v574
        %v576 = vpop.f32.mrf.mxu0
        %v577 = vpop.f32.mrf.mxu0
        %v578 = vadd.f32 0.0, %v577
        %v579 = vpop.f32.mrf.mxu0
        %580 = vmatprep.mubr.bf16.mxu0 0
        %581 = vmatmul.mubr.bf16.gmra.mxu0 %v432
        %v582 = vpop.f32.mrf.mxu0
        %v583 = vadd.f32 0.0, %v582
        %v584 = vpop.f32.mrf.mxu0
        %v585 = vpop.f32.mrf.mxu0
        %v586 = vadd.f32 0.0, %v585
        %v587 = vpop.f32.mrf.mxu0
        %588 = vmatprep.mubr.bf16.mxu0 0
        %589 = vmatmul.mubr.bf16.gmra.mxu0 %v435
        %v590 = vpop.f32.mrf.mxu0
        %v591 = vadd.f32 0.0, %v590
        %v592 = vpop.f32.mrf.mxu0
        %v593 = vpop.f32.mrf.mxu0
        %v594 = vadd.f32 0.0, %v593
        %v595 = vpop.f32.mrf.mxu0
        %596 = vmatprep.mubr.bf16.mxu0 0
        %597 = vmatmul.mubr.bf16.gmra.mxu0 %v438
        %v598 = vpop.f32.mrf.mxu0
        %v599 = vadd.f32 0.0, %v598
        %v600 = vpop.f32.mrf.mxu0
        %v601 = vpop.f32.mrf.mxu0
        %v602 = vadd.f32 0.0, %v601
        %v603 = vpop.f32.mrf.mxu0
        %604 = vdwg.mxu0
        %v605 = vadd.f32 %v278, %v479
        %v606 = vadd.f32 %v279, %v482
        %v607 = vadd.f32 %v280, %v487
        %v608 = vadd.f32 %v281, %v490
        %v609 = vadd.f32 %v282, %v495
        %v610 = vadd.f32 %v283, %v498
        %v611 = vadd.f32 %v284, %v503
        %v612 = vadd.f32 %v285, %v506
        %v613 = vadd.f32 %v286, %v511
        %v614 = vadd.f32 %v287, %v514
        %v615 = vadd.f32 %v288, %v519
        %v616 = vadd.f32 %v289, %v522
        %v617 = vadd.f32 %v290, %v527
        %v618 = vadd.f32 %v291, %v530
        %v619 = vadd.f32 %v292, %v535
        %v620 = vadd.f32 %v293, %v538
        %v621 = vadd.f32 %v294, %v543
        %v622 = vadd.f32 %v295, %v546
        %v623 = vadd.f32 %v296, %v551
        %v624 = vadd.f32 %v297, %v554
        %v625 = vadd.f32 %v298, %v559
        %v626 = vadd.f32 %v299, %v562
        %v627 = vadd.f32 %v300, %v567
        %v628 = vadd.f32 %v301, %v570
        %v629 = vadd.f32 %v302, %v575
        %v630 = vadd.f32 %v303, %v578
        %v631 = vadd.f32 %v304, %v583
        %v632 = vadd.f32 %v305, %v586
        %v633 = vadd.f32 %v306, %v591
        %v634 = vadd.f32 %v307, %v594
        %v635 = vadd.f32 %v308, %v599
        %v636 = vadd.f32 %v309, %v602
        %637 = vst [vmem:[#allocation2] sm:$0xff] %v605
        %638 = vst [vmem:[#allocation2 + $0x8] sm:$0xff] %v606
        %639 = vst [vmem:[#allocation2 + $0x10] sm:$0xff] %v607
        %640 = vst [vmem:[#allocation2 + $0x18] sm:$0xff] %v608
        %641 = vst [vmem:[#allocation2 + $0x20] sm:$0xff] %v609
        %642 = vst [vmem:[#allocation2 + $0x28] sm:$0xff] %v610
        %643 = vst [vmem:[#allocation2 + $0x30] sm:$0xff] %v611
        %644 = vst [vmem:[#allocation2 + $0x38] sm:$0xff] %v612
        %645 = vst [vmem:[#allocation2 + $0x40] sm:$0xff] %v613
        %646 = vst [vmem:[#allocation2 + $0x48] sm:$0xff] %v614
        %647 = vst [vmem:[#allocation2 + $0x50] sm:$0xff] %v615
        %648 = vst [vmem:[#allocation2 + $0x58] sm:$0xff] %v616
        %649 = vst [vmem:[#allocation2 + $0x60] sm:$0xff] %v617
        %650 = vst [vmem:[#allocation2 + $0x68] sm:$0xff] %v618
        %651 = vst [vmem:[#allocation2 + $0x70] sm:$0xff] %v619
        %652 = vst [vmem:[#allocation2 + $0x78] sm:$0xff] %v620
        %653 = vst [vmem:[#allocation2 + $0x80] sm:$0xff] %v621
        %654 = vst [vmem:[#allocation2 + $0x88] sm:$0xff] %v622
        %655 = vst [vmem:[#allocation2 + $0x90] sm:$0xff] %v623
        %656 = vst [vmem:[#allocation2 + $0x98] sm:$0xff] %v624
        %657 = vst [vmem:[#allocation2 + $0xa0] sm:$0xff] %v625
        %658 = vst [vmem:[#allocation2 + $0xa8] sm:$0xff] %v626
        %659 = vst [vmem:[#allocation2 + $0xb0] sm:$0xff] %v627
        %660 = vst [vmem:[#allocation2 + $0xb8] sm:$0xff] %v628
        %661 = vst [vmem:[#allocation2 + $0xc0] sm:$0xff] %v629
        %662 = vst [vmem:[#allocation2 + $0xc8] sm:$0xff] %v630
        %663 = vst [vmem:[#allocation2 + $0xd0] sm:$0xff] %v631
        %664 = vst [vmem:[#allocation2 + $0xd8] sm:$0xff] %v632
        %665 = vst [vmem:[#allocation2 + $0xe0] sm:$0xff] %v633
        %666 = vst [vmem:[#allocation2 + $0xe8] sm:$0xff] %v634
        %667 = vst [vmem:[#allocation2 + $0xf0] sm:$0xff] %v635
        %668 = vst [vmem:[#allocation2 + $0xf8] sm:$0xff] %v636
        %v669 = vld [vmem:[%s208] sm:$0xf]
        %v670 = vld [vmem:[%s208 + $0x4] sm:$0xf]
        %v671 = vld [vmem:[%s208 + $0x8] sm:$0x1]
        %v672 = vld [vmem:[%s208 + $0xc] sm:$0xf]
        %v673 = vld [vmem:[%s208 + $0x10] sm:$0xf]
        %v674 = vld [vmem:[%s208 + $0x14] sm:$0x1]
        %v675 = vld [vmem:[%s208 + $0x18] sm:$0xf]
        %v676 = vld [vmem:[%s208 + $0x1c] sm:$0xf]
        %v677 = vld [vmem:[%s208 + $0x20] sm:$0x1]
        %v678 = vld [vmem:[%s208 + $0x24] sm:$0xf]
        %v679 = vld [vmem:[%s208 + $0x28] sm:$0xf]
        %v680 = vld [vmem:[%s208 + $0x2c] sm:$0x1]
        %v681 = vld [vmem:[%s208 + $0x30] sm:$0xf]
        %v682 = vld [vmem:[%s208 + $0x34] sm:$0xf]
        %v683 = vld [vmem:[%s208 + $0x38] sm:$0x1]
        %v684 = vld [vmem:[%s208 + $0x3c] sm:$0xf]
        %v685 = vld [vmem:[%s208 + $0x40] sm:$0xf]
        %v686 = vld [vmem:[%s208 + $0x44] sm:$0x1]
        %v687 = vld [vmem:[%s208 + $0x48] sm:$0xf]
        %v688 = vld [vmem:[%s208 + $0x4c] sm:$0xf]
        %v689 = vld [vmem:[%s208 + $0x50] sm:$0x1]
        %v690 = vld [vmem:[%s208 + $0x54] sm:$0xf]
        %v691 = vld [vmem:[%s208 + $0x58] sm:$0xf]
        %v692 = vld [vmem:[%s208 + $0x5c] sm:$0x1]
        %v693 = vld [vmem:[%s208 + $0x60] sm:$0xf]
        %v694 = vld [vmem:[%s208 + $0x64] sm:$0xf]
        %v695 = vld [vmem:[%s208 + $0x68] sm:$0x1]
        %v696 = vld [vmem:[%s208 + $0x6c] sm:$0xf]
        %v697 = vld [vmem:[%s208 + $0x70] sm:$0xf]
        %v698 = vld [vmem:[%s208 + $0x74] sm:$0x1]
        %v699 = vld [vmem:[%s208 + $0x78] sm:$0xf]
        %v700 = vld [vmem:[%s208 + $0x7c] sm:$0xf]
        %v701 = vld [vmem:[%s208 + $0x80] sm:$0x1]
        %v702 = vld [vmem:[%s208 + $0x84] sm:$0xf]
        %v703 = vld [vmem:[%s208 + $0x88] sm:$0xf]
        %v704 = vld [vmem:[%s208 + $0x8c] sm:$0x1]
        %v705 = vld [vmem:[%s208 + $0x90] sm:$0xf]
        %v706 = vld [vmem:[%s208 + $0x94] sm:$0xf]
        %v707 = vld [vmem:[%s208 + $0x98] sm:$0x1]
        %v708 = vld [vmem:[%s208 + $0x9c] sm:$0xf]
        %v709 = vld [vmem:[%s208 + $0xa0] sm:$0xf]
        %v710 = vld [vmem:[%s208 + $0xa4] sm:$0x1]
        %v711 = vld [vmem:[%s208 + $0xa8] sm:$0xf]
        %v712 = vld [vmem:[%s208 + $0xac] sm:$0xf]
        %v713 = vld [vmem:[%s208 + $0xb0] sm:$0x1]
        %v714 = vld [vmem:[%s208 + $0xb4] sm:$0xf]
        %v715 = vld [vmem:[%s208 + $0xb8] sm:$0xf]
        %v716 = vld [vmem:[%s208 + $0xbc] sm:$0x1]
        %vm717 = vsmask.f32 3328
        %vm718 = vsmask.f32 7440
        %vm719 = vmor %vm717, %vm718
        %v721 = vshrl.u32 %v669, 16
        %v723 = vrot.slane %v721, 4
        %v724 = vshll.u32 %v669, 16
        %v726 = vrot.slane %v724, 5
        %v727 = vor.u32 %v723, %v726
        %v728 = vrot.slane %v727, 4
        %v730 = vshll.u32 %v670, 16
        %v732 = vrot.slane %v730, 5
        %v733 = vsel %vm719, %v728, %v732
        %v734 = vshrl.u32 %v670, 16
        %v736 = vrot.slane %v734, 4
        %v737 = vor.u32 %v736, %v732
        %v738 = vrot.slane %v737, 4
        %v740 = vshll.u32 %v671, 16
        %v742 = vrot.slane %v740, 5
        %v743 = vsel %vm719, %v738, %v742
        %v745 = vshrl.u32 %v672, 16
        %v747 = vrot.slane %v745, 4
        %v748 = vshll.u32 %v672, 16
        %v750 = vrot.slane %v748, 5
        %v751 = vor.u32 %v747, %v750
        %v752 = vrot.slane %v751, 4
        %v754 = vshll.u32 %v673, 16
        %v756 = vrot.slane %v754, 5
        %v757 = vsel %vm719, %v752, %v756
        %v758 = vshrl.u32 %v673, 16
        %v760 = vrot.slane %v758, 4
        %v761 = vor.u32 %v760, %v756
        %v762 = vrot.slane %v761, 4
        %v764 = vshll.u32 %v674, 16
        %v766 = vrot.slane %v764, 5
        %v767 = vsel %vm719, %v762, %v766
        %v769 = vshrl.u32 %v675, 16
        %v771 = vrot.slane %v769, 4
        %v772 = vshll.u32 %v675, 16
        %v774 = vrot.slane %v772, 5
        %v775 = vor.u32 %v771, %v774
        %v776 = vrot.slane %v775, 4
        %v778 = vshll.u32 %v676, 16
        %v780 = vrot.slane %v778, 5
        %v781 = vsel %vm719, %v776, %v780
        %v782 = vshrl.u32 %v676, 16
        %v784 = vrot.slane %v782, 4
        %v785 = vor.u32 %v784, %v780
        %v786 = vrot.slane %v785, 4
        %v788 = vshll.u32 %v677, 16
        %v790 = vrot.slane %v788, 5
        %v791 = vsel %vm719, %v786, %v790
        %v793 = vshrl.u32 %v678, 16
        %v795 = vrot.slane %v793, 4
        %v796 = vshll.u32 %v678, 16
        %v798 = vrot.slane %v796, 5
        %v799 = vor.u32 %v795, %v798
        %v800 = vrot.slane %v799, 4
        %v802 = vshll.u32 %v679, 16
        %v804 = vrot.slane %v802, 5
        %v805 = vsel %vm719, %v800, %v804
        %v806 = vshrl.u32 %v679, 16
        %v808 = vrot.slane %v806, 4
        %v809 = vor.u32 %v808, %v804
        %v810 = vrot.slane %v809, 4
        %v812 = vshll.u32 %v680, 16
        %v814 = vrot.slane %v812, 5
        %v815 = vsel %vm719, %v810, %v814
        %v817 = vshrl.u32 %v681, 16
        %v819 = vrot.slane %v817, 4
        %v820 = vshll.u32 %v681, 16
        %v822 = vrot.slane %v820, 5
        %v823 = vor.u32 %v819, %v822
        %v824 = vrot.slane %v823, 4
        %v826 = vshll.u32 %v682, 16
        %v828 = vrot.slane %v826, 5
        %v829 = vsel %vm719, %v824, %v828
        %v830 = vshrl.u32 %v682, 16
        %v832 = vrot.slane %v830, 4
        %v833 = vor.u32 %v832, %v828
        %v834 = vrot.slane %v833, 4
        %v836 = vshll.u32 %v683, 16
        %v838 = vrot.slane %v836, 5
        %v839 = vsel %vm719, %v834, %v838
        %v841 = vshrl.u32 %v684, 16
        %v843 = vrot.slane %v841, 4
        %v844 = vshll.u32 %v684, 16
        %v846 = vrot.slane %v844, 5
        %v847 = vor.u32 %v843, %v846
        %v848 = vrot.slane %v847, 4
        %v850 = vshll.u32 %v685, 16
        %v852 = vrot.slane %v850, 5
        %v853 = vsel %vm719, %v848, %v852
        %v854 = vshrl.u32 %v685, 16
        %v856 = vrot.slane %v854, 4
        %v857 = vor.u32 %v856, %v852
        %v858 = vrot.slane %v857, 4
        %v860 = vshll.u32 %v686, 16
        %v862 = vrot.slane %v860, 5
        %v863 = vsel %vm719, %v858, %v862
        %v865 = vshrl.u32 %v687, 16
        %v867 = vrot.slane %v865, 4
        %v868 = vshll.u32 %v687, 16
        %v870 = vrot.slane %v868, 5
        %v871 = vor.u32 %v867, %v870
        %v872 = vrot.slane %v871, 4
        %v874 = vshll.u32 %v688, 16
        %v876 = vrot.slane %v874, 5
        %v877 = vsel %vm719, %v872, %v876
        %v878 = vshrl.u32 %v688, 16
        %v880 = vrot.slane %v878, 4
        %v881 = vor.u32 %v880, %v876
        %v882 = vrot.slane %v881, 4
        %v884 = vshll.u32 %v689, 16
        %v886 = vrot.slane %v884, 5
        %v887 = vsel %vm719, %v882, %v886
        %v889 = vshrl.u32 %v690, 16
        %v891 = vrot.slane %v889, 4
        %v892 = vshll.u32 %v690, 16
        %v894 = vrot.slane %v892, 5
        %v895 = vor.u32 %v891, %v894
        %v896 = vrot.slane %v895, 4
        %v898 = vshll.u32 %v691, 16
        %v900 = vrot.slane %v898, 5
        %v901 = vsel %vm719, %v896, %v900
        %v902 = vshrl.u32 %v691, 16
        %v904 = vrot.slane %v902, 4
        %v905 = vor.u32 %v904, %v900
        %v906 = vrot.slane %v905, 4
        %v908 = vshll.u32 %v692, 16
        %v910 = vrot.slane %v908, 5
        %v911 = vsel %vm719, %v906, %v910
        %v913 = vshrl.u32 %v693, 16
        %v915 = vrot.slane %v913, 4
        %v916 = vshll.u32 %v693, 16
        %v918 = vrot.slane %v916, 5
        %v919 = vor.u32 %v915, %v918
        %v920 = vrot.slane %v919, 4
        %v922 = vshll.u32 %v694, 16
        %v924 = vrot.slane %v922, 5
        %v925 = vsel %vm719, %v920, %v924
        %v926 = vshrl.u32 %v694, 16
        %v928 = vrot.slane %v926, 4
        %v929 = vor.u32 %v928, %v924
        %v930 = vrot.slane %v929, 4
        %v932 = vshll.u32 %v695, 16
        %v934 = vrot.slane %v932, 5
        %v935 = vsel %vm719, %v930, %v934
        %v937 = vshrl.u32 %v696, 16
        %v939 = vrot.slane %v937, 4
        %v940 = vshll.u32 %v696, 16
        %v942 = vrot.slane %v940, 5
        %v943 = vor.u32 %v939, %v942
        %v944 = vrot.slane %v943, 4
        %v946 = vshll.u32 %v697, 16
        %v948 = vrot.slane %v946, 5
        %v949 = vsel %vm719, %v944, %v948
        %v950 = vshrl.u32 %v697, 16
        %v952 = vrot.slane %v950, 4
        %v953 = vor.u32 %v952, %v948
        %v954 = vrot.slane %v953, 4
        %v956 = vshll.u32 %v698, 16
        %v958 = vrot.slane %v956, 5
        %v959 = vsel %vm719, %v954, %v958
        %v961 = vshrl.u32 %v699, 16
        %v963 = vrot.slane %v961, 4
        %v964 = vshll.u32 %v699, 16
        %v966 = vrot.slane %v964, 5
        %v967 = vor.u32 %v963, %v966
        %v968 = vrot.slane %v967, 4
        %v970 = vshll.u32 %v700, 16
        %v972 = vrot.slane %v970, 5
        %v973 = vsel %vm719, %v968, %v972
        %v974 = vshrl.u32 %v700, 16
        %v976 = vrot.slane %v974, 4
        %v977 = vor.u32 %v976, %v972
        %v978 = vrot.slane %v977, 4
        %v980 = vshll.u32 %v701, 16
        %v982 = vrot.slane %v980, 5
        %v983 = vsel %vm719, %v978, %v982
        %v985 = vshrl.u32 %v702, 16
        %v987 = vrot.slane %v985, 4
        %v988 = vshll.u32 %v702, 16
        %v990 = vrot.slane %v988, 5
        %v991 = vor.u32 %v987, %v990
        %v992 = vrot.slane %v991, 4
        %v994 = vshll.u32 %v703, 16
        %v996 = vrot.slane %v994, 5
        %v997 = vsel %vm719, %v992, %v996
        %v998 = vshrl.u32 %v703, 16
        %v1000 = vrot.slane %v998, 4
        %v1001 = vor.u32 %v1000, %v996
        %v1002 = vrot.slane %v1001, 4
        %v1004 = vshll.u32 %v704, 16
        %v1006 = vrot.slane %v1004, 5
        %v1007 = vsel %vm719, %v1002, %v1006
        %v1009 = vshrl.u32 %v705, 16
        %v1011 = vrot.slane %v1009, 4
        %v1012 = vshll.u32 %v705, 16
        %v1014 = vrot.slane %v1012, 5
        %v1015 = vor.u32 %v1011, %v1014
        %v1016 = vrot.slane %v1015, 4
        %v1018 = vshll.u32 %v706, 16
        %v1020 = vrot.slane %v1018, 5
        %v1021 = vsel %vm719, %v1016, %v1020
        %v1022 = vshrl.u32 %v706, 16
        %v1024 = vrot.slane %v1022, 4
        %v1025 = vor.u32 %v1024, %v1020
        %v1026 = vrot.slane %v1025, 4
        %v1028 = vshll.u32 %v707, 16
        %v1030 = vrot.slane %v1028, 5
        %v1031 = vsel %vm719, %v1026, %v1030
        %v1033 = vshrl.u32 %v708, 16
        %v1035 = vrot.slane %v1033, 4
        %v1036 = vshll.u32 %v708, 16
        %v1038 = vrot.slane %v1036, 5
        %v1039 = vor.u32 %v1035, %v1038
        %v1040 = vrot.slane %v1039, 4
        %v1042 = vshll.u32 %v709, 16
        %v1044 = vrot.slane %v1042, 5
        %v1045 = vsel %vm719, %v1040, %v1044
        %v1046 = vshrl.u32 %v709, 16
        %v1048 = vrot.slane %v1046, 4
        %v1049 = vor.u32 %v1048, %v1044
        %v1050 = vrot.slane %v1049, 4
        %v1052 = vshll.u32 %v710, 16
        %v1054 = vrot.slane %v1052, 5
        %v1055 = vsel %vm719, %v1050, %v1054
        %v1057 = vshrl.u32 %v711, 16
        %v1059 = vrot.slane %v1057, 4
        %v1060 = vshll.u32 %v711, 16
        %v1062 = vrot.slane %v1060, 5
        %v1063 = vor.u32 %v1059, %v1062
        %v1064 = vrot.slane %v1063, 4
        %v1066 = vshll.u32 %v712, 16
        %v1068 = vrot.slane %v1066, 5
        %v1069 = vsel %vm719, %v1064, %v1068
        %v1070 = vshrl.u32 %v712, 16
        %v1072 = vrot.slane %v1070, 4
        %v1073 = vor.u32 %v1072, %v1068
        %v1074 = vrot.slane %v1073, 4
        %v1076 = vshll.u32 %v713, 16
        %v1078 = vrot.slane %v1076, 5
        %v1079 = vsel %vm719, %v1074, %v1078
        %v1081 = vshrl.u32 %v714, 16
        %v1083 = vrot.slane %v1081, 4
        %v1084 = vshll.u32 %v714, 16
        %v1086 = vrot.slane %v1084, 5
        %v1087 = vor.u32 %v1083, %v1086
        %v1088 = vrot.slane %v1087, 4
        %v1090 = vshll.u32 %v715, 16
        %v1092 = vrot.slane %v1090, 5
        %v1093 = vsel %vm719, %v1088, %v1092
        %v1094 = vshrl.u32 %v715, 16
        %v1096 = vrot.slane %v1094, 4
        %v1097 = vor.u32 %v1096, %v1092
        %v1098 = vrot.slane %v1097, 4
        %v1100 = vshll.u32 %v716, 16
        %v1102 = vrot.slane %v1100, 5
        %v1103 = vsel %vm719, %v1098, %v1102
        %v1104 = vld [vmem:[#allocation2] sm:$0xff]
        %v1105 = vld [vmem:[#allocation2 + $0x8] sm:$0xff]
        %v1106 = vld [vmem:[#allocation2 + $0x10] sm:$0xff]
        %v1107 = vld [vmem:[#allocation2 + $0x18] sm:$0xff]
        %v1108 = vld [vmem:[#allocation2 + $0x20] sm:$0xff]
        %v1109 = vld [vmem:[#allocation2 + $0x28] sm:$0xff]
        %v1110 = vld [vmem:[#allocation2 + $0x30] sm:$0xff]
        %v1111 = vld [vmem:[#allocation2 + $0x38] sm:$0xff]
        %v1112 = vld [vmem:[#allocation2 + $0x40] sm:$0xff]
        %v1113 = vld [vmem:[#allocation2 + $0x48] sm:$0xff]
        %v1114 = vld [vmem:[#allocation2 + $0x50] sm:$0xff]
        %v1115 = vld [vmem:[#allocation2 + $0x58] sm:$0xff]
        %v1116 = vld [vmem:[#allocation2 + $0x60] sm:$0xff]
        %v1117 = vld [vmem:[#allocation2 + $0x68] sm:$0xff]
        %v1118 = vld [vmem:[#allocation2 + $0x70] sm:$0xff]
        %v1119 = vld [vmem:[#allocation2 + $0x78] sm:$0xff]
        %v1120 = vld [vmem:[#allocation2 + $0x80] sm:$0xff]
        %v1121 = vld [vmem:[#allocation2 + $0x88] sm:$0xff]
        %v1122 = vld [vmem:[#allocation2 + $0x90] sm:$0xff]
        %v1123 = vld [vmem:[#allocation2 + $0x98] sm:$0xff]
        %v1124 = vld [vmem:[#allocation2 + $0xa0] sm:$0xff]
        %v1125 = vld [vmem:[#allocation2 + $0xa8] sm:$0xff]
        %v1126 = vld [vmem:[#allocation2 + $0xb0] sm:$0xff]
        %v1127 = vld [vmem:[#allocation2 + $0xb8] sm:$0xff]
        %v1128 = vld [vmem:[#allocation2 + $0xc0] sm:$0xff]
        %v1129 = vld [vmem:[#allocation2 + $0xc8] sm:$0xff]
        %v1130 = vld [vmem:[#allocation2 + $0xd0] sm:$0xff]
        %v1131 = vld [vmem:[#allocation2 + $0xd8] sm:$0xff]
        %v1132 = vld [vmem:[#allocation2 + $0xe0] sm:$0xff]
        %v1133 = vld [vmem:[#allocation2 + $0xe8] sm:$0xff]
        %v1134 = vld [vmem:[#allocation2 + $0xf0] sm:$0xff]
        %v1135 = vld [vmem:[#allocation2 + $0xf8] sm:$0xff]
        %s1136 = scalar_lea.vmem %s212, 2
        %v1137 = vld [vmem:[%s1136] sm:$0x3]
        %v1138 = vunpack.c.l.b16 %v733
        %v1139 = vunpack.c.l.b16 %v743
        %v1140 = vunpack.c.l.b16 %v757
        %v1141 = vunpack.c.l.b16 %v767
        %v1142 = vunpack.c.l.b16 %v781
        %v1143 = vunpack.c.l.b16 %v791
        %v1144 = vunpack.c.l.b16 %v805
        %v1145 = vunpack.c.l.b16 %v815
        %v1146 = vunpack.c.l.b16 %v829
        %v1147 = vunpack.c.l.b16 %v839
        %v1148 = vunpack.c.l.b16 %v853
        %v1149 = vunpack.c.l.b16 %v863
        %v1150 = vunpack.c.l.b16 %v877
        %v1151 = vunpack.c.l.b16 %v887
        %v1152 = vunpack.c.l.b16 %v901
        %v1153 = vunpack.c.l.b16 %v911
        %v1154 = vunpack.c.l.b16 %v925
        %v1155 = vunpack.c.l.b16 %v935
        %v1156 = vunpack.c.l.b16 %v949
        %v1157 = vunpack.c.l.b16 %v959
        %v1158 = vunpack.c.l.b16 %v973
        %v1159 = vunpack.c.l.b16 %v983
        %v1160 = vunpack.c.l.b16 %v997
        %v1161 = vunpack.c.l.b16 %v1007
        %v1162 = vunpack.c.l.b16 %v1021
        %v1163 = vunpack.c.l.b16 %v1031
        %v1164 = vunpack.c.l.b16 %v1045
        %v1165 = vunpack.c.l.b16 %v1055
        %v1166 = vunpack.c.l.b16 %v1069
        %v1167 = vunpack.c.l.b16 %v1079
        %v1168 = vunpack.c.l.b16 %v1093
        %v1169 = vunpack.c.l.b16 %v1103
        %v1170 = vpack.c.b16 %v1139, %v1138
        %v1171 = vpack.c.b16 %v1141, %v1140
        %v1172 = vpack.c.b16 %v1143, %v1142
        %v1173 = vpack.c.b16 %v1145, %v1144
        %v1174 = vpack.c.b16 %v1147, %v1146
        %v1175 = vpack.c.b16 %v1149, %v1148
        %v1176 = vpack.c.b16 %v1151, %v1150
        %v1177 = vpack.c.b16 %v1153, %v1152
        %v1178 = vpack.c.b16 %v1155, %v1154
        %v1179 = vpack.c.b16 %v1157, %v1156
        %v1180 = vpack.c.b16 %v1159, %v1158
        %v1181 = vpack.c.b16 %v1161, %v1160
        %v1182 = vpack.c.b16 %v1163, %v1162
        %v1183 = vpack.c.b16 %v1165, %v1164
        %v1184 = vpack.c.b16 %v1167, %v1166
        %v1185 = vpack.c.b16 %v1169, %v1168
        %v1187 = vsel %vm391, %v1170, 0
        %v1190 = vsel %vm391, %v1171, 0
        %v1193 = vsel %vm391, %v1172, 0
        %v1196 = vsel %vm391, %v1173, 0
        %v1199 = vsel %vm391, %v1174, 0
        %v1202 = vsel %vm391, %v1175, 0
        %v1205 = vsel %vm391, %v1176, 0
        %v1208 = vsel %vm391, %v1177, 0
        %v1211 = vsel %vm391, %v1178, 0
        %v1214 = vsel %vm391, %v1179, 0
        %v1217 = vsel %vm391, %v1180, 0
        %v1220 = vsel %vm391, %v1181, 0
        %v1223 = vsel %vm391, %v1182, 0
        %v1226 = vsel %vm391, %v1183, 0
        %v1229 = vsel %vm391, %v1184, 0
        %v1232 = vsel %vm391, %v1185, 0
        %v1235 = vsel %vm440, %v1137, 0
        %1237 = vmatprep.subr.bf16.mxu0 0
        %1238 = vmatpush1.bf16.msra.mxu0 0
        %1239 = vmatprep.subr.bf16.mxu0 0
        %1240 = vmatpush1.bf16.msra.mxu0 0
        %1241 = vmatprep.subr.bf16.mxu0 0
        %1242 = vmatpush1.bf16.msra.mxu0 0
        %1243 = vmatprep.subr.bf16.mxu0 0
        %1244 = vmatpush1.bf16.msra.mxu0 0
        %1245 = vmatprep.subr.bf16.mxu0 0
        %1246 = vmatpush1.bf16.msra.mxu0 0
        %1247 = vmatprep.subr.bf16.mxu0 0
        %1248 = vmatpush1.bf16.msra.mxu0 0
        %1249 = vmatprep.subr.bf16.mxu0 0
        %1250 = vmatpush1.bf16.msra.mxu0 0
        %1251 = vmatprep.subr.bf16.mxu0 0
        %1252 = vmatpush1.bf16.msra.mxu0 %v1235
        %1253 = vmatprep.subr.bf16.mxu0 0
        %1254 = vmatpush2.bf16.msra.mxu0 0
        %1255 = vmatprep.subr.bf16.mxu0 0
        %1256 = vmatpush2.bf16.msra.mxu0 0
        %1257 = vmatprep.subr.bf16.mxu0 0
        %1258 = vmatpush2.bf16.msra.mxu0 0
        %1259 = vmatprep.subr.bf16.mxu0 0
        %1260 = vmatpush2.bf16.msra.mxu0 0
        %1261 = vmatprep.subr.bf16.mxu0 0
        %1262 = vmatpush2.bf16.msra.mxu0 0
        %1263 = vmatprep.subr.bf16.mxu0 0
        %1264 = vmatpush2.bf16.msra.mxu0 0
        %1265 = vmatprep.subr.bf16.mxu0 0
        %1266 = vmatpush2.bf16.msra.mxu0 0
        %1267 = vmatprep.subr.bf16.mxu0 0
        %1268 = vmatpush2.bf16.msra.mxu0 0
        %1269 = vmatprep.mubr.bf16.mxu0 0
        %1270 = vmatmul.mubr.bf16.gmra.mxu0 %v1187
        %v1271 = vpop.f32.mrf.mxu0
        %v1272 = vadd.f32 0.0, %v1271
        %v1273 = vpop.f32.mrf.mxu0
        %v1274 = vpop.f32.mrf.mxu0
        %v1275 = vadd.f32 0.0, %v1274
        %v1276 = vpop.f32.mrf.mxu0
        %1277 = vmatprep.mubr.bf16.mxu0 0
        %1278 = vmatmul.mubr.bf16.gmra.mxu0 %v1190
        %v1279 = vpop.f32.mrf.mxu0
        %v1280 = vadd.f32 0.0, %v1279
        %v1281 = vpop.f32.mrf.mxu0
        %v1282 = vpop.f32.mrf.mxu0
        %v1283 = vadd.f32 0.0, %v1282
        %v1284 = vpop.f32.mrf.mxu0
        %1285 = vmatprep.mubr.bf16.mxu0 0
        %1286 = vmatmul.mubr.bf16.gmra.mxu0 %v1193
        %v1287 = vpop.f32.mrf.mxu0
        %v1288 = vadd.f32 0.0, %v1287
        %v1289 = vpop.f32.mrf.mxu0
        %v1290 = vpop.f32.mrf.mxu0
        %v1291 = vadd.f32 0.0, %v1290
        %v1292 = vpop.f32.mrf.mxu0
        %1293 = vmatprep.mubr.bf16.mxu0 0
        %1294 = vmatmul.mubr.bf16.gmra.mxu0 %v1196
        %v1295 = vpop.f32.mrf.mxu0
        %v1296 = vadd.f32 0.0, %v1295
        %v1297 = vpop.f32.mrf.mxu0
        %v1298 = vpop.f32.mrf.mxu0
        %v1299 = vadd.f32 0.0, %v1298
        %v1300 = vpop.f32.mrf.mxu0
        %1301 = vmatprep.mubr.bf16.mxu0 0
        %1302 = vmatmul.mubr.bf16.gmra.mxu0 %v1199
        %v1303 = vpop.f32.mrf.mxu0
        %v1304 = vadd.f32 0.0, %v1303
        %v1305 = vpop.f32.mrf.mxu0
        %v1306 = vpop.f32.mrf.mxu0
        %v1307 = vadd.f32 0.0, %v1306
        %v1308 = vpop.f32.mrf.mxu0
        %1309 = vmatprep.mubr.bf16.mxu0 0
        %1310 = vmatmul.mubr.bf16.gmra.mxu0 %v1202
        %v1311 = vpop.f32.mrf.mxu0
        %v1312 = vadd.f32 0.0, %v1311
        %v1313 = vpop.f32.mrf.mxu0
        %v1314 = vpop.f32.mrf.mxu0
        %v1315 = vadd.f32 0.0, %v1314
        %v1316 = vpop.f32.mrf.mxu0
        %1317 = vmatprep.mubr.bf16.mxu0 0
        %1318 = vmatmul.mubr.bf16.gmra.mxu0 %v1205
        %v1319 = vpop.f32.mrf.mxu0
        %v1320 = vadd.f32 0.0, %v1319
        %v1321 = vpop.f32.mrf.mxu0
        %v1322 = vpop.f32.mrf.mxu0
        %v1323 = vadd.f32 0.0, %v1322
        %v1324 = vpop.f32.mrf.mxu0
        %1325 = vmatprep.mubr.bf16.mxu0 0
        %1326 = vmatmul.mubr.bf16.gmra.mxu0 %v1208
        %v1327 = vpop.f32.mrf.mxu0
        %v1328 = vadd.f32 0.0, %v1327
        %v1329 = vpop.f32.mrf.mxu0
        %v1330 = vpop.f32.mrf.mxu0
        %v1331 = vadd.f32 0.0, %v1330
        %v1332 = vpop.f32.mrf.mxu0
        %1333 = vmatprep.mubr.bf16.mxu0 0
        %1334 = vmatmul.mubr.bf16.gmra.mxu0 %v1211
        %v1335 = vpop.f32.mrf.mxu0
        %v1336 = vadd.f32 0.0, %v1335
        %v1337 = vpop.f32.mrf.mxu0
        %v1338 = vpop.f32.mrf.mxu0
        %v1339 = vadd.f32 0.0, %v1338
        %v1340 = vpop.f32.mrf.mxu0
        %1341 = vmatprep.mubr.bf16.mxu0 0
        %1342 = vmatmul.mubr.bf16.gmra.mxu0 %v1214
        %v1343 = vpop.f32.mrf.mxu0
        %v1344 = vadd.f32 0.0, %v1343
        %v1345 = vpop.f32.mrf.mxu0
        %v1346 = vpop.f32.mrf.mxu0
        %v1347 = vadd.f32 0.0, %v1346
        %v1348 = vpop.f32.mrf.mxu0
        %1349 = vmatprep.mubr.bf16.mxu0 0
        %1350 = vmatmul.mubr.bf16.gmra.mxu0 %v1217
        %v1351 = vpop.f32.mrf.mxu0
        %v1352 = vadd.f32 0.0, %v1351
        %v1353 = vpop.f32.mrf.mxu0
        %v1354 = vpop.f32.mrf.mxu0
        %v1355 = vadd.f32 0.0, %v1354
        %v1356 = vpop.f32.mrf.mxu0
        %1357 = vmatprep.mubr.bf16.mxu0 0
        %1358 = vmatmul.mubr.bf16.gmra.mxu0 %v1220
        %v1359 = vpop.f32.mrf.mxu0
        %v1360 = vadd.f32 0.0, %v1359
        %v1361 = vpop.f32.mrf.mxu0
        %v1362 = vpop.f32.mrf.mxu0
        %v1363 = vadd.f32 0.0, %v1362
        %v1364 = vpop.f32.mrf.mxu0
        %1365 = vmatprep.mubr.bf16.mxu0 0
        %1366 = vmatmul.mubr.bf16.gmra.mxu0 %v1223
        %v1367 = vpop.f32.mrf.mxu0
        %v1368 = vadd.f32 0.0, %v1367
        %v1369 = vpop.f32.mrf.mxu0
        %v1370 = vpop.f32.mrf.mxu0
        %v1371 = vadd.f32 0.0, %v1370
        %v1372 = vpop.f32.mrf.mxu0
        %1373 = vmatprep.mubr.bf16.mxu0 0
        %1374 = vmatmul.mubr.bf16.gmra.mxu0 %v1226
        %v1375 = vpop.f32.mrf.mxu0
        %v1376 = vadd.f32 0.0, %v1375
        %v1377 = vpop.f32.mrf.mxu0
        %v1378 = vpop.f32.mrf.mxu0
        %v1379 = vadd.f32 0.0, %v1378
        %v1380 = vpop.f32.mrf.mxu0
        %1381 = vmatprep.mubr.bf16.mxu0 0
        %1382 = vmatmul.mubr.bf16.gmra.mxu0 %v1229
        %v1383 = vpop.f32.mrf.mxu0
        %v1384 = vadd.f32 0.0, %v1383
        %v1385 = vpop.f32.mrf.mxu0
        %v1386 = vpop.f32.mrf.mxu0
        %v1387 = vadd.f32 0.0, %v1386
        %v1388 = vpop.f32.mrf.mxu0
        %1389 = vmatprep.mubr.bf16.mxu0 0
        %1390 = vmatmul.mubr.bf16.gmra.mxu0 %v1232
        %v1391 = vpop.f32.mrf.mxu0
        %v1392 = vadd.f32 0.0, %v1391
        %v1393 = vpop.f32.mrf.mxu0
        %v1394 = vpop.f32.mrf.mxu0
        %v1395 = vadd.f32 0.0, %v1394
        %v1396 = vpop.f32.mrf.mxu0
        %1397 = vdwg.mxu0
        %v1398 = vadd.f32 %v1104, %v1272
        %v1399 = vadd.f32 %v1105, %v1275
        %v1400 = vadd.f32 %v1106, %v1280
        %v1401 = vadd.f32 %v1107, %v1283
        %v1402 = vadd.f32 %v1108, %v1288
        %v1403 = vadd.f32 %v1109, %v1291
        %v1404 = vadd.f32 %v1110, %v1296
        %v1405 = vadd.f32 %v1111, %v1299
        %v1406 = vadd.f32 %v1112, %v1304
        %v1407 = vadd.f32 %v1113, %v1307
        %v1408 = vadd.f32 %v1114, %v1312
        %v1409 = vadd.f32 %v1115, %v1315
        %v1410 = vadd.f32 %v1116, %v1320
        %v1411 = vadd.f32 %v1117, %v1323
        %v1412 = vadd.f32 %v1118, %v1328
        %v1413 = vadd.f32 %v1119, %v1331
        %v1414 = vadd.f32 %v1120, %v1336
        %v1415 = vadd.f32 %v1121, %v1339
        %v1416 = vadd.f32 %v1122, %v1344
        %v1417 = vadd.f32 %v1123, %v1347
        %v1418 = vadd.f32 %v1124, %v1352
        %v1419 = vadd.f32 %v1125, %v1355
        %v1420 = vadd.f32 %v1126, %v1360
        %v1421 = vadd.f32 %v1127, %v1363
        %v1422 = vadd.f32 %v1128, %v1368
        %v1423 = vadd.f32 %v1129, %v1371
        %v1424 = vadd.f32 %v1130, %v1376
        %v1425 = vadd.f32 %v1131, %v1379
        %v1426 = vadd.f32 %v1132, %v1384
        %v1427 = vadd.f32 %v1133, %v1387
        %v1428 = vadd.f32 %v1134, %v1392
        %v1429 = vadd.f32 %v1135, %v1395
        %1430 = vst [vmem:[#allocation2] sm:$0xff] %v1398
        %1431 = vst [vmem:[#allocation2 + $0x8] sm:$0xff] %v1399
        %1432 = vst [vmem:[#allocation2 + $0x10] sm:$0xff] %v1400
        %1433 = vst [vmem:[#allocation2 + $0x18] sm:$0xff] %v1401
        %1434 = vst [vmem:[#allocation2 + $0x20] sm:$0xff] %v1402
        %1435 = vst [vmem:[#allocation2 + $0x28] sm:$0xff] %v1403
        %1436 = vst [vmem:[#allocation2 + $0x30] sm:$0xff] %v1404
        %1437 = vst [vmem:[#allocation2 + $0x38] sm:$0xff] %v1405
        %1438 = vst [vmem:[#allocation2 + $0x40] sm:$0xff] %v1406
        %1439 = vst [vmem:[#allocation2 + $0x48] sm:$0xff] %v1407
        %1440 = vst [vmem:[#allocation2 + $0x50] sm:$0xff] %v1408
        %1441 = vst [vmem:[#allocation2 + $0x58] sm:$0xff] %v1409
        %1442 = vst [vmem:[#allocation2 + $0x60] sm:$0xff] %v1410
        %1443 = vst [vmem:[#allocation2 + $0x68] sm:$0xff] %v1411
        %1444 = vst [vmem:[#allocation2 + $0x70] sm:$0xff] %v1412
        %1445 = vst [vmem:[#allocation2 + $0x78] sm:$0xff] %v1413
        %1446 = vst [vmem:[#allocation2 + $0x80] sm:$0xff] %v1414
        %1447 = vst [vmem:[#allocation2 + $0x88] sm:$0xff] %v1415
        %1448 = vst [vmem:[#allocation2 + $0x90] sm:$0xff] %v1416
        %1449 = vst [vmem:[#allocation2 + $0x98] sm:$0xff] %v1417
        %1450 = vst [vmem:[#allocation2 + $0xa0] sm:$0xff] %v1418
        %1451 = vst [vmem:[#allocation2 + $0xa8] sm:$0xff] %v1419
        %1452 = vst [vmem:[#allocation2 + $0xb0] sm:$0xff] %v1420
        %1453 = vst [vmem:[#allocation2 + $0xb8] sm:$0xff] %v1421
        %1454 = vst [vmem:[#allocation2 + $0xc0] sm:$0xff] %v1422
        %1455 = vst [vmem:[#allocation2 + $0xc8] sm:$0xff] %v1423
        %1456 = vst [vmem:[#allocation2 + $0xd0] sm:$0xff] %v1424
        %1457 = vst [vmem:[#allocation2 + $0xd8] sm:$0xff] %v1425
        %1458 = vst [vmem:[#allocation2 + $0xe0] sm:$0xff] %v1426
        %1459 = vst [vmem:[#allocation2 + $0xe8] sm:$0xff] %v1427
        %1460 = vst [vmem:[#allocation2 + $0xf0] sm:$0xff] %v1428
        %1461 = vst [vmem:[#allocation2 + $0xf8] sm:$0xff] %v1429
        %v1462 = vld [vmem:[%s208] sm:$0xe]
        %v1463 = vld [vmem:[%s208 + $0x4] sm:$0xf]
        %v1464 = vld [vmem:[%s208 + $0x8] sm:$0x1]
        %v1465 = vld [vmem:[%s208 + $0xc] sm:$0xe]
        %v1466 = vld [vmem:[%s208 + $0x10] sm:$0xf]
        %v1467 = vld [vmem:[%s208 + $0x14] sm:$0x1]
        %v1468 = vld [vmem:[%s208 + $0x18] sm:$0xe]
        %v1469 = vld [vmem:[%s208 + $0x1c] sm:$0xf]
        %v1470 = vld [vmem:[%s208 + $0x20] sm:$0x1]
        %v1471 = vld [vmem:[%s208 + $0x24] sm:$0xe]
        %v1472 = vld [vmem:[%s208 + $0x28] sm:$0xf]
        %v1473 = vld [vmem:[%s208 + $0x2c] sm:$0x1]
        %v1474 = vld [vmem:[%s208 + $0x30] sm:$0xe]
        %v1475 = vld [vmem:[%s208 + $0x34] sm:$0xf]
        %v1476 = vld [vmem:[%s208 + $0x38] sm:$0x1]
        %v1477 = vld [vmem:[%s208 + $0x3c] sm:$0xe]
        %v1478 = vld [vmem:[%s208 + $0x40] sm:$0xf]
        %v1479 = vld [vmem:[%s208 + $0x44] sm:$0x1]
        %v1480 = vld [vmem:[%s208 + $0x48] sm:$0xe]
        %v1481 = vld [vmem:[%s208 + $0x4c] sm:$0xf]
        %v1482 = vld [vmem:[%s208 + $0x50] sm:$0x1]
        %v1483 = vld [vmem:[%s208 + $0x54] sm:$0xe]
        %v1484 = vld [vmem:[%s208 + $0x58] sm:$0xf]
        %v1485 = vld [vmem:[%s208 + $0x5c] sm:$0x1]
        %v1486 = vld [vmem:[%s208 + $0x60] sm:$0xe]
        %v1487 = vld [vmem:[%s208 + $0x64] sm:$0xf]
        %v1488 = vld [vmem:[%s208 + $0x68] sm:$0x1]
        %v1489 = vld [vmem:[%s208 + $0x6c] sm:$0xe]
        %v1490 = vld [vmem:[%s208 + $0x70] sm:$0xf]
        %v1491 = vld [vmem:[%s208 + $0x74] sm:$0x1]
        %v1492 = vld [vmem:[%s208 + $0x78] sm:$0xe]
        %v1493 = vld [vmem:[%s208 + $0x7c] sm:$0xf]
        %v1494 = vld [vmem:[%s208 + $0x80] sm:$0x1]
        %v1495 = vld [vmem:[%s208 + $0x84] sm:$0xe]
        %v1496 = vld [vmem:[%s208 + $0x88] sm:$0xf]
        %v1497 = vld [vmem:[%s208 + $0x8c] sm:$0x1]
        %v1498 = vld [vmem:[%s208 + $0x90] sm:$0xe]
        %v1499 = vld [vmem:[%s208 + $0x94] sm:$0xf]
        %v1500 = vld [vmem:[%s208 + $0x98] sm:$0x1]
        %v1501 = vld [vmem:[%s208 + $0x9c] sm:$0xe]
        %v1502 = vld [vmem:[%s208 + $0xa0] sm:$0xf]
        %v1503 = vld [vmem:[%s208 + $0xa4] sm:$0x1]
        %v1504 = vld [vmem:[%s208 + $0xa8] sm:$0xe]
        %v1505 = vld [vmem:[%s208 + $0xac] sm:$0xf]
        %v1506 = vld [vmem:[%s208 + $0xb0] sm:$0x1]
        %v1507 = vld [vmem:[%s208 + $0xb4] sm:$0xe]
        %v1508 = vld [vmem:[%s208 + $0xb8] sm:$0xf]
        %v1509 = vld [vmem:[%s208 + $0xbc] sm:$0x1]
        %vm1558 = vcmask 1042432
        %vm1559 = vcmask 1046532
        %vm1560 = vmor %vm1558, %vm1559
        %v1561 = vrot.slane %v1462, 5
        %v1562 = vrot.slane %v1561, 4
        %v1563 = vrot.slane %v1463, 5
        %v1564 = vsel %vm1560, %v1562, %v1563
        %v1565 = vrot.slane %v1563, 4
        %v1566 = vrot.slane %v1464, 5
        %v1567 = vsel %vm1560, %v1565, %v1566
        %v1568 = vrot.slane %v1465, 5
        %v1569 = vrot.slane %v1568, 4
        %v1570 = vrot.slane %v1466, 5
        %v1571 = vsel %vm1560, %v1569, %v1570
        %v1572 = vrot.slane %v1570, 4
        %v1573 = vrot.slane %v1467, 5
        %v1574 = vsel %vm1560, %v1572, %v1573
        %v1575 = vrot.slane %v1468, 5
        %v1576 = vrot.slane %v1575, 4
        %v1577 = vrot.slane %v1469, 5
        %v1578 = vsel %vm1560, %v1576, %v1577
        %v1579 = vrot.slane %v1577, 4
        %v1580 = vrot.slane %v1470, 5
        %v1581 = vsel %vm1560, %v1579, %v1580
        %v1582 = vrot.slane %v1471, 5
        %v1583 = vrot.slane %v1582, 4
        %v1584 = vrot.slane %v1472, 5
        %v1585 = vsel %vm1560, %v1583, %v1584
        %v1586 = vrot.slane %v1584, 4
        %v1587 = vrot.slane %v1473, 5
        %v1588 = vsel %vm1560, %v1586, %v1587
        %v1589 = vrot.slane %v1474, 5
        %v1590 = vrot.slane %v1589, 4
        %v1591 = vrot.slane %v1475, 5
        %v1592 = vsel %vm1560, %v1590, %v1591
        %v1593 = vrot.slane %v1591, 4
        %v1594 = vrot.slane %v1476, 5
        %v1595 = vsel %vm1560, %v1593, %v1594
        %v1596 = vrot.slane %v1477, 5
        %v1597 = vrot.slane %v1596, 4
        %v1598 = vrot.slane %v1478, 5
        %v1599 = vsel %vm1560, %v1597, %v1598
        %v1600 = vrot.slane %v1598, 4
        %v1601 = vrot.slane %v1479, 5
        %v1602 = vsel %vm1560, %v1600, %v1601
        %v1603 = vrot.slane %v1480, 5
        %v1604 = vrot.slane %v1603, 4
        %v1605 = vrot.slane %v1481, 5
        %v1606 = vsel %vm1560, %v1604, %v1605
        %v1607 = vrot.slane %v1605, 4
        %v1608 = vrot.slane %v1482, 5
        %v1609 = vsel %vm1560, %v1607, %v1608
        %v1610 = vrot.slane %v1483, 5
        %v1611 = vrot.slane %v1610, 4
        %v1612 = vrot.slane %v1484, 5
        %v1613 = vsel %vm1560, %v1611, %v1612
        %v1614 = vrot.slane %v1612, 4
        %v1615 = vrot.slane %v1485, 5
        %v1616 = vsel %vm1560, %v1614, %v1615
        %v1617 = vrot.slane %v1486, 5
        %v1618 = vrot.slane %v1617, 4
        %v1619 = vrot.slane %v1487, 5
        %v1620 = vsel %vm1560, %v1618, %v1619
        %v1621 = vrot.slane %v1619, 4
        %v1622 = vrot.slane %v1488, 5
        %v1623 = vsel %vm1560, %v1621, %v1622
        %v1624 = vrot.slane %v1489, 5
        %v1625 = vrot.slane %v1624, 4
        %v1626 = vrot.slane %v1490, 5
        %v1627 = vsel %vm1560, %v1625, %v1626
        %v1628 = vrot.slane %v1626, 4
        %v1629 = vrot.slane %v1491, 5
        %v1630 = vsel %vm1560, %v1628, %v1629
        %v1631 = vrot.slane %v1492, 5
        %v1632 = vrot.slane %v1631, 4
        %v1633 = vrot.slane %v1493, 5
        %v1634 = vsel %vm1560, %v1632, %v1633
        %v1635 = vrot.slane %v1633, 4
        %v1636 = vrot.slane %v1494, 5
        %v1637 = vsel %vm1560, %v1635, %v1636
        %v1638 = vrot.slane %v1495, 5
        %v1639 = vrot.slane %v1638, 4
        %v1640 = vrot.slane %v1496, 5
        %v1641 = vsel %vm1560, %v1639, %v1640
        %v1642 = vrot.slane %v1640, 4
        %v1643 = vrot.slane %v1497, 5
        %v1644 = vsel %vm1560, %v1642, %v1643
        %v1645 = vrot.slane %v1498, 5
        %v1646 = vrot.slane %v1645, 4
        %v1647 = vrot.slane %v1499, 5
        %v1648 = vsel %vm1560, %v1646, %v1647
        %v1649 = vrot.slane %v1647, 4
        %v1650 = vrot.slane %v1500, 5
        %v1651 = vsel %vm1560, %v1649, %v1650
        %v1652 = vrot.slane %v1501, 5
        %v1653 = vrot.slane %v1652, 4
        %v1654 = vrot.slane %v1502, 5
        %v1655 = vsel %vm1560, %v1653, %v1654
        %v1656 = vrot.slane %v1654, 4
        %v1657 = vrot.slane %v1503, 5
        %v1658 = vsel %vm1560, %v1656, %v1657
        %v1659 = vrot.slane %v1504, 5
        %v1660 = vrot.slane %v1659, 4
        %v1661 = vrot.slane %v1505, 5
        %v1662 = vsel %vm1560, %v1660, %v1661
        %v1663 = vrot.slane %v1661, 4
        %v1664 = vrot.slane %v1506, 5
        %v1665 = vsel %vm1560, %v1663, %v1664
        %v1666 = vrot.slane %v1507, 5
        %v1667 = vrot.slane %v1666, 4
        %v1668 = vrot.slane %v1508, 5
        %v1669 = vsel %vm1560, %v1667, %v1668
        %v1670 = vrot.slane %v1668, 4
        %v1671 = vrot.slane %v1509, 5
        %v1672 = vsel %vm1560, %v1670, %v1671
        %v1673 = vld [vmem:[#allocation2] sm:$0xff]
        %v1674 = vld [vmem:[#allocation2 + $0x8] sm:$0xff]
        %v1675 = vld [vmem:[#allocation2 + $0x10] sm:$0xff]
        %v1676 = vld [vmem:[#allocation2 + $0x18] sm:$0xff]
        %v1677 = vld [vmem:[#allocation2 + $0x20] sm:$0xff]
        %v1678 = vld [vmem:[#allocation2 + $0x28] sm:$0xff]
        %v1679 = vld [vmem:[#allocation2 + $0x30] sm:$0xff]
        %v1680 = vld [vmem:[#allocation2 + $0x38] sm:$0xff]
        %v1681 = vld [vmem:[#allocation2 + $0x40] sm:$0xff]
        %v1682 = vld [vmem:[#allocation2 + $0x48] sm:$0xff]
        %v1683 = vld [vmem:[#allocation2 + $0x50] sm:$0xff]
        %v1684 = vld [vmem:[#allocation2 + $0x58] sm:$0xff]
        %v1685 = vld [vmem:[#allocation2 + $0x60] sm:$0xff]
        %v1686 = vld [vmem:[#allocation2 + $0x68] sm:$0xff]
        %v1687 = vld [vmem:[#allocation2 + $0x70] sm:$0xff]
        %v1688 = vld [vmem:[#allocation2 + $0x78] sm:$0xff]
        %v1689 = vld [vmem:[#allocation2 + $0x80] sm:$0xff]
        %v1690 = vld [vmem:[#allocation2 + $0x88] sm:$0xff]
        %v1691 = vld [vmem:[#allocation2 + $0x90] sm:$0xff]
        %v1692 = vld [vmem:[#allocation2 + $0x98] sm:$0xff]
        %v1693 = vld [vmem:[#allocation2 + $0xa0] sm:$0xff]
        %v1694 = vld [vmem:[#allocation2 + $0xa8] sm:$0xff]
        %v1695 = vld [vmem:[#allocation2 + $0xb0] sm:$0xff]
        %v1696 = vld [vmem:[#allocation2 + $0xb8] sm:$0xff]
        %v1697 = vld [vmem:[#allocation2 + $0xc0] sm:$0xff]
        %v1698 = vld [vmem:[#allocation2 + $0xc8] sm:$0xff]
        %v1699 = vld [vmem:[#allocation2 + $0xd0] sm:$0xff]
        %v1700 = vld [vmem:[#allocation2 + $0xd8] sm:$0xff]
        %v1701 = vld [vmem:[#allocation2 + $0xe0] sm:$0xff]
        %v1702 = vld [vmem:[#allocation2 + $0xe8] sm:$0xff]
        %v1703 = vld [vmem:[#allocation2 + $0xf0] sm:$0xff]
        %v1704 = vld [vmem:[#allocation2 + $0xf8] sm:$0xff]
        %s1705 = scalar_lea.vmem %s212, 4
        %v1706 = vld [vmem:[%s1705] sm:$0x3]
        %v1707 = vunpack.c.l.b16 %v1564
        %v1708 = vunpack.c.l.b16 %v1567
        %v1709 = vunpack.c.l.b16 %v1571
        %v1710 = vunpack.c.l.b16 %v1574
        %v1711 = vunpack.c.l.b16 %v1578
        %v1712 = vunpack.c.l.b16 %v1581
        %v1713 = vunpack.c.l.b16 %v1585
        %v1714 = vunpack.c.l.b16 %v1588
        %v1715 = vunpack.c.l.b16 %v1592
        %v1716 = vunpack.c.l.b16 %v1595
        %v1717 = vunpack.c.l.b16 %v1599
        %v1718 = vunpack.c.l.b16 %v1602
        %v1719 = vunpack.c.l.b16 %v1606
        %v1720 = vunpack.c.l.b16 %v1609
        %v1721 = vunpack.c.l.b16 %v1613
        %v1722 = vunpack.c.l.b16 %v1616
        %v1723 = vunpack.c.l.b16 %v1620
        %v1724 = vunpack.c.l.b16 %v1623
        %v1725 = vunpack.c.l.b16 %v1627
        %v1726 = vunpack.c.l.b16 %v1630
        %v1727 = vunpack.c.l.b16 %v1634
        %v1728 = vunpack.c.l.b16 %v1637
        %v1729 = vunpack.c.l.b16 %v1641
        %v1730 = vunpack.c.l.b16 %v1644
        %v1731 = vunpack.c.l.b16 %v1648
        %v1732 = vunpack.c.l.b16 %v1651
        %v1733 = vunpack.c.l.b16 %v1655
        %v1734 = vunpack.c.l.b16 %v1658
        %v1735 = vunpack.c.l.b16 %v1662
        %v1736 = vunpack.c.l.b16 %v1665
        %v1737 = vunpack.c.l.b16 %v1669
        %v1738 = vunpack.c.l.b16 %v1672
        %v1739 = vpack.c.b16 %v1708, %v1707
        %v1740 = vpack.c.b16 %v1710, %v1709
        %v1741 = vpack.c.b16 %v1712, %v1711
        %v1742 = vpack.c.b16 %v1714, %v1713
        %v1743 = vpack.c.b16 %v1716, %v1715
        %v1744 = vpack.c.b16 %v1718, %v1717
        %v1745 = vpack.c.b16 %v1720, %v1719
        %v1746 = vpack.c.b16 %v1722, %v1721
        %v1747 = vpack.c.b16 %v1724, %v1723
        %v1748 = vpack.c.b16 %v1726, %v1725
        %v1749 = vpack.c.b16 %v1728, %v1727
        %v1750 = vpack.c.b16 %v1730, %v1729
        %v1751 = vpack.c.b16 %v1732, %v1731
        %v1752 = vpack.c.b16 %v1734, %v1733
        %v1753 = vpack.c.b16 %v1736, %v1735
        %v1754 = vpack.c.b16 %v1738, %v1737
        %v1756 = vsel %vm391, %v1739, 0
        %v1759 = vsel %vm391, %v1740, 0
        %v1762 = vsel %vm391, %v1741, 0
        %v1765 = vsel %vm391, %v1742, 0
        %v1768 = vsel %vm391, %v1743, 0
        %v1771 = vsel %vm391, %v1744, 0
        %v1774 = vsel %vm391, %v1745, 0
        %v1777 = vsel %vm391, %v1746, 0
        %v1780 = vsel %vm391, %v1747, 0
        %v1783 = vsel %vm391, %v1748, 0
        %v1786 = vsel %vm391, %v1749, 0
        %v1789 = vsel %vm391, %v1750, 0
        %v1792 = vsel %vm391, %v1751, 0
        %v1795 = vsel %vm391, %v1752, 0
        %v1798 = vsel %vm391, %v1753, 0
        %v1801 = vsel %vm391, %v1754, 0
        %v1804 = vsel %vm440, %v1706, 0
        %1806 = vmatprep.subr.bf16.mxu0 0
        %1807 = vmatpush1.bf16.msra.mxu0 0
        %1808 = vmatprep.subr.bf16.mxu0 0
        %1809 = vmatpush1.bf16.msra.mxu0 0
        %1810 = vmatprep.subr.bf16.mxu0 0
        %1811 = vmatpush1.bf16.msra.mxu0 0
        %1812 = vmatprep.subr.bf16.mxu0 0
        %1813 = vmatpush1.bf16.msra.mxu0 0
        %1814 = vmatprep.subr.bf16.mxu0 0
        %1815 = vmatpush1.bf16.msra.mxu0 0
        %1816 = vmatprep.subr.bf16.mxu0 0
        %1817 = vmatpush1.bf16.msra.mxu0 0
        %1818 = vmatprep.subr.bf16.mxu0 0
        %1819 = vmatpush1.bf16.msra.mxu0 0
        %1820 = vmatprep.subr.bf16.mxu0 0
        %1821 = vmatpush1.bf16.msra.mxu0 %v1804
        %1822 = vmatprep.subr.bf16.mxu0 0
        %1823 = vmatpush2.bf16.msra.mxu0 0
        %1824 = vmatprep.subr.bf16.mxu0 0
        %1825 = vmatpush2.bf16.msra.mxu0 0
        %1826 = vmatprep.subr.bf16.mxu0 0
        %1827 = vmatpush2.bf16.msra.mxu0 0
        %1828 = vmatprep.subr.bf16.mxu0 0
        %1829 = vmatpush2.bf16.msra.mxu0 0
        %1830 = vmatprep.subr.bf16.mxu0 0
        %1831 = vmatpush2.bf16.msra.mxu0 0
        %1832 = vmatprep.subr.bf16.mxu0 0
        %1833 = vmatpush2.bf16.msra.mxu0 0
        %1834 = vmatprep.subr.bf16.mxu0 0
        %1835 = vmatpush2.bf16.msra.mxu0 0
        %1836 = vmatprep.subr.bf16.mxu0 0
        %1837 = vmatpush2.bf16.msra.mxu0 0
        %1838 = vmatprep.mubr.bf16.mxu0 0
        %1839 = vmatmul.mubr.bf16.gmra.mxu0 %v1756
        %v1840 = vpop.f32.mrf.mxu0
        %v1841 = vadd.f32 0.0, %v1840
        %v1842 = vpop.f32.mrf.mxu0
        %v1843 = vpop.f32.mrf.mxu0
        %v1844 = vadd.f32 0.0, %v1843
        %v1845 = vpop.f32.mrf.mxu0
        %1846 = vmatprep.mubr.bf16.mxu0 0
        %1847 = vmatmul.mubr.bf16.gmra.mxu0 %v1759
        %v1848 = vpop.f32.mrf.mxu0
        %v1849 = vadd.f32 0.0, %v1848
        %v1850 = vpop.f32.mrf.mxu0
        %v1851 = vpop.f32.mrf.mxu0
        %v1852 = vadd.f32 0.0, %v1851
        %v1853 = vpop.f32.mrf.mxu0
        %1854 = vmatprep.mubr.bf16.mxu0 0
        %1855 = vmatmul.mubr.bf16.gmra.mxu0 %v1762
        %v1856 = vpop.f32.mrf.mxu0
        %v1857 = vadd.f32 0.0, %v1856
        %v1858 = vpop.f32.mrf.mxu0
        %v1859 = vpop.f32.mrf.mxu0
        %v1860 = vadd.f32 0.0, %v1859
        %v1861 = vpop.f32.mrf.mxu0
        %1862 = vmatprep.mubr.bf16.mxu0 0
        %1863 = vmatmul.mubr.bf16.gmra.mxu0 %v1765
        %v1864 = vpop.f32.mrf.mxu0
        %v1865 = vadd.f32 0.0, %v1864
        %v1866 = vpop.f32.mrf.mxu0
        %v1867 = vpop.f32.mrf.mxu0
        %v1868 = vadd.f32 0.0, %v1867
        %v1869 = vpop.f32.mrf.mxu0
        %1870 = vmatprep.mubr.bf16.mxu0 0
        %1871 = vmatmul.mubr.bf16.gmra.mxu0 %v1768
        %v1872 = vpop.f32.mrf.mxu0
        %v1873 = vadd.f32 0.0, %v1872
        %v1874 = vpop.f32.mrf.mxu0
        %v1875 = vpop.f32.mrf.mxu0
        %v1876 = vadd.f32 0.0, %v1875
        %v1877 = vpop.f32.mrf.mxu0
        %1878 = vmatprep.mubr.bf16.mxu0 0
        %1879 = vmatmul.mubr.bf16.gmra.mxu0 %v1771
        %v1880 = vpop.f32.mrf.mxu0
        %v1881 = vadd.f32 0.0, %v1880
        %v1882 = vpop.f32.mrf.mxu0
        %v1883 = vpop.f32.mrf.mxu0
        %v1884 = vadd.f32 0.0, %v1883
        %v1885 = vpop.f32.mrf.mxu0
        %1886 = vmatprep.mubr.bf16.mxu0 0
        %1887 = vmatmul.mubr.bf16.gmra.mxu0 %v1774
        %v1888 = vpop.f32.mrf.mxu0
        %v1889 = vadd.f32 0.0, %v1888
        %v1890 = vpop.f32.mrf.mxu0
        %v1891 = vpop.f32.mrf.mxu0
        %v1892 = vadd.f32 0.0, %v1891
        %v1893 = vpop.f32.mrf.mxu0
        %1894 = vmatprep.mubr.bf16.mxu0 0
        %1895 = vmatmul.mubr.bf16.gmra.mxu0 %v1777
        %v1896 = vpop.f32.mrf.mxu0
        %v1897 = vadd.f32 0.0, %v1896
        %v1898 = vpop.f32.mrf.mxu0
        %v1899 = vpop.f32.mrf.mxu0
        %v1900 = vadd.f32 0.0, %v1899
        %v1901 = vpop.f32.mrf.mxu0
        %1902 = vmatprep.mubr.bf16.mxu0 0
        %1903 = vmatmul.mubr.bf16.gmra.mxu0 %v1780
        %v1904 = vpop.f32.mrf.mxu0
        %v1905 = vadd.f32 0.0, %v1904
        %v1906 = vpop.f32.mrf.mxu0
        %v1907 = vpop.f32.mrf.mxu0
        %v1908 = vadd.f32 0.0, %v1907
        %v1909 = vpop.f32.mrf.mxu0
        %1910 = vmatprep.mubr.bf16.mxu0 0
        %1911 = vmatmul.mubr.bf16.gmra.mxu0 %v1783
        %v1912 = vpop.f32.mrf.mxu0
        %v1913 = vadd.f32 0.0, %v1912
        %v1914 = vpop.f32.mrf.mxu0
        %v1915 = vpop.f32.mrf.mxu0
        %v1916 = vadd.f32 0.0, %v1915
        %v1917 = vpop.f32.mrf.mxu0
        %1918 = vmatprep.mubr.bf16.mxu0 0
        %1919 = vmatmul.mubr.bf16.gmra.mxu0 %v1786
        %v1920 = vpop.f32.mrf.mxu0
        %v1921 = vadd.f32 0.0, %v1920
        %v1922 = vpop.f32.mrf.mxu0
        %v1923 = vpop.f32.mrf.mxu0
        %v1924 = vadd.f32 0.0, %v1923
        %v1925 = vpop.f32.mrf.mxu0
        %1926 = vmatprep.mubr.bf16.mxu0 0
        %1927 = vmatmul.mubr.bf16.gmra.mxu0 %v1789
        %v1928 = vpop.f32.mrf.mxu0
        %v1929 = vadd.f32 0.0, %v1928
        %v1930 = vpop.f32.mrf.mxu0
        %v1931 = vpop.f32.mrf.mxu0
        %v1932 = vadd.f32 0.0, %v1931
        %v1933 = vpop.f32.mrf.mxu0
        %1934 = vmatprep.mubr.bf16.mxu0 0
        %1935 = vmatmul.mubr.bf16.gmra.mxu0 %v1792
        %v1936 = vpop.f32.mrf.mxu0
        %v1937 = vadd.f32 0.0, %v1936
        %v1938 = vpop.f32.mrf.mxu0
        %v1939 = vpop.f32.mrf.mxu0
        %v1940 = vadd.f32 0.0, %v1939
        %v1941 = vpop.f32.mrf.mxu0
        %1942 = vmatprep.mubr.bf16.mxu0 0
        %1943 = vmatmul.mubr.bf16.gmra.mxu0 %v1795
        %v1944 = vpop.f32.mrf.mxu0
        %v1945 = vadd.f32 0.0, %v1944
        %v1946 = vpop.f32.mrf.mxu0
        %v1947 = vpop.f32.mrf.mxu0
        %v1948 = vadd.f32 0.0, %v1947
        %v1949 = vpop.f32.mrf.mxu0
        %1950 = vmatprep.mubr.bf16.mxu0 0
        %1951 = vmatmul.mubr.bf16.gmra.mxu0 %v1798
        %v1952 = vpop.f32.mrf.mxu0
        %v1953 = vadd.f32 0.0, %v1952
        %v1954 = vpop.f32.mrf.mxu0
        %v1955 = vpop.f32.mrf.mxu0
        %v1956 = vadd.f32 0.0, %v1955
        %v1957 = vpop.f32.mrf.mxu0
        %1958 = vmatprep.mubr.bf16.mxu0 0
        %1959 = vmatmul.mubr.bf16.gmra.mxu0 %v1801
        %v1960 = vpop.f32.mrf.mxu0
        %v1961 = vadd.f32 0.0, %v1960
        %v1962 = vpop.f32.mrf.mxu0
        %v1963 = vpop.f32.mrf.mxu0
        %v1964 = vadd.f32 0.0, %v1963
        %v1965 = vpop.f32.mrf.mxu0
        %1966 = vdwg.mxu0
        %v1967 = vadd.f32 %v1673, %v1841
        %v1968 = vadd.f32 %v1674, %v1844
        %v1969 = vadd.f32 %v1675, %v1849
        %v1970 = vadd.f32 %v1676, %v1852
        %v1971 = vadd.f32 %v1677, %v1857
        %v1972 = vadd.f32 %v1678, %v1860
        %v1973 = vadd.f32 %v1679, %v1865
        %v1974 = vadd.f32 %v1680, %v1868
        %v1975 = vadd.f32 %v1681, %v1873
        %v1976 = vadd.f32 %v1682, %v1876
        %v1977 = vadd.f32 %v1683, %v1881
        %v1978 = vadd.f32 %v1684, %v1884
        %v1979 = vadd.f32 %v1685, %v1889
        %v1980 = vadd.f32 %v1686, %v1892
        %v1981 = vadd.f32 %v1687, %v1897
        %v1982 = vadd.f32 %v1688, %v1900
        %v1983 = vadd.f32 %v1689, %v1905
        %v1984 = vadd.f32 %v1690, %v1908
        %v1985 = vadd.f32 %v1691, %v1913
        %v1986 = vadd.f32 %v1692, %v1916
        %v1987 = vadd.f32 %v1693, %v1921
        %v1988 = vadd.f32 %v1694, %v1924
        %v1989 = vadd.f32 %v1695, %v1929
        %v1990 = vadd.f32 %v1696, %v1932
        %v1991 = vadd.f32 %v1697, %v1937
        %v1992 = vadd.f32 %v1698, %v1940
        %v1993 = vadd.f32 %v1699, %v1945
        %v1994 = vadd.f32 %v1700, %v1948
        %v1995 = vadd.f32 %v1701, %v1953
        %v1996 = vadd.f32 %v1702, %v1956
        %v1997 = vadd.f32 %v1703, %v1961
        %v1998 = vadd.f32 %v1704, %v1964
        %1999 = vst [vmem:[#allocation2] sm:$0xff] %v1967
        %2000 = vst [vmem:[#allocation2 + $0x8] sm:$0xff] %v1968
        %2001 = vst [vmem:[#allocation2 + $0x10] sm:$0xff] %v1969
        %2002 = vst [vmem:[#allocation2 + $0x18] sm:$0xff] %v1970
        %2003 = vst [vmem:[#allocation2 + $0x20] sm:$0xff] %v1971
        %2004 = vst [vmem:[#allocation2 + $0x28] sm:$0xff] %v1972
        %2005 = vst [vmem:[#allocation2 + $0x30] sm:$0xff] %v1973
        %2006 = vst [vmem:[#allocation2 + $0x38] sm:$0xff] %v1974
        %2007 = vst [vmem:[#allocation2 + $0x40] sm:$0xff] %v1975
        %2008 = vst [vmem:[#allocation2 + $0x48] sm:$0xff] %v1976
        %2009 = vst [vmem:[#allocation2 + $0x50] sm:$0xff] %v1977
        %2010 = vst [vmem:[#allocation2 + $0x58] sm:$0xff] %v1978
        %2011 = vst [vmem:[#allocation2 + $0x60] sm:$0xff] %v1979
        %2012 = vst [vmem:[#allocation2 + $0x68] sm:$0xff] %v1980
        %2013 = vst [vmem:[#allocation2 + $0x70] sm:$0xff] %v1981
        %2014 = vst [vmem:[#allocation2 + $0x78] sm:$0xff] %v1982
        %2015 = vst [vmem:[#allocation2 + $0x80] sm:$0xff] %v1983
        %2016 = vst [vmem:[#allocation2 + $0x88] sm:$0xff] %v1984
        %2017 = vst [vmem:[#allocation2 + $0x90] sm:$0xff] %v1985
        %2018 = vst [vmem:[#allocation2 + $0x98] sm:$0xff] %v1986
        %2019 = vst [vmem:[#allocation2 + $0xa0] sm:$0xff] %v1987
        %2020 = vst [vmem:[#allocation2 + $0xa8] sm:$0xff] %v1988
        %2021 = vst [vmem:[#allocation2 + $0xb0] sm:$0xff] %v1989
        %2022 = vst [vmem:[#allocation2 + $0xb8] sm:$0xff] %v1990
        %2023 = vst [vmem:[#allocation2 + $0xc0] sm:$0xff] %v1991
        %2024 = vst [vmem:[#allocation2 + $0xc8] sm:$0xff] %v1992
        %2025 = vst [vmem:[#allocation2 + $0xd0] sm:$0xff] %v1993
        %2026 = vst [vmem:[#allocation2 + $0xd8] sm:$0xff] %v1994
        %2027 = vst [vmem:[#allocation2 + $0xe0] sm:$0xff] %v1995
        %2028 = vst [vmem:[#allocation2 + $0xe8] sm:$0xff] %v1996
        %2029 = vst [vmem:[#allocation2 + $0xf0] sm:$0xff] %v1997
        %2030 = vst [vmem:[#allocation2 + $0xf8] sm:$0xff] %v1998
        %s2031 = scalar_lea.vmem %s208, 12
        %v2032 = vld [vmem:[%s2031] sm:$0xf]
        %v2033 = vld [vmem:[%s2031 + $0x4] sm:$0xf]
        %v2034 = vld [vmem:[%s2031 + $0xc] sm:$0xf]
        %v2035 = vld [vmem:[%s2031 + $0x10] sm:$0xf]
        %v2036 = vld [vmem:[%s2031 + $0x18] sm:$0xf]
        %v2037 = vld [vmem:[%s2031 + $0x1c] sm:$0xf]
        %v2038 = vld [vmem:[%s2031 + $0x24] sm:$0xf]
        %v2039 = vld [vmem:[%s2031 + $0x28] sm:$0xf]
        %v2040 = vld [vmem:[%s2031 + $0x30] sm:$0xf]
        %v2041 = vld [vmem:[%s2031 + $0x34] sm:$0xf]
        %v2042 = vld [vmem:[%s2031 + $0x3c] sm:$0xf]
        %v2043 = vld [vmem:[%s2031 + $0x40] sm:$0xf]
        %v2044 = vld [vmem:[%s2031 + $0x48] sm:$0xf]
        %v2045 = vld [vmem:[%s2031 + $0x4c] sm:$0xf]
        %v2046 = vld [vmem:[%s2031 + $0x54] sm:$0xf]
        %v2047 = vld [vmem:[%s2031 + $0x58] sm:$0xf]
        %v2048 = vld [vmem:[%s2031 + $0x60] sm:$0xf]
        %v2049 = vld [vmem:[%s2031 + $0x64] sm:$0xf]
        %v2050 = vld [vmem:[%s2031 + $0x6c] sm:$0xf]
        %v2051 = vld [vmem:[%s2031 + $0x70] sm:$0xf]
        %v2052 = vld [vmem:[%s2031 + $0x78] sm:$0xf]
        %v2053 = vld [vmem:[%s2031 + $0x7c] sm:$0xf]
        %v2054 = vld [vmem:[%s2031 + $0x84] sm:$0xf]
        %v2055 = vld [vmem:[%s2031 + $0x88] sm:$0xf]
        %v2056 = vld [vmem:[%s2031 + $0x90] sm:$0xf]
        %v2057 = vld [vmem:[%s2031 + $0x94] sm:$0xf]
        %v2058 = vld [vmem:[%s2031 + $0x9c] sm:$0xf]
        %v2059 = vld [vmem:[%s2031 + $0xa0] sm:$0xf]
        %v2060 = vld [vmem:[%s2031 + $0xa8] sm:$0xf]
        %v2061 = vld [vmem:[%s2031 + $0xac] sm:$0xf]
        %v2062 = vld [vmem:[%s2031 + $0xb4] sm:$0xf]
        %v2063 = vld [vmem:[%s2031 + $0xb8] sm:$0xf]
        %v2064 = vld [vmem:[#allocation2] sm:$0xff]
        %v2065 = vld [vmem:[#allocation2 + $0x8] sm:$0xff]
        %v2066 = vld [vmem:[#allocation2 + $0x10] sm:$0xff]
        %v2067 = vld [vmem:[#allocation2 + $0x18] sm:$0xff]
        %v2068 = vld [vmem:[#allocation2 + $0x20] sm:$0xff]
        %v2069 = vld [vmem:[#allocation2 + $0x28] sm:$0xff]
        %v2070 = vld [vmem:[#allocation2 + $0x30] sm:$0xff]
        %v2071 = vld [vmem:[#allocation2 + $0x38] sm:$0xff]
        %v2072 = vld [vmem:[#allocation2 + $0x40] sm:$0xff]
        %v2073 = vld [vmem:[#allocation2 + $0x48] sm:$0xff]
        %v2074 = vld [vmem:[#allocation2 + $0x50] sm:$0xff]
        %v2075 = vld [vmem:[#allocation2 + $0x58] sm:$0xff]
        %v2076 = vld [vmem:[#allocation2 + $0x60] sm:$0xff]
        %v2077 = vld [vmem:[#allocation2 + $0x68] sm:$0xff]
        %v2078 = vld [vmem:[#allocation2 + $0x70] sm:$0xff]
        %v2079 = vld [vmem:[#allocation2 + $0x78] sm:$0xff]
        %v2080 = vld [vmem:[#allocation2 + $0x80] sm:$0xff]
        %v2081 = vld [vmem:[#allocation2 + $0x88] sm:$0xff]
        %v2082 = vld [vmem:[#allocation2 + $0x90] sm:$0xff]
        %v2083 = vld [vmem:[#allocation2 + $0x98] sm:$0xff]
        %v2084 = vld [vmem:[#allocation2 + $0xa0] sm:$0xff]
        %v2085 = vld [vmem:[#allocation2 + $0xa8] sm:$0xff]
        %v2086 = vld [vmem:[#allocation2 + $0xb0] sm:$0xff]
        %v2087 = vld [vmem:[#allocation2 + $0xb8] sm:$0xff]
        %v2088 = vld [vmem:[#allocation2 + $0xc0] sm:$0xff]
        %v2089 = vld [vmem:[#allocation2 + $0xc8] sm:$0xff]
        %v2090 = vld [vmem:[#allocation2 + $0xd0] sm:$0xff]
        %v2091 = vld [vmem:[#allocation2 + $0xd8] sm:$0xff]
        %v2092 = vld [vmem:[#allocation2 + $0xe0] sm:$0xff]
        %v2093 = vld [vmem:[#allocation2 + $0xe8] sm:$0xff]
        %v2094 = vld [vmem:[#allocation2 + $0xf0] sm:$0xff]
        %v2095 = vld [vmem:[#allocation2 + $0xf8] sm:$0xff]
        %s2096 = scalar_lea.vmem %s212, 6
        %v2097 = vld [vmem:[%s2096] sm:$0x3]
        %v2130 = vunpack.c.l.b16 %v2032
        %v2131 = vunpack.c.l.b16 %v2033
        %v2132 = vunpack.c.l.b16 %v2034
        %v2133 = vunpack.c.l.b16 %v2035
        %v2134 = vunpack.c.l.b16 %v2036
        %v2135 = vunpack.c.l.b16 %v2037
        %v2136 = vunpack.c.l.b16 %v2038
        %v2137 = vunpack.c.l.b16 %v2039
        %v2138 = vunpack.c.l.b16 %v2040
        %v2139 = vunpack.c.l.b16 %v2041
        %v2140 = vunpack.c.l.b16 %v2042
        %v2141 = vunpack.c.l.b16 %v2043
        %v2142 = vunpack.c.l.b16 %v2044
        %v2143 = vunpack.c.l.b16 %v2045
        %v2144 = vunpack.c.l.b16 %v2046
        %v2145 = vunpack.c.l.b16 %v2047
        %v2146 = vunpack.c.l.b16 %v2048
        %v2147 = vunpack.c.l.b16 %v2049
        %v2148 = vunpack.c.l.b16 %v2050
        %v2149 = vunpack.c.l.b16 %v2051
        %v2150 = vunpack.c.l.b16 %v2052
        %v2151 = vunpack.c.l.b16 %v2053
        %v2152 = vunpack.c.l.b16 %v2054
        %v2153 = vunpack.c.l.b16 %v2055
        %v2154 = vunpack.c.l.b16 %v2056
        %v2155 = vunpack.c.l.b16 %v2057
        %v2156 = vunpack.c.l.b16 %v2058
        %v2157 = vunpack.c.l.b16 %v2059
        %v2158 = vunpack.c.l.b16 %v2060
        %v2159 = vunpack.c.l.b16 %v2061
        %v2160 = vunpack.c.l.b16 %v2062
        %v2161 = vunpack.c.l.b16 %v2063
        %v2162 = vpack.c.b16 %v2131, %v2130
        %v2163 = vpack.c.b16 %v2133, %v2132
        %v2164 = vpack.c.b16 %v2135, %v2134
        %v2165 = vpack.c.b16 %v2137, %v2136
        %v2166 = vpack.c.b16 %v2139, %v2138
        %v2167 = vpack.c.b16 %v2141, %v2140
        %v2168 = vpack.c.b16 %v2143, %v2142
        %v2169 = vpack.c.b16 %v2145, %v2144
        %v2170 = vpack.c.b16 %v2147, %v2146
        %v2171 = vpack.c.b16 %v2149, %v2148
        %v2172 = vpack.c.b16 %v2151, %v2150
        %v2173 = vpack.c.b16 %v2153, %v2152
        %v2174 = vpack.c.b16 %v2155, %v2154
        %v2175 = vpack.c.b16 %v2157, %v2156
        %v2176 = vpack.c.b16 %v2159, %v2158
        %v2177 = vpack.c.b16 %v2161, %v2160
        %v2179 = vsel %vm391, %v2162, 0
        %v2182 = vsel %vm391, %v2163, 0
        %v2185 = vsel %vm391, %v2164, 0
        %v2188 = vsel %vm391, %v2165, 0
        %v2191 = vsel %vm391, %v2166, 0
        %v2194 = vsel %vm391, %v2167, 0
        %v2197 = vsel %vm391, %v2168, 0
        %v2200 = vsel %vm391, %v2169, 0
        %v2203 = vsel %vm391, %v2170, 0
        %v2206 = vsel %vm391, %v2171, 0
        %v2209 = vsel %vm391, %v2172, 0
        %v2212 = vsel %vm391, %v2173, 0
        %v2215 = vsel %vm391, %v2174, 0
        %v2218 = vsel %vm391, %v2175, 0
        %v2221 = vsel %vm391, %v2176, 0
        %v2224 = vsel %vm391, %v2177, 0
        %v2227 = vsel %vm440, %v2097, 0
        %2229 = vmatprep.subr.bf16.mxu0 0
        %2230 = vmatpush1.bf16.msra.mxu0 0
        %2231 = vmatprep.subr.bf16.mxu0 0
        %2232 = vmatpush1.bf16.msra.mxu0 0
        %2233 = vmatprep.subr.bf16.mxu0 0
        %2234 = vmatpush1.bf16.msra.mxu0 0
        %2235 = vmatprep.subr.bf16.mxu0 0
        %2236 = vmatpush1.bf16.msra.mxu0 0
        %2237 = vmatprep.subr.bf16.mxu0 0
        %2238 = vmatpush1.bf16.msra.mxu0 0
        %2239 = vmatprep.subr.bf16.mxu0 0
        %2240 = vmatpush1.bf16.msra.mxu0 0
        %2241 = vmatprep.subr.bf16.mxu0 0
        %2242 = vmatpush1.bf16.msra.mxu0 0
        %2243 = vmatprep.subr.bf16.mxu0 0
        %2244 = vmatpush1.bf16.msra.mxu0 %v2227
        %2245 = vmatprep.subr.bf16.mxu0 0
        %2246 = vmatpush2.bf16.msra.mxu0 0
        %2247 = vmatprep.subr.bf16.mxu0 0
        %2248 = vmatpush2.bf16.msra.mxu0 0
        %2249 = vmatprep.subr.bf16.mxu0 0
        %2250 = vmatpush2.bf16.msra.mxu0 0
        %2251 = vmatprep.subr.bf16.mxu0 0
        %2252 = vmatpush2.bf16.msra.mxu0 0
        %2253 = vmatprep.subr.bf16.mxu0 0
        %2254 = vmatpush2.bf16.msra.mxu0 0
        %2255 = vmatprep.subr.bf16.mxu0 0
        %2256 = vmatpush2.bf16.msra.mxu0 0
        %2257 = vmatprep.subr.bf16.mxu0 0
        %2258 = vmatpush2.bf16.msra.mxu0 0
        %2259 = vmatprep.subr.bf16.mxu0 0
        %2260 = vmatpush2.bf16.msra.mxu0 0
        %2261 = vmatprep.mubr.bf16.mxu0 0
        %2262 = vmatmul.mubr.bf16.gmra.mxu0 %v2179
        %v2263 = vpop.f32.mrf.mxu0
        %v2264 = vadd.f32 0.0, %v2263
        %v2265 = vpop.f32.mrf.mxu0
        %v2266 = vpop.f32.mrf.mxu0
        %v2267 = vadd.f32 0.0, %v2266
        %v2268 = vpop.f32.mrf.mxu0
        %2269 = vmatprep.mubr.bf16.mxu0 0
        %2270 = vmatmul.mubr.bf16.gmra.mxu0 %v2182
        %v2271 = vpop.f32.mrf.mxu0
        %v2272 = vadd.f32 0.0, %v2271
        %v2273 = vpop.f32.mrf.mxu0
        %v2274 = vpop.f32.mrf.mxu0
        %v2275 = vadd.f32 0.0, %v2274
        %v2276 = vpop.f32.mrf.mxu0
        %2277 = vmatprep.mubr.bf16.mxu0 0
        %2278 = vmatmul.mubr.bf16.gmra.mxu0 %v2185
        %v2279 = vpop.f32.mrf.mxu0
        %v2280 = vadd.f32 0.0, %v2279
        %v2281 = vpop.f32.mrf.mxu0
        %v2282 = vpop.f32.mrf.mxu0
        %v2283 = vadd.f32 0.0, %v2282
        %v2284 = vpop.f32.mrf.mxu0
        %2285 = vmatprep.mubr.bf16.mxu0 0
        %2286 = vmatmul.mubr.bf16.gmra.mxu0 %v2188
        %v2287 = vpop.f32.mrf.mxu0
        %v2288 = vadd.f32 0.0, %v2287
        %v2289 = vpop.f32.mrf.mxu0
        %v2290 = vpop.f32.mrf.mxu0
        %v2291 = vadd.f32 0.0, %v2290
        %v2292 = vpop.f32.mrf.mxu0
        %2293 = vmatprep.mubr.bf16.mxu0 0
        %2294 = vmatmul.mubr.bf16.gmra.mxu0 %v2191
        %v2295 = vpop.f32.mrf.mxu0
        %v2296 = vadd.f32 0.0, %v2295
        %v2297 = vpop.f32.mrf.mxu0
        %v2298 = vpop.f32.mrf.mxu0
        %v2299 = vadd.f32 0.0, %v2298
        %v2300 = vpop.f32.mrf.mxu0
        %2301 = vmatprep.mubr.bf16.mxu0 0
        %2302 = vmatmul.mubr.bf16.gmra.mxu0 %v2194
        %v2303 = vpop.f32.mrf.mxu0
        %v2304 = vadd.f32 0.0, %v2303
        %v2305 = vpop.f32.mrf.mxu0
        %v2306 = vpop.f32.mrf.mxu0
        %v2307 = vadd.f32 0.0, %v2306
        %v2308 = vpop.f32.mrf.mxu0
        %2309 = vmatprep.mubr.bf16.mxu0 0
        %2310 = vmatmul.mubr.bf16.gmra.mxu0 %v2197
        %v2311 = vpop.f32.mrf.mxu0
        %v2312 = vadd.f32 0.0, %v2311
        %v2313 = vpop.f32.mrf.mxu0
        %v2314 = vpop.f32.mrf.mxu0
        %v2315 = vadd.f32 0.0, %v2314
        %v2316 = vpop.f32.mrf.mxu0
        %2317 = vmatprep.mubr.bf16.mxu0 0
        %2318 = vmatmul.mubr.bf16.gmra.mxu0 %v2200
        %v2319 = vpop.f32.mrf.mxu0
        %v2320 = vadd.f32 0.0, %v2319
        %v2321 = vpop.f32.mrf.mxu0
        %v2322 = vpop.f32.mrf.mxu0
        %v2323 = vadd.f32 0.0, %v2322
        %v2324 = vpop.f32.mrf.mxu0
        %2325 = vmatprep.mubr.bf16.mxu0 0
        %2326 = vmatmul.mubr.bf16.gmra.mxu0 %v2203
        %v2327 = vpop.f32.mrf.mxu0
        %v2328 = vadd.f32 0.0, %v2327
        %v2329 = vpop.f32.mrf.mxu0
        %v2330 = vpop.f32.mrf.mxu0
        %v2331 = vadd.f32 0.0, %v2330
        %v2332 = vpop.f32.mrf.mxu0
        %2333 = vmatprep.mubr.bf16.mxu0 0
        %2334 = vmatmul.mubr.bf16.gmra.mxu0 %v2206
        %v2335 = vpop.f32.mrf.mxu0
        %v2336 = vadd.f32 0.0, %v2335
        %v2337 = vpop.f32.mrf.mxu0
        %v2338 = vpop.f32.mrf.mxu0
        %v2339 = vadd.f32 0.0, %v2338
        %v2340 = vpop.f32.mrf.mxu0
        %2341 = vmatprep.mubr.bf16.mxu0 0
        %2342 = vmatmul.mubr.bf16.gmra.mxu0 %v2209
        %v2343 = vpop.f32.mrf.mxu0
        %v2344 = vadd.f32 0.0, %v2343
        %v2345 = vpop.f32.mrf.mxu0
        %v2346 = vpop.f32.mrf.mxu0
        %v2347 = vadd.f32 0.0, %v2346
        %v2348 = vpop.f32.mrf.mxu0
        %2349 = vmatprep.mubr.bf16.mxu0 0
        %2350 = vmatmul.mubr.bf16.gmra.mxu0 %v2212
        %v2351 = vpop.f32.mrf.mxu0
        %v2352 = vadd.f32 0.0, %v2351
        %v2353 = vpop.f32.mrf.mxu0
        %v2354 = vpop.f32.mrf.mxu0
        %v2355 = vadd.f32 0.0, %v2354
        %v2356 = vpop.f32.mrf.mxu0
        %2357 = vmatprep.mubr.bf16.mxu0 0
        %2358 = vmatmul.mubr.bf16.gmra.mxu0 %v2215
        %v2359 = vpop.f32.mrf.mxu0
        %v2360 = vadd.f32 0.0, %v2359
        %v2361 = vpop.f32.mrf.mxu0
        %v2362 = vpop.f32.mrf.mxu0
        %v2363 = vadd.f32 0.0, %v2362
        %v2364 = vpop.f32.mrf.mxu0
        %2365 = vmatprep.mubr.bf16.mxu0 0
        %2366 = vmatmul.mubr.bf16.gmra.mxu0 %v2218
        %v2367 = vpop.f32.mrf.mxu0
        %v2368 = vadd.f32 0.0, %v2367
        %v2369 = vpop.f32.mrf.mxu0
        %v2370 = vpop.f32.mrf.mxu0
        %v2371 = vadd.f32 0.0, %v2370
        %v2372 = vpop.f32.mrf.mxu0
        %2373 = vmatprep.mubr.bf16.mxu0 0
        %2374 = vmatmul.mubr.bf16.gmra.mxu0 %v2221
        %v2375 = vpop.f32.mrf.mxu0
        %v2376 = vadd.f32 0.0, %v2375
        %v2377 = vpop.f32.mrf.mxu0
        %v2378 = vpop.f32.mrf.mxu0
        %v2379 = vadd.f32 0.0, %v2378
        %v2380 = vpop.f32.mrf.mxu0
        %2381 = vmatprep.mubr.bf16.mxu0 0
        %2382 = vmatmul.mubr.bf16.gmra.mxu0 %v2224
        %v2383 = vpop.f32.mrf.mxu0
        %v2384 = vadd.f32 0.0, %v2383
        %v2385 = vpop.f32.mrf.mxu0
        %v2386 = vpop.f32.mrf.mxu0
        %v2387 = vadd.f32 0.0, %v2386
        %v2388 = vpop.f32.mrf.mxu0
        %2389 = vdwg.mxu0
        %v2390 = vadd.f32 %v2064, %v2264
        %v2391 = vadd.f32 %v2065, %v2267
        %v2392 = vadd.f32 %v2066, %v2272
        %v2393 = vadd.f32 %v2067, %v2275
        %v2394 = vadd.f32 %v2068, %v2280
        %v2395 = vadd.f32 %v2069, %v2283
        %v2396 = vadd.f32 %v2070, %v2288
        %v2397 = vadd.f32 %v2071, %v2291
        %v2398 = vadd.f32 %v2072, %v2296
        %v2399 = vadd.f32 %v2073, %v2299
        %v2400 = vadd.f32 %v2074, %v2304
        %v2401 = vadd.f32 %v2075, %v2307
        %v2402 = vadd.f32 %v2076, %v2312
        %v2403 = vadd.f32 %v2077, %v2315
        %v2404 = vadd.f32 %v2078, %v2320
        %v2405 = vadd.f32 %v2079, %v2323
        %v2406 = vadd.f32 %v2080, %v2328
        %v2407 = vadd.f32 %v2081, %v2331
        %v2408 = vadd.f32 %v2082, %v2336
        %v2409 = vadd.f32 %v2083, %v2339
        %v2410 = vadd.f32 %v2084, %v2344
        %v2411 = vadd.f32 %v2085, %v2347
        %v2412 = vadd.f32 %v2086, %v2352
        %v2413 = vadd.f32 %v2087, %v2355
        %v2414 = vadd.f32 %v2088, %v2360
        %v2415 = vadd.f32 %v2089, %v2363
        %v2416 = vadd.f32 %v2090, %v2368
        %v2417 = vadd.f32 %v2091, %v2371
        %v2418 = vadd.f32 %v2092, %v2376
        %v2419 = vadd.f32 %v2093, %v2379
        %v2420 = vadd.f32 %v2094, %v2384
        %v2421 = vadd.f32 %v2095, %v2387
        %2422 = vst [vmem:[#allocation2] sm:$0xff] %v2390
        %2423 = vst [vmem:[#allocation2 + $0x8] sm:$0xff] %v2391
        %2424 = vst [vmem:[#allocation2 + $0x10] sm:$0xff] %v2392
        %2425 = vst [vmem:[#allocation2 + $0x18] sm:$0xff] %v2393
        %2426 = vst [vmem:[#allocation2 + $0x20] sm:$0xff] %v2394
        %2427 = vst [vmem:[#allocation2 + $0x28] sm:$0xff] %v2395
        %2428 = vst [vmem:[#allocation2 + $0x30] sm:$0xff] %v2396
        %2429 = vst [vmem:[#allocation2 + $0x38] sm:$0xff] %v2397
        %2430 = vst [vmem:[#allocation2 + $0x40] sm:$0xff] %v2398
        %2431 = vst [vmem:[#allocation2 + $0x48] sm:$0xff] %v2399
        %2432 = vst [vmem:[#allocation2 + $0x50] sm:$0xff] %v2400
        %2433 = vst [vmem:[#allocation2 + $0x58] sm:$0xff] %v2401
        %2434 = vst [vmem:[#allocation2 + $0x60] sm:$0xff] %v2402
        %2435 = vst [vmem:[#allocation2 + $0x68] sm:$0xff] %v2403
        %2436 = vst [vmem:[#allocation2 + $0x70] sm:$0xff] %v2404
        %2437 = vst [vmem:[#allocation2 + $0x78] sm:$0xff] %v2405
        %2438 = vst [vmem:[#allocation2 + $0x80] sm:$0xff] %v2406
        %2439 = vst [vmem:[#allocation2 + $0x88] sm:$0xff] %v2407
        %2440 = vst [vmem:[#allocation2 + $0x90] sm:$0xff] %v2408
        %2441 = vst [vmem:[#allocation2 + $0x98] sm:$0xff] %v2409
        %2442 = vst [vmem:[#allocation2 + $0xa0] sm:$0xff] %v2410
        %2443 = vst [vmem:[#allocation2 + $0xa8] sm:$0xff] %v2411
        %2444 = vst [vmem:[#allocation2 + $0xb0] sm:$0xff] %v2412
        %2445 = vst [vmem:[#allocation2 + $0xb8] sm:$0xff] %v2413
        %2446 = vst [vmem:[#allocation2 + $0xc0] sm:$0xff] %v2414
        %2447 = vst [vmem:[#allocation2 + $0xc8] sm:$0xff] %v2415
        %2448 = vst [vmem:[#allocation2 + $0xd0] sm:$0xff] %v2416
        %2449 = vst [vmem:[#allocation2 + $0xd8] sm:$0xff] %v2417
        %2450 = vst [vmem:[#allocation2 + $0xe0] sm:$0xff] %v2418
        %2451 = vst [vmem:[#allocation2 + $0xe8] sm:$0xff] %v2419
        %2452 = vst [vmem:[#allocation2 + $0xf0] sm:$0xff] %v2420
        %2453 = vst [vmem:[#allocation2 + $0xf8] sm:$0xff] %v2421
        %v2454 = vld [vmem:[%s2031] sm:$0xf]
        %v2455 = vld [vmem:[%s2031 + $0x4] sm:$0xf]
        %v2456 = vld [vmem:[%s2031 + $0x8] sm:$0x1]
        %v2457 = vld [vmem:[%s2031 + $0xc] sm:$0xf]
        %v2458 = vld [vmem:[%s2031 + $0x10] sm:$0xf]
        %v2459 = vld [vmem:[%s2031 + $0x14] sm:$0x1]
        %v2460 = vld [vmem:[%s2031 + $0x18] sm:$0xf]
        %v2461 = vld [vmem:[%s2031 + $0x1c] sm:$0xf]
        %v2462 = vld [vmem:[%s2031 + $0x20] sm:$0x1]
        %v2463 = vld [vmem:[%s2031 + $0x24] sm:$0xf]
        %v2464 = vld [vmem:[%s2031 + $0x28] sm:$0xf]
        %v2465 = vld [vmem:[%s2031 + $0x2c] sm:$0x1]
        %v2466 = vld [vmem:[%s2031 + $0x30] sm:$0xf]
        %v2467 = vld [vmem:[%s2031 + $0x34] sm:$0xf]
        %v2468 = vld [vmem:[%s2031 + $0x38] sm:$0x1]
        %v2469 = vld [vmem:[%s2031 + $0x3c] sm:$0xf]
        %v2470 = vld [vmem:[%s2031 + $0x40] sm:$0xf]
        %v2471 = vld [vmem:[%s2031 + $0x44] sm:$0x1]
        %v2472 = vld [vmem:[%s2031 + $0x48] sm:$0xf]
        %v2473 = vld [vmem:[%s2031 + $0x4c] sm:$0xf]
        %v2474 = vld [vmem:[%s2031 + $0x50] sm:$0x1]
        %v2475 = vld [vmem:[%s2031 + $0x54] sm:$0xf]
        %v2476 = vld [vmem:[%s2031 + $0x58] sm:$0xf]
        %v2477 = vld [vmem:[%s2031 + $0x5c] sm:$0x1]
        %v2478 = vld [vmem:[%s2031 + $0x60] sm:$0xf]
        %v2479 = vld [vmem:[%s2031 + $0x64] sm:$0xf]
        %v2480 = vld [vmem:[%s2031 + $0x68] sm:$0x1]
        %v2481 = vld [vmem:[%s2031 + $0x6c] sm:$0xf]
        %v2482 = vld [vmem:[%s2031 + $0x70] sm:$0xf]
        %v2483 = vld [vmem:[%s2031 + $0x74] sm:$0x1]
        %v2484 = vld [vmem:[%s2031 + $0x78] sm:$0xf]
        %v2485 = vld [vmem:[%s2031 + $0x7c] sm:$0xf]
        %v2486 = vld [vmem:[%s2031 + $0x80] sm:$0x1]
        %v2487 = vld [vmem:[%s2031 + $0x84] sm:$0xf]
        %v2488 = vld [vmem:[%s2031 + $0x88] sm:$0xf]
        %v2489 = vld [vmem:[%s2031 + $0x8c] sm:$0x1]
        %v2490 = vld [vmem:[%s2031 + $0x90] sm:$0xf]
        %v2491 = vld [vmem:[%s2031 + $0x94] sm:$0xf]
        %v2492 = vld [vmem:[%s2031 + $0x98] sm:$0x1]
        %v2493 = vld [vmem:[%s2031 + $0x9c] sm:$0xf]
        %v2494 = vld [vmem:[%s2031 + $0xa0] sm:$0xf]
        %v2495 = vld [vmem:[%s2031 + $0xa4] sm:$0x1]
        %v2496 = vld [vmem:[%s2031 + $0xa8] sm:$0xf]
        %v2497 = vld [vmem:[%s2031 + $0xac] sm:$0xf]
        %v2498 = vld [vmem:[%s2031 + $0xb0] sm:$0x1]
        %v2499 = vld [vmem:[%s2031 + $0xb4] sm:$0xf]
        %v2500 = vld [vmem:[%s2031 + $0xb8] sm:$0xf]
        %v2501 = vld [vmem:[%s2031 + $0xbc] sm:$0x1]
        %v2503 = vshrl.u32 %v2454, 16
        %v2505 = vrot.slane %v2503, 4
        %v2506 = vshll.u32 %v2454, 16
        %v2508 = vrot.slane %v2506, 5
        %v2509 = vor.u32 %v2505, %v2508
        %v2510 = vrot.slane %v2509, 4
        %v2512 = vshll.u32 %v2455, 16
        %v2514 = vrot.slane %v2512, 5
        %v2515 = vsel %vm719, %v2510, %v2514
        %v2516 = vshrl.u32 %v2455, 16
        %v2518 = vrot.slane %v2516, 4
        %v2519 = vor.u32 %v2518, %v2514
        %v2520 = vrot.slane %v2519, 4
        %v2522 = vshll.u32 %v2456, 16
        %v2524 = vrot.slane %v2522, 5
        %v2525 = vsel %vm719, %v2520, %v2524
        %v2527 = vshrl.u32 %v2457, 16
        %v2529 = vrot.slane %v2527, 4
        %v2530 = vshll.u32 %v2457, 16
        %v2532 = vrot.slane %v2530, 5
        %v2533 = vor.u32 %v2529, %v2532
        %v2534 = vrot.slane %v2533, 4
        %v2536 = vshll.u32 %v2458, 16
        %v2538 = vrot.slane %v2536, 5
        %v2539 = vsel %vm719, %v2534, %v2538
        %v2540 = vshrl.u32 %v2458, 16
        %v2542 = vrot.slane %v2540, 4
        %v2543 = vor.u32 %v2542, %v2538
        %v2544 = vrot.slane %v2543, 4
        %v2546 = vshll.u32 %v2459, 16
        %v2548 = vrot.slane %v2546, 5
        %v2549 = vsel %vm719, %v2544, %v2548
        %v2551 = vshrl.u32 %v2460, 16
        %v2553 = vrot.slane %v2551, 4
        %v2554 = vshll.u32 %v2460, 16
        %v2556 = vrot.slane %v2554, 5
        %v2557 = vor.u32 %v2553, %v2556
        %v2558 = vrot.slane %v2557, 4
        %v2560 = vshll.u32 %v2461, 16
        %v2562 = vrot.slane %v2560, 5
        %v2563 = vsel %vm719, %v2558, %v2562
        %v2564 = vshrl.u32 %v2461, 16
        %v2566 = vrot.slane %v2564, 4
        %v2567 = vor.u32 %v2566, %v2562
        %v2568 = vrot.slane %v2567, 4
        %v2570 = vshll.u32 %v2462, 16
        %v2572 = vrot.slane %v2570, 5
        %v2573 = vsel %vm719, %v2568, %v2572
        %v2575 = vshrl.u32 %v2463, 16
        %v2577 = vrot.slane %v2575, 4
        %v2578 = vshll.u32 %v2463, 16
        %v2580 = vrot.slane %v2578, 5
        %v2581 = vor.u32 %v2577, %v2580
        %v2582 = vrot.slane %v2581, 4
        %v2584 = vshll.u32 %v2464, 16
        %v2586 = vrot.slane %v2584, 5
        %v2587 = vsel %vm719, %v2582, %v2586
        %v2588 = vshrl.u32 %v2464, 16
        %v2590 = vrot.slane %v2588, 4
        %v2591 = vor.u32 %v2590, %v2586
        %v2592 = vrot.slane %v2591, 4
        %v2594 = vshll.u32 %v2465, 16
        %v2596 = vrot.slane %v2594, 5
        %v2597 = vsel %vm719, %v2592, %v2596
        %v2599 = vshrl.u32 %v2466, 16
        %v2601 = vrot.slane %v2599, 4
        %v2602 = vshll.u32 %v2466, 16
        %v2604 = vrot.slane %v2602, 5
        %v2605 = vor.u32 %v2601, %v2604
        %v2606 = vrot.slane %v2605, 4
        %v2608 = vshll.u32 %v2467, 16
        %v2610 = vrot.slane %v2608, 5
        %v2611 = vsel %vm719, %v2606, %v2610
        %v2612 = vshrl.u32 %v2467, 16
        %v2614 = vrot.slane %v2612, 4
        %v2615 = vor.u32 %v2614, %v2610
        %v2616 = vrot.slane %v2615, 4
        %v2618 = vshll.u32 %v2468, 16
        %v2620 = vrot.slane %v2618, 5
        %v2621 = vsel %vm719, %v2616, %v2620
        %v2623 = vshrl.u32 %v2469, 16
        %v2625 = vrot.slane %v2623, 4
        %v2626 = vshll.u32 %v2469, 16
        %v2628 = vrot.slane %v2626, 5
        %v2629 = vor.u32 %v2625, %v2628
        %v2630 = vrot.slane %v2629, 4
        %v2632 = vshll.u32 %v2470, 16
        %v2634 = vrot.slane %v2632, 5
        %v2635 = vsel %vm719, %v2630, %v2634
        %v2636 = vshrl.u32 %v2470, 16
        %v2638 = vrot.slane %v2636, 4
        %v2639 = vor.u32 %v2638, %v2634
        %v2640 = vrot.slane %v2639, 4
        %v2642 = vshll.u32 %v2471, 16
        %v2644 = vrot.slane %v2642, 5
        %v2645 = vsel %vm719, %v2640, %v2644
        %v2647 = vshrl.u32 %v2472, 16
        %v2649 = vrot.slane %v2647, 4
        %v2650 = vshll.u32 %v2472, 16
        %v2652 = vrot.slane %v2650, 5
        %v2653 = vor.u32 %v2649, %v2652
        %v2654 = vrot.slane %v2653, 4
        %v2656 = vshll.u32 %v2473, 16
        %v2658 = vrot.slane %v2656, 5
        %v2659 = vsel %vm719, %v2654, %v2658
        %v2660 = vshrl.u32 %v2473, 16
        %v2662 = vrot.slane %v2660, 4
        %v2663 = vor.u32 %v2662, %v2658
        %v2664 = vrot.slane %v2663, 4
        %v2666 = vshll.u32 %v2474, 16
        %v2668 = vrot.slane %v2666, 5
        %v2669 = vsel %vm719, %v2664, %v2668
        %v2671 = vshrl.u32 %v2475, 16
        %v2673 = vrot.slane %v2671, 4
        %v2674 = vshll.u32 %v2475, 16
        %v2676 = vrot.slane %v2674, 5
        %v2677 = vor.u32 %v2673, %v2676
        %v2678 = vrot.slane %v2677, 4
        %v2680 = vshll.u32 %v2476, 16
        %v2682 = vrot.slane %v2680, 5
        %v2683 = vsel %vm719, %v2678, %v2682
        %v2684 = vshrl.u32 %v2476, 16
        %v2686 = vrot.slane %v2684, 4
        %v2687 = vor.u32 %v2686, %v2682
        %v2688 = vrot.slane %v2687, 4
        %v2690 = vshll.u32 %v2477, 16
        %v2692 = vrot.slane %v2690, 5
        %v2693 = vsel %vm719, %v2688, %v2692
        %v2695 = vshrl.u32 %v2478, 16
        %v2697 = vrot.slane %v2695, 4
        %v2698 = vshll.u32 %v2478, 16
        %v2700 = vrot.slane %v2698, 5
        %v2701 = vor.u32 %v2697, %v2700
        %v2702 = vrot.slane %v2701, 4
        %v2704 = vshll.u32 %v2479, 16
        %v2706 = vrot.slane %v2704, 5
        %v2707 = vsel %vm719, %v2702, %v2706
        %v2708 = vshrl.u32 %v2479, 16
        %v2710 = vrot.slane %v2708, 4
        %v2711 = vor.u32 %v2710, %v2706
        %v2712 = vrot.slane %v2711, 4
        %v2714 = vshll.u32 %v2480, 16
        %v2716 = vrot.slane %v2714, 5
        %v2717 = vsel %vm719, %v2712, %v2716
        %v2719 = vshrl.u32 %v2481, 16
        %v2721 = vrot.slane %v2719, 4
        %v2722 = vshll.u32 %v2481, 16
        %v2724 = vrot.slane %v2722, 5
        %v2725 = vor.u32 %v2721, %v2724
        %v2726 = vrot.slane %v2725, 4
        %v2728 = vshll.u32 %v2482, 16
        %v2730 = vrot.slane %v2728, 5
        %v2731 = vsel %vm719, %v2726, %v2730
        %v2732 = vshrl.u32 %v2482, 16
        %v2734 = vrot.slane %v2732, 4
        %v2735 = vor.u32 %v2734, %v2730
        %v2736 = vrot.slane %v2735, 4
        %v2738 = vshll.u32 %v2483, 16
        %v2740 = vrot.slane %v2738, 5
        %v2741 = vsel %vm719, %v2736, %v2740
        %v2743 = vshrl.u32 %v2484, 16
        %v2745 = vrot.slane %v2743, 4
        %v2746 = vshll.u32 %v2484, 16
        %v2748 = vrot.slane %v2746, 5
        %v2749 = vor.u32 %v2745, %v2748
        %v2750 = vrot.slane %v2749, 4
        %v2752 = vshll.u32 %v2485, 16
        %v2754 = vrot.slane %v2752, 5
        %v2755 = vsel %vm719, %v2750, %v2754
        %v2756 = vshrl.u32 %v2485, 16
        %v2758 = vrot.slane %v2756, 4
        %v2759 = vor.u32 %v2758, %v2754
        %v2760 = vrot.slane %v2759, 4
        %v2762 = vshll.u32 %v2486, 16
        %v2764 = vrot.slane %v2762, 5
        %v2765 = vsel %vm719, %v2760, %v2764
        %v2767 = vshrl.u32 %v2487, 16
        %v2769 = vrot.slane %v2767, 4
        %v2770 = vshll.u32 %v2487, 16
        %v2772 = vrot.slane %v2770, 5
        %v2773 = vor.u32 %v2769, %v2772
        %v2774 = vrot.slane %v2773, 4
        %v2776 = vshll.u32 %v2488, 16
        %v2778 = vrot.slane %v2776, 5
        %v2779 = vsel %vm719, %v2774, %v2778
        %v2780 = vshrl.u32 %v2488, 16
        %v2782 = vrot.slane %v2780, 4
        %v2783 = vor.u32 %v2782, %v2778
        %v2784 = vrot.slane %v2783, 4
        %v2786 = vshll.u32 %v2489, 16
        %v2788 = vrot.slane %v2786, 5
        %v2789 = vsel %vm719, %v2784, %v2788
        %v2791 = vshrl.u32 %v2490, 16
        %v2793 = vrot.slane %v2791, 4
        %v2794 = vshll.u32 %v2490, 16
        %v2796 = vrot.slane %v2794, 5
        %v2797 = vor.u32 %v2793, %v2796
        %v2798 = vrot.slane %v2797, 4
        %v2800 = vshll.u32 %v2491, 16
        %v2802 = vrot.slane %v2800, 5
        %v2803 = vsel %vm719, %v2798, %v2802
        %v2804 = vshrl.u32 %v2491, 16
        %v2806 = vrot.slane %v2804, 4
        %v2807 = vor.u32 %v2806, %v2802
        %v2808 = vrot.slane %v2807, 4
        %v2810 = vshll.u32 %v2492, 16
        %v2812 = vrot.slane %v2810, 5
        %v2813 = vsel %vm719, %v2808, %v2812
        %v2815 = vshrl.u32 %v2493, 16
        %v2817 = vrot.slane %v2815, 4
        %v2818 = vshll.u32 %v2493, 16
        %v2820 = vrot.slane %v2818, 5
        %v2821 = vor.u32 %v2817, %v2820
        %v2822 = vrot.slane %v2821, 4
        %v2824 = vshll.u32 %v2494, 16
        %v2826 = vrot.slane %v2824, 5
        %v2827 = vsel %vm719, %v2822, %v2826
        %v2828 = vshrl.u32 %v2494, 16
        %v2830 = vrot.slane %v2828, 4
        %v2831 = vor.u32 %v2830, %v2826
        %v2832 = vrot.slane %v2831, 4
        %v2834 = vshll.u32 %v2495, 16
        %v2836 = vrot.slane %v2834, 5
        %v2837 = vsel %vm719, %v2832, %v2836
        %v2839 = vshrl.u32 %v2496, 16
        %v2841 = vrot.slane %v2839, 4
        %v2842 = vshll.u32 %v2496, 16
        %v2844 = vrot.slane %v2842, 5
        %v2845 = vor.u32 %v2841, %v2844
        %v2846 = vrot.slane %v2845, 4
        %v2848 = vshll.u32 %v2497, 16
        %v2850 = vrot.slane %v2848, 5
        %v2851 = vsel %vm719, %v2846, %v2850
        %v2852 = vshrl.u32 %v2497, 16
        %v2854 = vrot.slane %v2852, 4
        %v2855 = vor.u32 %v2854, %v2850
        %v2856 = vrot.slane %v2855, 4
        %v2858 = vshll.u32 %v2498, 16
        %v2860 = vrot.slane %v2858, 5
        %v2861 = vsel %vm719, %v2856, %v2860
        %v2863 = vshrl.u32 %v2499, 16
        %v2865 = vrot.slane %v2863, 4
        %v2866 = vshll.u32 %v2499, 16
        %v2868 = vrot.slane %v2866, 5
        %v2869 = vor.u32 %v2865, %v2868
        %v2870 = vrot.slane %v2869, 4
        %v2872 = vshll.u32 %v2500, 16
        %v2874 = vrot.slane %v2872, 5
        %v2875 = vsel %vm719, %v2870, %v2874
        %v2876 = vshrl.u32 %v2500, 16
        %v2878 = vrot.slane %v2876, 4
        %v2879 = vor.u32 %v2878, %v2874
        %v2880 = vrot.slane %v2879, 4
        %v2882 = vshll.u32 %v2501, 16
        %v2884 = vrot.slane %v2882, 5
        %v2885 = vsel %vm719, %v2880, %v2884
        %v2886 = vld [vmem:[#allocation2] sm:$0xff]
        %v2887 = vld [vmem:[#allocation2 + $0x8] sm:$0xff]
        %v2888 = vld [vmem:[#allocation2 + $0x10] sm:$0xff]
        %v2889 = vld [vmem:[#allocation2 + $0x18] sm:$0xff]
        %v2890 = vld [vmem:[#allocation2 + $0x20] sm:$0xff]
        %v2891 = vld [vmem:[#allocation2 + $0x28] sm:$0xff]
        %v2892 = vld [vmem:[#allocation2 + $0x30] sm:$0xff]
        %v2893 = vld [vmem:[#allocation2 + $0x38] sm:$0xff]
        %v2894 = vld [vmem:[#allocation2 + $0x40] sm:$0xff]
        %v2895 = vld [vmem:[#allocation2 + $0x48] sm:$0xff]
        %v2896 = vld [vmem:[#allocation2 + $0x50] sm:$0xff]
        %v2897 = vld [vmem:[#allocation2 + $0x58] sm:$0xff]
        %v2898 = vld [vmem:[#allocation2 + $0x60] sm:$0xff]
        %v2899 = vld [vmem:[#allocation2 + $0x68] sm:$0xff]
        %v2900 = vld [vmem:[#allocation2 + $0x70] sm:$0xff]
        %v2901 = vld [vmem:[#allocation2 + $0x78] sm:$0xff]
        %v2902 = vld [vmem:[#allocation2 + $0x80] sm:$0xff]
        %v2903 = vld [vmem:[#allocation2 + $0x88] sm:$0xff]
        %v2904 = vld [vmem:[#allocation2 + $0x90] sm:$0xff]
        %v2905 = vld [vmem:[#allocation2 + $0x98] sm:$0xff]
        %v2906 = vld [vmem:[#allocation2 + $0xa0] sm:$0xff]
        %v2907 = vld [vmem:[#allocation2 + $0xa8] sm:$0xff]
        %v2908 = vld [vmem:[#allocation2 + $0xb0] sm:$0xff]
        %v2909 = vld [vmem:[#allocation2 + $0xb8] sm:$0xff]
        %v2910 = vld [vmem:[#allocation2 + $0xc0] sm:$0xff]
        %v2911 = vld [vmem:[#allocation2 + $0xc8] sm:$0xff]
        %v2912 = vld [vmem:[#allocation2 + $0xd0] sm:$0xff]
        %v2913 = vld [vmem:[#allocation2 + $0xd8] sm:$0xff]
        %v2914 = vld [vmem:[#allocation2 + $0xe0] sm:$0xff]
        %v2915 = vld [vmem:[#allocation2 + $0xe8] sm:$0xff]
        %v2916 = vld [vmem:[#allocation2 + $0xf0] sm:$0xff]
        %v2917 = vld [vmem:[#allocation2 + $0xf8] sm:$0xff]
        %s2918 = scalar_lea.vmem %s212, 8
        %v2919 = vld [vmem:[%s2918] sm:$0x3]
        %v2920 = vunpack.c.l.b16 %v2515
        %v2921 = vunpack.c.l.b16 %v2525
        %v2922 = vunpack.c.l.b16 %v2539
        %v2923 = vunpack.c.l.b16 %v2549
        %v2924 = vunpack.c.l.b16 %v2563
        %v2925 = vunpack.c.l.b16 %v2573
        %v2926 = vunpack.c.l.b16 %v2587
        %v2927 = vunpack.c.l.b16 %v2597
        %v2928 = vunpack.c.l.b16 %v2611
        %v2929 = vunpack.c.l.b16 %v2621
        %v2930 = vunpack.c.l.b16 %v2635
        %v2931 = vunpack.c.l.b16 %v2645
        %v2932 = vunpack.c.l.b16 %v2659
        %v2933 = vunpack.c.l.b16 %v2669
        %v2934 = vunpack.c.l.b16 %v2683
        %v2935 = vunpack.c.l.b16 %v2693
        %v2936 = vunpack.c.l.b16 %v2707
        %v2937 = vunpack.c.l.b16 %v2717
        %v2938 = vunpack.c.l.b16 %v2731
        %v2939 = vunpack.c.l.b16 %v2741
        %v2940 = vunpack.c.l.b16 %v2755
        %v2941 = vunpack.c.l.b16 %v2765
        %v2942 = vunpack.c.l.b16 %v2779
        %v2943 = vunpack.c.l.b16 %v2789
        %v2944 = vunpack.c.l.b16 %v2803
        %v2945 = vunpack.c.l.b16 %v2813
        %v2946 = vunpack.c.l.b16 %v2827
        %v2947 = vunpack.c.l.b16 %v2837
        %v2948 = vunpack.c.l.b16 %v2851
        %v2949 = vunpack.c.l.b16 %v2861
        %v2950 = vunpack.c.l.b16 %v2875
        %v2951 = vunpack.c.l.b16 %v2885
        %v2952 = vpack.c.b16 %v2921, %v2920
        %v2953 = vpack.c.b16 %v2923, %v2922
        %v2954 = vpack.c.b16 %v2925, %v2924
        %v2955 = vpack.c.b16 %v2927, %v2926
        %v2956 = vpack.c.b16 %v2929, %v2928
        %v2957 = vpack.c.b16 %v2931, %v2930
        %v2958 = vpack.c.b16 %v2933, %v2932
        %v2959 = vpack.c.b16 %v2935, %v2934
        %v2960 = vpack.c.b16 %v2937, %v2936
        %v2961 = vpack.c.b16 %v2939, %v2938
        %v2962 = vpack.c.b16 %v2941, %v2940
        %v2963 = vpack.c.b16 %v2943, %v2942
        %v2964 = vpack.c.b16 %v2945, %v2944
        %v2965 = vpack.c.b16 %v2947, %v2946
        %v2966 = vpack.c.b16 %v2949, %v2948
        %v2967 = vpack.c.b16 %v2951, %v2950
        %v2969 = vsel %vm391, %v2952, 0
        %v2972 = vsel %vm391, %v2953, 0
        %v2975 = vsel %vm391, %v2954, 0
        %v2978 = vsel %vm391, %v2955, 0
        %v2981 = vsel %vm391, %v2956, 0
        %v2984 = vsel %vm391, %v2957, 0
        %v2987 = vsel %vm391, %v2958, 0
        %v2990 = vsel %vm391, %v2959, 0
        %v2993 = vsel %vm391, %v2960, 0
        %v2996 = vsel %vm391, %v2961, 0
        %v2999 = vsel %vm391, %v2962, 0
        %v3002 = vsel %vm391, %v2963, 0
        %v3005 = vsel %vm391, %v2964, 0
        %v3008 = vsel %vm391, %v2965, 0
        %v3011 = vsel %vm391, %v2966, 0
        %v3014 = vsel %vm391, %v2967, 0
        %v3017 = vsel %vm440, %v2919, 0
        %3019 = vmatprep.subr.bf16.mxu0 0
        %3020 = vmatpush1.bf16.msra.mxu0 0
        %3021 = vmatprep.subr.bf16.mxu0 0
        %3022 = vmatpush1.bf16.msra.mxu0 0
        %3023 = vmatprep.subr.bf16.mxu0 0
        %3024 = vmatpush1.bf16.msra.mxu0 0
        %3025 = vmatprep.subr.bf16.mxu0 0
        %3026 = vmatpush1.bf16.msra.mxu0 0
        %3027 = vmatprep.subr.bf16.mxu0 0
        %3028 = vmatpush1.bf16.msra.mxu0 0
        %3029 = vmatprep.subr.bf16.mxu0 0
        %3030 = vmatpush1.bf16.msra.mxu0 0
        %3031 = vmatprep.subr.bf16.mxu0 0
        %3032 = vmatpush1.bf16.msra.mxu0 0
        %3033 = vmatprep.subr.bf16.mxu0 0
        %3034 = vmatpush1.bf16.msra.mxu0 %v3017
        %3035 = vmatprep.subr.bf16.mxu0 0
        %3036 = vmatpush2.bf16.msra.mxu0 0
        %3037 = vmatprep.subr.bf16.mxu0 0
        %3038 = vmatpush2.bf16.msra.mxu0 0
        %3039 = vmatprep.subr.bf16.mxu0 0
        %3040 = vmatpush2.bf16.msra.mxu0 0
        %3041 = vmatprep.subr.bf16.mxu0 0
        %3042 = vmatpush2.bf16.msra.mxu0 0
        %3043 = vmatprep.subr.bf16.mxu0 0
        %3044 = vmatpush2.bf16.msra.mxu0 0
        %3045 = vmatprep.subr.bf16.mxu0 0
        %3046 = vmatpush2.bf16.msra.mxu0 0
        %3047 = vmatprep.subr.bf16.mxu0 0
        %3048 = vmatpush2.bf16.msra.mxu0 0
        %3049 = vmatprep.subr.bf16.mxu0 0
        %3050 = vmatpush2.bf16.msra.mxu0 0
        %3051 = vmatprep.mubr.bf16.mxu0 0
        %3052 = vmatmul.mubr.bf16.gmra.mxu0 %v2969
        %v3053 = vpop.f32.mrf.mxu0
        %v3054 = vadd.f32 0.0, %v3053
        %v3055 = vpop.f32.mrf.mxu0
        %v3056 = vpop.f32.mrf.mxu0
        %v3057 = vadd.f32 0.0, %v3056
        %v3058 = vpop.f32.mrf.mxu0
        %3059 = vmatprep.mubr.bf16.mxu0 0
        %3060 = vmatmul.mubr.bf16.gmra.mxu0 %v2972
        %v3061 = vpop.f32.mrf.mxu0
        %v3062 = vadd.f32 0.0, %v3061
        %v3063 = vpop.f32.mrf.mxu0
        %v3064 = vpop.f32.mrf.mxu0
        %v3065 = vadd.f32 0.0, %v3064
        %v3066 = vpop.f32.mrf.mxu0
        %3067 = vmatprep.mubr.bf16.mxu0 0
        %3068 = vmatmul.mubr.bf16.gmra.mxu0 %v2975
        %v3069 = vpop.f32.mrf.mxu0
        %v3070 = vadd.f32 0.0, %v3069
        %v3071 = vpop.f32.mrf.mxu0
        %v3072 = vpop.f32.mrf.mxu0
        %v3073 = vadd.f32 0.0, %v3072
        %v3074 = vpop.f32.mrf.mxu0
        %3075 = vmatprep.mubr.bf16.mxu0 0
        %3076 = vmatmul.mubr.bf16.gmra.mxu0 %v2978
        %v3077 = vpop.f32.mrf.mxu0
        %v3078 = vadd.f32 0.0, %v3077
        %v3079 = vpop.f32.mrf.mxu0
        %v3080 = vpop.f32.mrf.mxu0
        %v3081 = vadd.f32 0.0, %v3080
        %v3082 = vpop.f32.mrf.mxu0
        %3083 = vmatprep.mubr.bf16.mxu0 0
        %3084 = vmatmul.mubr.bf16.gmra.mxu0 %v2981
        %v3085 = vpop.f32.mrf.mxu0
        %v3086 = vadd.f32 0.0, %v3085
        %v3087 = vpop.f32.mrf.mxu0
        %v3088 = vpop.f32.mrf.mxu0
        %v3089 = vadd.f32 0.0, %v3088
        %v3090 = vpop.f32.mrf.mxu0
        %3091 = vmatprep.mubr.bf16.mxu0 0
        %3092 = vmatmul.mubr.bf16.gmra.mxu0 %v2984
        %v3093 = vpop.f32.mrf.mxu0
        %v3094 = vadd.f32 0.0, %v3093
        %v3095 = vpop.f32.mrf.mxu0
        %v3096 = vpop.f32.mrf.mxu0
        %v3097 = vadd.f32 0.0, %v3096
        %v3098 = vpop.f32.mrf.mxu0
        %3099 = vmatprep.mubr.bf16.mxu0 0
        %3100 = vmatmul.mubr.bf16.gmra.mxu0 %v2987
        %v3101 = vpop.f32.mrf.mxu0
        %v3102 = vadd.f32 0.0, %v3101
        %v3103 = vpop.f32.mrf.mxu0
        %v3104 = vpop.f32.mrf.mxu0
        %v3105 = vadd.f32 0.0, %v3104
        %v3106 = vpop.f32.mrf.mxu0
        %3107 = vmatprep.mubr.bf16.mxu0 0
        %3108 = vmatmul.mubr.bf16.gmra.mxu0 %v2990
        %v3109 = vpop.f32.mrf.mxu0
        %v3110 = vadd.f32 0.0, %v3109
        %v3111 = vpop.f32.mrf.mxu0
        %v3112 = vpop.f32.mrf.mxu0
        %v3113 = vadd.f32 0.0, %v3112
        %v3114 = vpop.f32.mrf.mxu0
        %3115 = vmatprep.mubr.bf16.mxu0 0
        %3116 = vmatmul.mubr.bf16.gmra.mxu0 %v2993
        %v3117 = vpop.f32.mrf.mxu0
        %v3118 = vadd.f32 0.0, %v3117
        %v3119 = vpop.f32.mrf.mxu0
        %v3120 = vpop.f32.mrf.mxu0
        %v3121 = vadd.f32 0.0, %v3120
        %v3122 = vpop.f32.mrf.mxu0
        %3123 = vmatprep.mubr.bf16.mxu0 0
        %3124 = vmatmul.mubr.bf16.gmra.mxu0 %v2996
        %v3125 = vpop.f32.mrf.mxu0
        %v3126 = vadd.f32 0.0, %v3125
        %v3127 = vpop.f32.mrf.mxu0
        %v3128 = vpop.f32.mrf.mxu0
        %v3129 = vadd.f32 0.0, %v3128
        %v3130 = vpop.f32.mrf.mxu0
        %3131 = vmatprep.mubr.bf16.mxu0 0
        %3132 = vmatmul.mubr.bf16.gmra.mxu0 %v2999
        %v3133 = vpop.f32.mrf.mxu0
        %v3134 = vadd.f32 0.0, %v3133
        %v3135 = vpop.f32.mrf.mxu0
        %v3136 = vpop.f32.mrf.mxu0
        %v3137 = vadd.f32 0.0, %v3136
        %v3138 = vpop.f32.mrf.mxu0
        %3139 = vmatprep.mubr.bf16.mxu0 0
        %3140 = vmatmul.mubr.bf16.gmra.mxu0 %v3002
        %v3141 = vpop.f32.mrf.mxu0
        %v3142 = vadd.f32 0.0, %v3141
        %v3143 = vpop.f32.mrf.mxu0
        %v3144 = vpop.f32.mrf.mxu0
        %v3145 = vadd.f32 0.0, %v3144
        %v3146 = vpop.f32.mrf.mxu0
        %3147 = vmatprep.mubr.bf16.mxu0 0
        %3148 = vmatmul.mubr.bf16.gmra.mxu0 %v3005
        %v3149 = vpop.f32.mrf.mxu0
        %v3150 = vadd.f32 0.0, %v3149
        %v3151 = vpop.f32.mrf.mxu0
        %v3152 = vpop.f32.mrf.mxu0
        %v3153 = vadd.f32 0.0, %v3152
        %v3154 = vpop.f32.mrf.mxu0
        %3155 = vmatprep.mubr.bf16.mxu0 0
        %3156 = vmatmul.mubr.bf16.gmra.mxu0 %v3008
        %v3157 = vpop.f32.mrf.mxu0
        %v3158 = vadd.f32 0.0, %v3157
        %v3159 = vpop.f32.mrf.mxu0
        %v3160 = vpop.f32.mrf.mxu0
        %v3161 = vadd.f32 0.0, %v3160
        %v3162 = vpop.f32.mrf.mxu0
        %3163 = vmatprep.mubr.bf16.mxu0 0
        %3164 = vmatmul.mubr.bf16.gmra.mxu0 %v3011
        %v3165 = vpop.f32.mrf.mxu0
        %v3166 = vadd.f32 0.0, %v3165
        %v3167 = vpop.f32.mrf.mxu0
        %v3168 = vpop.f32.mrf.mxu0
        %v3169 = vadd.f32 0.0, %v3168
        %v3170 = vpop.f32.mrf.mxu0
        %3171 = vmatprep.mubr.bf16.mxu0 0
        %3172 = vmatmul.mubr.bf16.gmra.mxu0 %v3014
        %v3173 = vpop.f32.mrf.mxu0
        %v3174 = vadd.f32 0.0, %v3173
        %v3175 = vpop.f32.mrf.mxu0
        %v3176 = vpop.f32.mrf.mxu0
        %v3177 = vadd.f32 0.0, %v3176
        %v3178 = vpop.f32.mrf.mxu0
        %3179 = vdwg.mxu0
        %v3180 = vadd.f32 %v2886, %v3054
        %v3181 = vadd.f32 %v2887, %v3057
        %v3182 = vadd.f32 %v2888, %v3062
        %v3183 = vadd.f32 %v2889, %v3065
        %v3184 = vadd.f32 %v2890, %v3070
        %v3185 = vadd.f32 %v2891, %v3073
        %v3186 = vadd.f32 %v2892, %v3078
        %v3187 = vadd.f32 %v2893, %v3081
        %v3188 = vadd.f32 %v2894, %v3086
        %v3189 = vadd.f32 %v2895, %v3089
        %v3190 = vadd.f32 %v2896, %v3094
        %v3191 = vadd.f32 %v2897, %v3097
        %v3192 = vadd.f32 %v2898, %v3102
        %v3193 = vadd.f32 %v2899, %v3105
        %v3194 = vadd.f32 %v2900, %v3110
        %v3195 = vadd.f32 %v2901, %v3113
        %v3196 = vadd.f32 %v2902, %v3118
        %v3197 = vadd.f32 %v2903, %v3121
        %v3198 = vadd.f32 %v2904, %v3126
        %v3199 = vadd.f32 %v2905, %v3129
        %v3200 = vadd.f32 %v2906, %v3134
        %v3201 = vadd.f32 %v2907, %v3137
        %v3202 = vadd.f32 %v2908, %v3142
        %v3203 = vadd.f32 %v2909, %v3145
        %v3204 = vadd.f32 %v2910, %v3150
        %v3205 = vadd.f32 %v2911, %v3153
        %v3206 = vadd.f32 %v2912, %v3158
        %v3207 = vadd.f32 %v2913, %v3161
        %v3208 = vadd.f32 %v2914, %v3166
        %v3209 = vadd.f32 %v2915, %v3169
        %v3210 = vadd.f32 %v2916, %v3174
        %v3211 = vadd.f32 %v2917, %v3177
        %3212 = vst [vmem:[#allocation2] sm:$0xff] %v3180
        %3213 = vst [vmem:[#allocation2 + $0x8] sm:$0xff] %v3181
        %3214 = vst [vmem:[#allocation2 + $0x10] sm:$0xff] %v3182
        %3215 = vst [vmem:[#allocation2 + $0x18] sm:$0xff] %v3183
        %3216 = vst [vmem:[#allocation2 + $0x20] sm:$0xff] %v3184
        %3217 = vst [vmem:[#allocation2 + $0x28] sm:$0xff] %v3185
        %3218 = vst [vmem:[#allocation2 + $0x30] sm:$0xff] %v3186
        %3219 = vst [vmem:[#allocation2 + $0x38] sm:$0xff] %v3187
        %3220 = vst [vmem:[#allocation2 + $0x40] sm:$0xff] %v3188
        %3221 = vst [vmem:[#allocation2 + $0x48] sm:$0xff] %v3189
        %3222 = vst [vmem:[#allocation2 + $0x50] sm:$0xff] %v3190
        %3223 = vst [vmem:[#allocation2 + $0x58] sm:$0xff] %v3191
        %3224 = vst [vmem:[#allocation2 + $0x60] sm:$0xff] %v3192
        %3225 = vst [vmem:[#allocation2 + $0x68] sm:$0xff] %v3193
        %3226 = vst [vmem:[#allocation2 + $0x70] sm:$0xff] %v3194
        %3227 = vst [vmem:[#allocation2 + $0x78] sm:$0xff] %v3195
        %3228 = vst [vmem:[#allocation2 + $0x80] sm:$0xff] %v3196
        %3229 = vst [vmem:[#allocation2 + $0x88] sm:$0xff] %v3197
        %3230 = vst [vmem:[#allocation2 + $0x90] sm:$0xff] %v3198
        %3231 = vst [vmem:[#allocation2 + $0x98] sm:$0xff] %v3199
        %3232 = vst [vmem:[#allocation2 + $0xa0] sm:$0xff] %v3200
        %3233 = vst [vmem:[#allocation2 + $0xa8] sm:$0xff] %v3201
        %3234 = vst [vmem:[#allocation2 + $0xb0] sm:$0xff] %v3202
        %3235 = vst [vmem:[#allocation2 + $0xb8] sm:$0xff] %v3203
        %3236 = vst [vmem:[#allocation2 + $0xc0] sm:$0xff] %v3204
        %3237 = vst [vmem:[#allocation2 + $0xc8] sm:$0xff] %v3205
        %3238 = vst [vmem:[#allocation2 + $0xd0] sm:$0xff] %v3206
        %3239 = vst [vmem:[#allocation2 + $0xd8] sm:$0xff] %v3207
        %3240 = vst [vmem:[#allocation2 + $0xe0] sm:$0xff] %v3208
        %3241 = vst [vmem:[#allocation2 + $0xe8] sm:$0xff] %v3209
        %3242 = vst [vmem:[#allocation2 + $0xf0] sm:$0xff] %v3210
        %3243 = vst [vmem:[#allocation2 + $0xf8] sm:$0xff] %v3211
        %v3244 = vld [vmem:[%s2031] sm:$0xe]
        %v3245 = vld [vmem:[%s2031 + $0x4] sm:$0xf]
        %v3246 = vld [vmem:[%s2031 + $0x8] sm:$0x1]
        %v3247 = vld [vmem:[%s2031 + $0xc] sm:$0xe]
        %v3248 = vld [vmem:[%s2031 + $0x10] sm:$0xf]
        %v3249 = vld [vmem:[%s2031 + $0x14] sm:$0x1]
        %v3250 = vld [vmem:[%s2031 + $0x18] sm:$0xe]
        %v3251 = vld [vmem:[%s2031 + $0x1c] sm:$0xf]
        %v3252 = vld [vmem:[%s2031 + $0x20] sm:$0x1]
        %v3253 = vld [vmem:[%s2031 + $0x24] sm:$0xe]
        %v3254 = vld [vmem:[%s2031 + $0x28] sm:$0xf]
        %v3255 = vld [vmem:[%s2031 + $0x2c] sm:$0x1]
        %v3256 = vld [vmem:[%s2031 + $0x30] sm:$0xe]
        %v3257 = vld [vmem:[%s2031 + $0x34] sm:$0xf]
        %v3258 = vld [vmem:[%s2031 + $0x38] sm:$0x1]
        %v3259 = vld [vmem:[%s2031 + $0x3c] sm:$0xe]
        %v3260 = vld [vmem:[%s2031 + $0x40] sm:$0xf]
        %v3261 = vld [vmem:[%s2031 + $0x44] sm:$0x1]
        %v3262 = vld [vmem:[%s2031 + $0x48] sm:$0xe]
        %v3263 = vld [vmem:[%s2031 + $0x4c] sm:$0xf]
        %v3264 = vld [vmem:[%s2031 + $0x50] sm:$0x1]
        %v3265 = vld [vmem:[%s2031 + $0x54] sm:$0xe]
        %v3266 = vld [vmem:[%s2031 + $0x58] sm:$0xf]
        %v3267 = vld [vmem:[%s2031 + $0x5c] sm:$0x1]
        %v3268 = vld [vmem:[%s2031 + $0x60] sm:$0xe]
        %v3269 = vld [vmem:[%s2031 + $0x64] sm:$0xf]
        %v3270 = vld [vmem:[%s2031 + $0x68] sm:$0x1]
        %v3271 = vld [vmem:[%s2031 + $0x6c] sm:$0xe]
        %v3272 = vld [vmem:[%s2031 + $0x70] sm:$0xf]
        %v3273 = vld [vmem:[%s2031 + $0x74] sm:$0x1]
        %v3274 = vld [vmem:[%s2031 + $0x78] sm:$0xe]
        %v3275 = vld [vmem:[%s2031 + $0x7c] sm:$0xf]
        %v3276 = vld [vmem:[%s2031 + $0x80] sm:$0x1]
        %v3277 = vld [vmem:[%s2031 + $0x84] sm:$0xe]
        %v3278 = vld [vmem:[%s2031 + $0x88] sm:$0xf]
        %v3279 = vld [vmem:[%s2031 + $0x8c] sm:$0x1]
        %v3280 = vld [vmem:[%s2031 + $0x90] sm:$0xe]
        %v3281 = vld [vmem:[%s2031 + $0x94] sm:$0xf]
        %v3282 = vld [vmem:[%s2031 + $0x98] sm:$0x1]
        %v3283 = vld [vmem:[%s2031 + $0x9c] sm:$0xe]
        %v3284 = vld [vmem:[%s2031 + $0xa0] sm:$0xf]
        %v3285 = vld [vmem:[%s2031 + $0xa4] sm:$0x1]
        %v3286 = vld [vmem:[%s2031 + $0xa8] sm:$0xe]
        %v3287 = vld [vmem:[%s2031 + $0xac] sm:$0xf]
        %v3288 = vld [vmem:[%s2031 + $0xb0] sm:$0x1]
        %v3289 = vld [vmem:[%s2031 + $0xb4] sm:$0xe]
        %v3290 = vld [vmem:[%s2031 + $0xb8] sm:$0xf]
        %v3291 = vld [vmem:[%s2031 + $0xbc] sm:$0x1]
        %v3340 = vrot.slane %v3244, 5
        %v3341 = vrot.slane %v3340, 4
        %v3342 = vrot.slane %v3245, 5
        %v3343 = vsel %vm1560, %v3341, %v3342
        %v3344 = vrot.slane %v3342, 4
        %v3345 = vrot.slane %v3246, 5
        %v3346 = vsel %vm1560, %v3344, %v3345
        %v3347 = vrot.slane %v3247, 5
        %v3348 = vrot.slane %v3347, 4
        %v3349 = vrot.slane %v3248, 5
        %v3350 = vsel %vm1560, %v3348, %v3349
        %v3351 = vrot.slane %v3349, 4
        %v3352 = vrot.slane %v3249, 5
        %v3353 = vsel %vm1560, %v3351, %v3352
        %v3354 = vrot.slane %v3250, 5
        %v3355 = vrot.slane %v3354, 4
        %v3356 = vrot.slane %v3251, 5
        %v3357 = vsel %vm1560, %v3355, %v3356
        %v3358 = vrot.slane %v3356, 4
        %v3359 = vrot.slane %v3252, 5
        %v3360 = vsel %vm1560, %v3358, %v3359
        %v3361 = vrot.slane %v3253, 5
        %v3362 = vrot.slane %v3361, 4
        %v3363 = vrot.slane %v3254, 5
        %v3364 = vsel %vm1560, %v3362, %v3363
        %v3365 = vrot.slane %v3363, 4
        %v3366 = vrot.slane %v3255, 5
        %v3367 = vsel %vm1560, %v3365, %v3366
        %v3368 = vrot.slane %v3256, 5
        %v3369 = vrot.slane %v3368, 4
        %v3370 = vrot.slane %v3257, 5
        %v3371 = vsel %vm1560, %v3369, %v3370
        %v3372 = vrot.slane %v3370, 4
        %v3373 = vrot.slane %v3258, 5
        %v3374 = vsel %vm1560, %v3372, %v3373
        %v3375 = vrot.slane %v3259, 5
        %v3376 = vrot.slane %v3375, 4
        %v3377 = vrot.slane %v3260, 5
        %v3378 = vsel %vm1560, %v3376, %v3377
        %v3379 = vrot.slane %v3377, 4
        %v3380 = vrot.slane %v3261, 5
        %v3381 = vsel %vm1560, %v3379, %v3380
        %v3382 = vrot.slane %v3262, 5
        %v3383 = vrot.slane %v3382, 4
        %v3384 = vrot.slane %v3263, 5
        %v3385 = vsel %vm1560, %v3383, %v3384
        %v3386 = vrot.slane %v3384, 4
        %v3387 = vrot.slane %v3264, 5
        %v3388 = vsel %vm1560, %v3386, %v3387
        %v3389 = vrot.slane %v3265, 5
        %v3390 = vrot.slane %v3389, 4
        %v3391 = vrot.slane %v3266, 5
        %v3392 = vsel %vm1560, %v3390, %v3391
        %v3393 = vrot.slane %v3391, 4
        %v3394 = vrot.slane %v3267, 5
        %v3395 = vsel %vm1560, %v3393, %v3394
        %v3396 = vrot.slane %v3268, 5
        %v3397 = vrot.slane %v3396, 4
        %v3398 = vrot.slane %v3269, 5
        %v3399 = vsel %vm1560, %v3397, %v3398
        %v3400 = vrot.slane %v3398, 4
        %v3401 = vrot.slane %v3270, 5
        %v3402 = vsel %vm1560, %v3400, %v3401
        %v3403 = vrot.slane %v3271, 5
        %v3404 = vrot.slane %v3403, 4
        %v3405 = vrot.slane %v3272, 5
        %v3406 = vsel %vm1560, %v3404, %v3405
        %v3407 = vrot.slane %v3405, 4
        %v3408 = vrot.slane %v3273, 5
        %v3409 = vsel %vm1560, %v3407, %v3408
        %v3410 = vrot.slane %v3274, 5
        %v3411 = vrot.slane %v3410, 4
        %v3412 = vrot.slane %v3275, 5
        %v3413 = vsel %vm1560, %v3411, %v3412
        %v3414 = vrot.slane %v3412, 4
        %v3415 = vrot.slane %v3276, 5
        %v3416 = vsel %vm1560, %v3414, %v3415
        %v3417 = vrot.slane %v3277, 5
        %v3418 = vrot.slane %v3417, 4
        %v3419 = vrot.slane %v3278, 5
        %v3420 = vsel %vm1560, %v3418, %v3419
        %v3421 = vrot.slane %v3419, 4
        %v3422 = vrot.slane %v3279, 5
        %v3423 = vsel %vm1560, %v3421, %v3422
        %v3424 = vrot.slane %v3280, 5
        %v3425 = vrot.slane %v3424, 4
        %v3426 = vrot.slane %v3281, 5
        %v3427 = vsel %vm1560, %v3425, %v3426
        %v3428 = vrot.slane %v3426, 4
        %v3429 = vrot.slane %v3282, 5
        %v3430 = vsel %vm1560, %v3428, %v3429
        %v3431 = vrot.slane %v3283, 5
        %v3432 = vrot.slane %v3431, 4
        %v3433 = vrot.slane %v3284, 5
        %v3434 = vsel %vm1560, %v3432, %v3433
        %v3435 = vrot.slane %v3433, 4
        %v3436 = vrot.slane %v3285, 5
        %v3437 = vsel %vm1560, %v3435, %v3436
        %v3438 = vrot.slane %v3286, 5
        %v3439 = vrot.slane %v3438, 4
        %v3440 = vrot.slane %v3287, 5
        %v3441 = vsel %vm1560, %v3439, %v3440
        %v3442 = vrot.slane %v3440, 4
        %v3443 = vrot.slane %v3288, 5
        %v3444 = vsel %vm1560, %v3442, %v3443
        %v3445 = vrot.slane %v3289, 5
        %v3446 = vrot.slane %v3445, 4
        %v3447 = vrot.slane %v3290, 5
        %v3448 = vsel %vm1560, %v3446, %v3447
        %v3449 = vrot.slane %v3447, 4
        %v3450 = vrot.slane %v3291, 5
        %v3451 = vsel %vm1560, %v3449, %v3450
        %v3452 = vld [vmem:[#allocation2] sm:$0xff]
        %v3453 = vld [vmem:[#allocation2 + $0x8] sm:$0xff]
        %v3454 = vld [vmem:[#allocation2 + $0x10] sm:$0xff]
        %v3455 = vld [vmem:[#allocation2 + $0x18] sm:$0xff]
        %v3456 = vld [vmem:[#allocation2 + $0x20] sm:$0xff]
        %v3457 = vld [vmem:[#allocation2 + $0x28] sm:$0xff]
        %v3458 = vld [vmem:[#allocation2 + $0x30] sm:$0xff]
        %v3459 = vld [vmem:[#allocation2 + $0x38] sm:$0xff]
        %v3460 = vld [vmem:[#allocation2 + $0x40] sm:$0xff]
        %v3461 = vld [vmem:[#allocation2 + $0x48] sm:$0xff]
        %v3462 = vld [vmem:[#allocation2 + $0x50] sm:$0xff]
        %v3463 = vld [vmem:[#allocation2 + $0x58] sm:$0xff]
        %v3464 = vld [vmem:[#allocation2 + $0x60] sm:$0xff]
        %v3465 = vld [vmem:[#allocation2 + $0x68] sm:$0xff]
        %v3466 = vld [vmem:[#allocation2 + $0x70] sm:$0xff]
        %v3467 = vld [vmem:[#allocation2 + $0x78] sm:$0xff]
        %v3468 = vld [vmem:[#allocation2 + $0x80] sm:$0xff]
        %v3469 = vld [vmem:[#allocation2 + $0x88] sm:$0xff]
        %v3470 = vld [vmem:[#allocation2 + $0x90] sm:$0xff]
        %v3471 = vld [vmem:[#allocation2 + $0x98] sm:$0xff]
        %v3472 = vld [vmem:[#allocation2 + $0xa0] sm:$0xff]
        %v3473 = vld [vmem:[#allocation2 + $0xa8] sm:$0xff]
        %v3474 = vld [vmem:[#allocation2 + $0xb0] sm:$0xff]
        %v3475 = vld [vmem:[#allocation2 + $0xb8] sm:$0xff]
        %v3476 = vld [vmem:[#allocation2 + $0xc0] sm:$0xff]
        %v3477 = vld [vmem:[#allocation2 + $0xc8] sm:$0xff]
        %v3478 = vld [vmem:[#allocation2 + $0xd0] sm:$0xff]
        %v3479 = vld [vmem:[#allocation2 + $0xd8] sm:$0xff]
        %v3480 = vld [vmem:[#allocation2 + $0xe0] sm:$0xff]
        %v3481 = vld [vmem:[#allocation2 + $0xe8] sm:$0xff]
        %v3482 = vld [vmem:[#allocation2 + $0xf0] sm:$0xff]
        %v3483 = vld [vmem:[#allocation2 + $0xf8] sm:$0xff]
        %s3484 = scalar_lea.vmem %s212, 10
        %v3485 = vld [vmem:[%s3484] sm:$0x3]
        %v3486 = vunpack.c.l.b16 %v3343
        %v3487 = vunpack.c.l.b16 %v3346
        %v3488 = vunpack.c.l.b16 %v3350
        %v3489 = vunpack.c.l.b16 %v3353
        %v3490 = vunpack.c.l.b16 %v3357
        %v3491 = vunpack.c.l.b16 %v3360
        %v3492 = vunpack.c.l.b16 %v3364
        %v3493 = vunpack.c.l.b16 %v3367
        %v3494 = vunpack.c.l.b16 %v3371
        %v3495 = vunpack.c.l.b16 %v3374
        %v3496 = vunpack.c.l.b16 %v3378
        %v3497 = vunpack.c.l.b16 %v3381
        %v3498 = vunpack.c.l.b16 %v3385
        %v3499 = vunpack.c.l.b16 %v3388
        %v3500 = vunpack.c.l.b16 %v3392
        %v3501 = vunpack.c.l.b16 %v3395
        %v3502 = vunpack.c.l.b16 %v3399
        %v3503 = vunpack.c.l.b16 %v3402
        %v3504 = vunpack.c.l.b16 %v3406
        %v3505 = vunpack.c.l.b16 %v3409
        %v3506 = vunpack.c.l.b16 %v3413
        %v3507 = vunpack.c.l.b16 %v3416
        %v3508 = vunpack.c.l.b16 %v3420
        %v3509 = vunpack.c.l.b16 %v3423
        %v3510 = vunpack.c.l.b16 %v3427
        %v3511 = vunpack.c.l.b16 %v3430
        %v3512 = vunpack.c.l.b16 %v3434
        %v3513 = vunpack.c.l.b16 %v3437
        %v3514 = vunpack.c.l.b16 %v3441
        %v3515 = vunpack.c.l.b16 %v3444
        %v3516 = vunpack.c.l.b16 %v3448
        %v3517 = vunpack.c.l.b16 %v3451
        %v3518 = vpack.c.b16 %v3487, %v3486
        %v3519 = vpack.c.b16 %v3489, %v3488
        %v3520 = vpack.c.b16 %v3491, %v3490
        %v3521 = vpack.c.b16 %v3493, %v3492
        %v3522 = vpack.c.b16 %v3495, %v3494
        %v3523 = vpack.c.b16 %v3497, %v3496
        %v3524 = vpack.c.b16 %v3499, %v3498
        %v3525 = vpack.c.b16 %v3501, %v3500
        %v3526 = vpack.c.b16 %v3503, %v3502
        %v3527 = vpack.c.b16 %v3505, %v3504
        %v3528 = vpack.c.b16 %v3507, %v3506
        %v3529 = vpack.c.b16 %v3509, %v3508
        %v3530 = vpack.c.b16 %v3511, %v3510
        %v3531 = vpack.c.b16 %v3513, %v3512
        %v3532 = vpack.c.b16 %v3515, %v3514
        %v3533 = vpack.c.b16 %v3517, %v3516
        %v3535 = vsel %vm391, %v3518, 0
        %v3538 = vsel %vm391, %v3519, 0
        %v3541 = vsel %vm391, %v3520, 0
        %v3544 = vsel %vm391, %v3521, 0
        %v3547 = vsel %vm391, %v3522, 0
        %v3550 = vsel %vm391, %v3523, 0
        %v3553 = vsel %vm391, %v3524, 0
        %v3556 = vsel %vm391, %v3525, 0
        %v3559 = vsel %vm391, %v3526, 0
        %v3562 = vsel %vm391, %v3527, 0
        %v3565 = vsel %vm391, %v3528, 0
        %v3568 = vsel %vm391, %v3529, 0
        %v3571 = vsel %vm391, %v3530, 0
        %v3574 = vsel %vm391, %v3531, 0
        %v3577 = vsel %vm391, %v3532, 0
        %v3580 = vsel %vm391, %v3533, 0
        %v3583 = vsel %vm440, %v3485, 0
        %3585 = vmatprep.subr.bf16.mxu0 0
        %3586 = vmatpush1.bf16.msra.mxu0 0
        %3587 = vmatprep.subr.bf16.mxu0 0
        %3588 = vmatpush1.bf16.msra.mxu0 0
        %3589 = vmatprep.subr.bf16.mxu0 0
        %3590 = vmatpush1.bf16.msra.mxu0 0
        %3591 = vmatprep.subr.bf16.mxu0 0
        %3592 = vmatpush1.bf16.msra.mxu0 0
        %3593 = vmatprep.subr.bf16.mxu0 0
        %3594 = vmatpush1.bf16.msra.mxu0 0
        %3595 = vmatprep.subr.bf16.mxu0 0
        %3596 = vmatpush1.bf16.msra.mxu0 0
        %3597 = vmatprep.subr.bf16.mxu0 0
        %3598 = vmatpush1.bf16.msra.mxu0 0
        %3599 = vmatprep.subr.bf16.mxu0 0
        %3600 = vmatpush1.bf16.msra.mxu0 %v3583
        %3601 = vmatprep.subr.bf16.mxu0 0
        %3602 = vmatpush2.bf16.msra.mxu0 0
        %3603 = vmatprep.subr.bf16.mxu0 0
        %3604 = vmatpush2.bf16.msra.mxu0 0
        %3605 = vmatprep.subr.bf16.mxu0 0
        %3606 = vmatpush2.bf16.msra.mxu0 0
        %3607 = vmatprep.subr.bf16.mxu0 0
        %3608 = vmatpush2.bf16.msra.mxu0 0
        %3609 = vmatprep.subr.bf16.mxu0 0
        %3610 = vmatpush2.bf16.msra.mxu0 0
        %3611 = vmatprep.subr.bf16.mxu0 0
        %3612 = vmatpush2.bf16.msra.mxu0 0
        %3613 = vmatprep.subr.bf16.mxu0 0
        %3614 = vmatpush2.bf16.msra.mxu0 0
        %3615 = vmatprep.subr.bf16.mxu0 0
        %3616 = vmatpush2.bf16.msra.mxu0 0
        %3617 = vmatprep.mubr.bf16.mxu0 0
        %3618 = vmatmul.mubr.bf16.gmra.mxu0 %v3535
        %v3619 = vpop.f32.mrf.mxu0
        %v3620 = vadd.f32 0.0, %v3619
        %v3621 = vpop.f32.mrf.mxu0
        %v3622 = vpop.f32.mrf.mxu0
        %v3623 = vadd.f32 0.0, %v3622
        %v3624 = vpop.f32.mrf.mxu0
        %3625 = vmatprep.mubr.bf16.mxu0 0
        %3626 = vmatmul.mubr.bf16.gmra.mxu0 %v3538
        %v3627 = vpop.f32.mrf.mxu0
        %v3628 = vadd.f32 0.0, %v3627
        %v3629 = vpop.f32.mrf.mxu0
        %v3630 = vpop.f32.mrf.mxu0
        %v3631 = vadd.f32 0.0, %v3630
        %v3632 = vpop.f32.mrf.mxu0
        %3633 = vmatprep.mubr.bf16.mxu0 0
        %3634 = vmatmul.mubr.bf16.gmra.mxu0 %v3541
        %v3635 = vpop.f32.mrf.mxu0
        %v3636 = vadd.f32 0.0, %v3635
        %v3637 = vpop.f32.mrf.mxu0
        %v3638 = vpop.f32.mrf.mxu0
        %v3639 = vadd.f32 0.0, %v3638
        %v3640 = vpop.f32.mrf.mxu0
        %3641 = vmatprep.mubr.bf16.mxu0 0
        %3642 = vmatmul.mubr.bf16.gmra.mxu0 %v3544
        %v3643 = vpop.f32.mrf.mxu0
        %v3644 = vadd.f32 0.0, %v3643
        %v3645 = vpop.f32.mrf.mxu0
        %v3646 = vpop.f32.mrf.mxu0
        %v3647 = vadd.f32 0.0, %v3646
        %v3648 = vpop.f32.mrf.mxu0
        %3649 = vmatprep.mubr.bf16.mxu0 0
        %3650 = vmatmul.mubr.bf16.gmra.mxu0 %v3547
        %v3651 = vpop.f32.mrf.mxu0
        %v3652 = vadd.f32 0.0, %v3651
        %v3653 = vpop.f32.mrf.mxu0
        %v3654 = vpop.f32.mrf.mxu0
        %v3655 = vadd.f32 0.0, %v3654
        %v3656 = vpop.f32.mrf.mxu0
        %3657 = vmatprep.mubr.bf16.mxu0 0
        %3658 = vmatmul.mubr.bf16.gmra.mxu0 %v3550
        %v3659 = vpop.f32.mrf.mxu0
        %v3660 = vadd.f32 0.0, %v3659
        %v3661 = vpop.f32.mrf.mxu0
        %v3662 = vpop.f32.mrf.mxu0
        %v3663 = vadd.f32 0.0, %v3662
        %v3664 = vpop.f32.mrf.mxu0
        %3665 = vmatprep.mubr.bf16.mxu0 0
        %3666 = vmatmul.mubr.bf16.gmra.mxu0 %v3553
        %v3667 = vpop.f32.mrf.mxu0
        %v3668 = vadd.f32 0.0, %v3667
        %v3669 = vpop.f32.mrf.mxu0
        %v3670 = vpop.f32.mrf.mxu0
        %v3671 = vadd.f32 0.0, %v3670
        %v3672 = vpop.f32.mrf.mxu0
        %3673 = vmatprep.mubr.bf16.mxu0 0
        %3674 = vmatmul.mubr.bf16.gmra.mxu0 %v3556
        %v3675 = vpop.f32.mrf.mxu0
        %v3676 = vadd.f32 0.0, %v3675
        %v3677 = vpop.f32.mrf.mxu0
        %v3678 = vpop.f32.mrf.mxu0
        %v3679 = vadd.f32 0.0, %v3678
        %v3680 = vpop.f32.mrf.mxu0
        %3681 = vmatprep.mubr.bf16.mxu0 0
        %3682 = vmatmul.mubr.bf16.gmra.mxu0 %v3559
        %v3683 = vpop.f32.mrf.mxu0
        %v3684 = vadd.f32 0.0, %v3683
        %v3685 = vpop.f32.mrf.mxu0
        %v3686 = vpop.f32.mrf.mxu0
        %v3687 = vadd.f32 0.0, %v3686
        %v3688 = vpop.f32.mrf.mxu0
        %3689 = vmatprep.mubr.bf16.mxu0 0
        %3690 = vmatmul.mubr.bf16.gmra.mxu0 %v3562
        %v3691 = vpop.f32.mrf.mxu0
        %v3692 = vadd.f32 0.0, %v3691
        %v3693 = vpop.f32.mrf.mxu0
        %v3694 = vpop.f32.mrf.mxu0
        %v3695 = vadd.f32 0.0, %v3694
        %v3696 = vpop.f32.mrf.mxu0
        %3697 = vmatprep.mubr.bf16.mxu0 0
        %3698 = vmatmul.mubr.bf16.gmra.mxu0 %v3565
        %v3699 = vpop.f32.mrf.mxu0
        %v3700 = vadd.f32 0.0, %v3699
        %v3701 = vpop.f32.mrf.mxu0
        %v3702 = vpop.f32.mrf.mxu0
        %v3703 = vadd.f32 0.0, %v3702
        %v3704 = vpop.f32.mrf.mxu0
        %3705 = vmatprep.mubr.bf16.mxu0 0
        %3706 = vmatmul.mubr.bf16.gmra.mxu0 %v3568
        %v3707 = vpop.f32.mrf.mxu0
        %v3708 = vadd.f32 0.0, %v3707
        %v3709 = vpop.f32.mrf.mxu0
        %v3710 = vpop.f32.mrf.mxu0
        %v3711 = vadd.f32 0.0, %v3710
        %v3712 = vpop.f32.mrf.mxu0
        %3713 = vmatprep.mubr.bf16.mxu0 0
        %3714 = vmatmul.mubr.bf16.gmra.mxu0 %v3571
        %v3715 = vpop.f32.mrf.mxu0
        %v3716 = vadd.f32 0.0, %v3715
        %v3717 = vpop.f32.mrf.mxu0
        %v3718 = vpop.f32.mrf.mxu0
        %v3719 = vadd.f32 0.0, %v3718
        %v3720 = vpop.f32.mrf.mxu0
        %3721 = vmatprep.mubr.bf16.mxu0 0
        %3722 = vmatmul.mubr.bf16.gmra.mxu0 %v3574
        %v3723 = vpop.f32.mrf.mxu0
        %v3724 = vadd.f32 0.0, %v3723
        %v3725 = vpop.f32.mrf.mxu0
        %v3726 = vpop.f32.mrf.mxu0
        %v3727 = vadd.f32 0.0, %v3726
        %v3728 = vpop.f32.mrf.mxu0
        %3729 = vmatprep.mubr.bf16.mxu0 0
        %3730 = vmatmul.mubr.bf16.gmra.mxu0 %v3577
        %v3731 = vpop.f32.mrf.mxu0
        %v3732 = vadd.f32 0.0, %v3731
        %v3733 = vpop.f32.mrf.mxu0
        %v3734 = vpop.f32.mrf.mxu0
        %v3735 = vadd.f32 0.0, %v3734
        %v3736 = vpop.f32.mrf.mxu0
        %3737 = vmatprep.mubr.bf16.mxu0 0
        %3738 = vmatmul.mubr.bf16.gmra.mxu0 %v3580
        %v3739 = vpop.f32.mrf.mxu0
        %v3740 = vadd.f32 0.0, %v3739
        %v3741 = vpop.f32.mrf.mxu0
        %v3742 = vpop.f32.mrf.mxu0
        %v3743 = vadd.f32 0.0, %v3742
        %v3744 = vpop.f32.mrf.mxu0
        %3745 = vdwg.mxu0
        %v3746 = vadd.f32 %v3452, %v3620
        %v3747 = vadd.f32 %v3453, %v3623
        %v3748 = vadd.f32 %v3454, %v3628
        %v3749 = vadd.f32 %v3455, %v3631
        %v3750 = vadd.f32 %v3456, %v3636
        %v3751 = vadd.f32 %v3457, %v3639
        %v3752 = vadd.f32 %v3458, %v3644
        %v3753 = vadd.f32 %v3459, %v3647
        %v3754 = vadd.f32 %v3460, %v3652
        %v3755 = vadd.f32 %v3461, %v3655
        %v3756 = vadd.f32 %v3462, %v3660
        %v3757 = vadd.f32 %v3463, %v3663
        %v3758 = vadd.f32 %v3464, %v3668
        %v3759 = vadd.f32 %v3465, %v3671
        %v3760 = vadd.f32 %v3466, %v3676
        %v3761 = vadd.f32 %v3467, %v3679
        %v3762 = vadd.f32 %v3468, %v3684
        %v3763 = vadd.f32 %v3469, %v3687
        %v3764 = vadd.f32 %v3470, %v3692
        %v3765 = vadd.f32 %v3471, %v3695
        %v3766 = vadd.f32 %v3472, %v3700
        %v3767 = vadd.f32 %v3473, %v3703
        %v3768 = vadd.f32 %v3474, %v3708
        %v3769 = vadd.f32 %v3475, %v3711
        %v3770 = vadd.f32 %v3476, %v3716
        %v3771 = vadd.f32 %v3477, %v3719
        %v3772 = vadd.f32 %v3478, %v3724
        %v3773 = vadd.f32 %v3479, %v3727
        %v3774 = vadd.f32 %v3480, %v3732
        %v3775 = vadd.f32 %v3481, %v3735
        %v3776 = vadd.f32 %v3482, %v3740
        %v3777 = vadd.f32 %v3483, %v3743
        %3778 = vst [vmem:[#allocation2] sm:$0xff] %v3746
        %3779 = vst [vmem:[#allocation2 + $0x8] sm:$0xff] %v3747
        %3780 = vst [vmem:[#allocation2 + $0x10] sm:$0xff] %v3748
        %3781 = vst [vmem:[#allocation2 + $0x18] sm:$0xff] %v3749
        %3782 = vst [vmem:[#allocation2 + $0x20] sm:$0xff] %v3750
        %3783 = vst [vmem:[#allocation2 + $0x28] sm:$0xff] %v3751
        %3784 = vst [vmem:[#allocation2 + $0x30] sm:$0xff] %v3752
        %3785 = vst [vmem:[#allocation2 + $0x38] sm:$0xff] %v3753
        %3786 = vst [vmem:[#allocation2 + $0x40] sm:$0xff] %v3754
        %3787 = vst [vmem:[#allocation2 + $0x48] sm:$0xff] %v3755
        %3788 = vst [vmem:[#allocation2 + $0x50] sm:$0xff] %v3756
        %3789 = vst [vmem:[#allocation2 + $0x58] sm:$0xff] %v3757
        %3790 = vst [vmem:[#allocation2 + $0x60] sm:$0xff] %v3758
        %3791 = vst [vmem:[#allocation2 + $0x68] sm:$0xff] %v3759
        %3792 = vst [vmem:[#allocation2 + $0x70] sm:$0xff] %v3760
        %3793 = vst [vmem:[#allocation2 + $0x78] sm:$0xff] %v3761
        %3794 = vst [vmem:[#allocation2 + $0x80] sm:$0xff] %v3762
        %3795 = vst [vmem:[#allocation2 + $0x88] sm:$0xff] %v3763
        %3796 = vst [vmem:[#allocation2 + $0x90] sm:$0xff] %v3764
        %3797 = vst [vmem:[#allocation2 + $0x98] sm:$0xff] %v3765
        %3798 = vst [vmem:[#allocation2 + $0xa0] sm:$0xff] %v3766
        %3799 = vst [vmem:[#allocation2 + $0xa8] sm:$0xff] %v3767
        %3800 = vst [vmem:[#allocation2 + $0xb0] sm:$0xff] %v3768
        %3801 = vst [vmem:[#allocation2 + $0xb8] sm:$0xff] %v3769
        %3802 = vst [vmem:[#allocation2 + $0xc0] sm:$0xff] %v3770
        %3803 = vst [vmem:[#allocation2 + $0xc8] sm:$0xff] %v3771
        %3804 = vst [vmem:[#allocation2 + $0xd0] sm:$0xff] %v3772
        %3805 = vst [vmem:[#allocation2 + $0xd8] sm:$0xff] %v3773
        %3806 = vst [vmem:[#allocation2 + $0xe0] sm:$0xff] %v3774
        %3807 = vst [vmem:[#allocation2 + $0xe8] sm:$0xff] %v3775
        %3808 = vst [vmem:[#allocation2 + $0xf0] sm:$0xff] %v3776
        %3809 = vst [vmem:[#allocation2 + $0xf8] sm:$0xff] %v3777
        %s3810 = scalar_lea.vmem %s208, 24
        %v3811 = vld [vmem:[%s3810] sm:$0xf]
        %v3812 = vld [vmem:[%s3810 + $0x4] sm:$0xf]
        %v3813 = vld [vmem:[%s3810 + $0xc] sm:$0xf]
        %v3814 = vld [vmem:[%s3810 + $0x10] sm:$0xf]
        %v3815 = vld [vmem:[%s3810 + $0x18] sm:$0xf]
        %v3816 = vld [vmem:[%s3810 + $0x1c] sm:$0xf]
        %v3817 = vld [vmem:[%s3810 + $0x24] sm:$0xf]
        %v3818 = vld [vmem:[%s3810 + $0x28] sm:$0xf]
        %v3819 = vld [vmem:[%s3810 + $0x30] sm:$0xf]
        %v3820 = vld [vmem:[%s3810 + $0x34] sm:$0xf]
        %v3821 = vld [vmem:[%s3810 + $0x3c] sm:$0xf]
        %v3822 = vld [vmem:[%s3810 + $0x40] sm:$0xf]
        %v3823 = vld [vmem:[%s3810 + $0x48] sm:$0xf]
        %v3824 = vld [vmem:[%s3810 + $0x4c] sm:$0xf]
        %v3825 = vld [vmem:[%s3810 + $0x54] sm:$0xf]
        %v3826 = vld [vmem:[%s3810 + $0x58] sm:$0xf]
        %v3827 = vld [vmem:[%s3810 + $0x60] sm:$0xf]
        %v3828 = vld [vmem:[%s3810 + $0x64] sm:$0xf]
        %v3829 = vld [vmem:[%s3810 + $0x6c] sm:$0xf]
        %v3830 = vld [vmem:[%s3810 + $0x70] sm:$0xf]
        %v3831 = vld [vmem:[%s3810 + $0x78] sm:$0xf]
        %v3832 = vld [vmem:[%s3810 + $0x7c] sm:$0xf]
        %v3833 = vld [vmem:[%s3810 + $0x84] sm:$0xf]
        %v3834 = vld [vmem:[%s3810 + $0x88] sm:$0xf]
        %v3835 = vld [vmem:[%s3810 + $0x90] sm:$0xf]
        %v3836 = vld [vmem:[%s3810 + $0x94] sm:$0xf]
        %v3837 = vld [vmem:[%s3810 + $0x9c] sm:$0xf]
        %v3838 = vld [vmem:[%s3810 + $0xa0] sm:$0xf]
        %v3839 = vld [vmem:[%s3810 + $0xa8] sm:$0xf]
        %v3840 = vld [vmem:[%s3810 + $0xac] sm:$0xf]
        %v3841 = vld [vmem:[%s3810 + $0xb4] sm:$0xf]
        %v3842 = vld [vmem:[%s3810 + $0xb8] sm:$0xf]
        %v3843 = vld [vmem:[#allocation2] sm:$0xff]
        %v3844 = vld [vmem:[#allocation2 + $0x8] sm:$0xff]
        %v3845 = vld [vmem:[#allocation2 + $0x10] sm:$0xff]
        %v3846 = vld [vmem:[#allocation2 + $0x18] sm:$0xff]
        %v3847 = vld [vmem:[#allocation2 + $0x20] sm:$0xff]
        %v3848 = vld [vmem:[#allocation2 + $0x28] sm:$0xff]
        %v3849 = vld [vmem:[#allocation2 + $0x30] sm:$0xff]
        %v3850 = vld [vmem:[#allocation2 + $0x38] sm:$0xff]
        %v3851 = vld [vmem:[#allocation2 + $0x40] sm:$0xff]
        %v3852 = vld [vmem:[#allocation2 + $0x48] sm:$0xff]
        %v3853 = vld [vmem:[#allocation2 + $0x50] sm:$0xff]
        %v3854 = vld [vmem:[#allocation2 + $0x58] sm:$0xff]
        %v3855 = vld [vmem:[#allocation2 + $0x60] sm:$0xff]
        %v3856 = vld [vmem:[#allocation2 + $0x68] sm:$0xff]
        %v3857 = vld [vmem:[#allocation2 + $0x70] sm:$0xff]
        %v3858 = vld [vmem:[#allocation2 + $0x78] sm:$0xff]
        %v3859 = vld [vmem:[#allocation2 + $0x80] sm:$0xff]
        %v3860 = vld [vmem:[#allocation2 + $0x88] sm:$0xff]
        %v3861 = vld [vmem:[#allocation2 + $0x90] sm:$0xff]
        %v3862 = vld [vmem:[#allocation2 + $0x98] sm:$0xff]
        %v3863 = vld [vmem:[#allocation2 + $0xa0] sm:$0xff]
        %v3864 = vld [vmem:[#allocation2 + $0xa8] sm:$0xff]
        %v3865 = vld [vmem:[#allocation2 + $0xb0] sm:$0xff]
        %v3866 = vld [vmem:[#allocation2 + $0xb8] sm:$0xff]
        %v3867 = vld [vmem:[#allocation2 + $0xc0] sm:$0xff]
        %v3868 = vld [vmem:[#allocation2 + $0xc8] sm:$0xff]
        %v3869 = vld [vmem:[#allocation2 + $0xd0] sm:$0xff]
        %v3870 = vld [vmem:[#allocation2 + $0xd8] sm:$0xff]
        %v3871 = vld [vmem:[#allocation2 + $0xe0] sm:$0xff]
        %v3872 = vld [vmem:[#allocation2 + $0xe8] sm:$0xff]
        %v3873 = vld [vmem:[#allocation2 + $0xf0] sm:$0xff]
        %v3874 = vld [vmem:[#allocation2 + $0xf8] sm:$0xff]
        %s3875 = scalar_lea.vmem %s212, 12
        %v3876 = vld [vmem:[%s3875] sm:$0x3]
        %v3909 = vunpack.c.l.b16 %v3811
        %v3910 = vunpack.c.l.b16 %v3812
        %v3911 = vunpack.c.l.b16 %v3813
        %v3912 = vunpack.c.l.b16 %v3814
        %v3913 = vunpack.c.l.b16 %v3815
        %v3914 = vunpack.c.l.b16 %v3816
        %v3915 = vunpack.c.l.b16 %v3817
        %v3916 = vunpack.c.l.b16 %v3818
        %v3917 = vunpack.c.l.b16 %v3819
        %v3918 = vunpack.c.l.b16 %v3820
        %v3919 = vunpack.c.l.b16 %v3821
        %v3920 = vunpack.c.l.b16 %v3822
        %v3921 = vunpack.c.l.b16 %v3823
        %v3922 = vunpack.c.l.b16 %v3824
        %v3923 = vunpack.c.l.b16 %v3825
        %v3924 = vunpack.c.l.b16 %v3826
        %v3925 = vunpack.c.l.b16 %v3827
        %v3926 = vunpack.c.l.b16 %v3828
        %v3927 = vunpack.c.l.b16 %v3829
        %v3928 = vunpack.c.l.b16 %v3830
        %v3929 = vunpack.c.l.b16 %v3831
        %v3930 = vunpack.c.l.b16 %v3832
        %v3931 = vunpack.c.l.b16 %v3833
        %v3932 = vunpack.c.l.b16 %v3834
        %v3933 = vunpack.c.l.b16 %v3835
        %v3934 = vunpack.c.l.b16 %v3836
        %v3935 = vunpack.c.l.b16 %v3837
        %v3936 = vunpack.c.l.b16 %v3838
        %v3937 = vunpack.c.l.b16 %v3839
        %v3938 = vunpack.c.l.b16 %v3840
        %v3939 = vunpack.c.l.b16 %v3841
        %v3940 = vunpack.c.l.b16 %v3842
        %v3941 = vpack.c.b16 %v3910, %v3909
        %v3942 = vpack.c.b16 %v3912, %v3911
        %v3943 = vpack.c.b16 %v3914, %v3913
        %v3944 = vpack.c.b16 %v3916, %v3915
        %v3945 = vpack.c.b16 %v3918, %v3917
        %v3946 = vpack.c.b16 %v3920, %v3919
        %v3947 = vpack.c.b16 %v3922, %v3921
        %v3948 = vpack.c.b16 %v3924, %v3923
        %v3949 = vpack.c.b16 %v3926, %v3925
        %v3950 = vpack.c.b16 %v3928, %v3927
        %v3951 = vpack.c.b16 %v3930, %v3929
        %v3952 = vpack.c.b16 %v3932, %v3931
        %v3953 = vpack.c.b16 %v3934, %v3933
        %v3954 = vpack.c.b16 %v3936, %v3935
        %v3955 = vpack.c.b16 %v3938, %v3937
        %v3956 = vpack.c.b16 %v3940, %v3939
        %v3958 = vsel %vm391, %v3941, 0
        %v3961 = vsel %vm391, %v3942, 0
        %v3964 = vsel %vm391, %v3943, 0
        %v3967 = vsel %vm391, %v3944, 0
        %v3970 = vsel %vm391, %v3945, 0
        %v3973 = vsel %vm391, %v3946, 0
        %v3976 = vsel %vm391, %v3947, 0
        %v3979 = vsel %vm391, %v3948, 0
        %v3982 = vsel %vm391, %v3949, 0
        %v3985 = vsel %vm391, %v3950, 0
        %v3988 = vsel %vm391, %v3951, 0
        %v3991 = vsel %vm391, %v3952, 0
        %v3994 = vsel %vm391, %v3953, 0
        %v3997 = vsel %vm391, %v3954, 0
        %v4000 = vsel %vm391, %v3955, 0
        %v4003 = vsel %vm391, %v3956, 0
        %v4006 = vsel %vm440, %v3876, 0
        %4008 = vmatprep.subr.bf16.mxu0 0
        %4009 = vmatpush1.bf16.msra.mxu0 0
        %4010 = vmatprep.subr.bf16.mxu0 0
        %4011 = vmatpush1.bf16.msra.mxu0 0
        %4012 = vmatprep.subr.bf16.mxu0 0
        %4013 = vmatpush1.bf16.msra.mxu0 0
        %4014 = vmatprep.subr.bf16.mxu0 0
        %4015 = vmatpush1.bf16.msra.mxu0 0
        %4016 = vmatprep.subr.bf16.mxu0 0
        %4017 = vmatpush1.bf16.msra.mxu0 0
        %4018 = vmatprep.subr.bf16.mxu0 0
        %4019 = vmatpush1.bf16.msra.mxu0 0
        %4020 = vmatprep.subr.bf16.mxu0 0
        %4021 = vmatpush1.bf16.msra.mxu0 0
        %4022 = vmatprep.subr.bf16.mxu0 0
        %4023 = vmatpush1.bf16.msra.mxu0 %v4006
        %4024 = vmatprep.subr.bf16.mxu0 0
        %4025 = vmatpush2.bf16.msra.mxu0 0
        %4026 = vmatprep.subr.bf16.mxu0 0
        %4027 = vmatpush2.bf16.msra.mxu0 0
        %4028 = vmatprep.subr.bf16.mxu0 0
        %4029 = vmatpush2.bf16.msra.mxu0 0
        %4030 = vmatprep.subr.bf16.mxu0 0
        %4031 = vmatpush2.bf16.msra.mxu0 0
        %4032 = vmatprep.subr.bf16.mxu0 0
        %4033 = vmatpush2.bf16.msra.mxu0 0
        %4034 = vmatprep.subr.bf16.mxu0 0
        %4035 = vmatpush2.bf16.msra.mxu0 0
        %4036 = vmatprep.subr.bf16.mxu0 0
        %4037 = vmatpush2.bf16.msra.mxu0 0
        %4038 = vmatprep.subr.bf16.mxu0 0
        %4039 = vmatpush2.bf16.msra.mxu0 0
        %4040 = vmatprep.mubr.bf16.mxu0 0
        %4041 = vmatmul.mubr.bf16.gmra.mxu0 %v3958
        %v4042 = vpop.f32.mrf.mxu0
        %v4043 = vadd.f32 0.0, %v4042
        %v4044 = vpop.f32.mrf.mxu0
        %v4045 = vpop.f32.mrf.mxu0
        %v4046 = vadd.f32 0.0, %v4045
        %v4047 = vpop.f32.mrf.mxu0
        %4048 = vmatprep.mubr.bf16.mxu0 0
        %4049 = vmatmul.mubr.bf16.gmra.mxu0 %v3961
        %v4050 = vpop.f32.mrf.mxu0
        %v4051 = vadd.f32 0.0, %v4050
        %v4052 = vpop.f32.mrf.mxu0
        %v4053 = vpop.f32.mrf.mxu0
        %v4054 = vadd.f32 0.0, %v4053
        %v4055 = vpop.f32.mrf.mxu0
        %4056 = vmatprep.mubr.bf16.mxu0 0
        %4057 = vmatmul.mubr.bf16.gmra.mxu0 %v3964
        %v4058 = vpop.f32.mrf.mxu0
        %v4059 = vadd.f32 0.0, %v4058
        %v4060 = vpop.f32.mrf.mxu0
        %v4061 = vpop.f32.mrf.mxu0
        %v4062 = vadd.f32 0.0, %v4061
        %v4063 = vpop.f32.mrf.mxu0
        %4064 = vmatprep.mubr.bf16.mxu0 0
        %4065 = vmatmul.mubr.bf16.gmra.mxu0 %v3967
        %v4066 = vpop.f32.mrf.mxu0
        %v4067 = vadd.f32 0.0, %v4066
        %v4068 = vpop.f32.mrf.mxu0
        %v4069 = vpop.f32.mrf.mxu0
        %v4070 = vadd.f32 0.0, %v4069
        %v4071 = vpop.f32.mrf.mxu0
        %4072 = vmatprep.mubr.bf16.mxu0 0
        %4073 = vmatmul.mubr.bf16.gmra.mxu0 %v3970
        %v4074 = vpop.f32.mrf.mxu0
        %v4075 = vadd.f32 0.0, %v4074
        %v4076 = vpop.f32.mrf.mxu0
        %v4077 = vpop.f32.mrf.mxu0
        %v4078 = vadd.f32 0.0, %v4077
        %v4079 = vpop.f32.mrf.mxu0
        %4080 = vmatprep.mubr.bf16.mxu0 0
        %4081 = vmatmul.mubr.bf16.gmra.mxu0 %v3973
        %v4082 = vpop.f32.mrf.mxu0
        %v4083 = vadd.f32 0.0, %v4082
        %v4084 = vpop.f32.mrf.mxu0
        %v4085 = vpop.f32.mrf.mxu0
        %v4086 = vadd.f32 0.0, %v4085
        %v4087 = vpop.f32.mrf.mxu0
        %4088 = vmatprep.mubr.bf16.mxu0 0
        %4089 = vmatmul.mubr.bf16.gmra.mxu0 %v3976
        %v4090 = vpop.f32.mrf.mxu0
        %v4091 = vadd.f32 0.0, %v4090
        %v4092 = vpop.f32.mrf.mxu0
        %v4093 = vpop.f32.mrf.mxu0
        %v4094 = vadd.f32 0.0, %v4093
        %v4095 = vpop.f32.mrf.mxu0
        %4096 = vmatprep.mubr.bf16.mxu0 0
        %4097 = vmatmul.mubr.bf16.gmra.mxu0 %v3979
        %v4098 = vpop.f32.mrf.mxu0
        %v4099 = vadd.f32 0.0, %v4098
        %v4100 = vpop.f32.mrf.mxu0
        %v4101 = vpop.f32.mrf.mxu0
        %v4102 = vadd.f32 0.0, %v4101
        %v4103 = vpop.f32.mrf.mxu0
        %4104 = vmatprep.mubr.bf16.mxu0 0
        %4105 = vmatmul.mubr.bf16.gmra.mxu0 %v3982
        %v4106 = vpop.f32.mrf.mxu0
        %v4107 = vadd.f32 0.0, %v4106
        %v4108 = vpop.f32.mrf.mxu0
        %v4109 = vpop.f32.mrf.mxu0
        %v4110 = vadd.f32 0.0, %v4109
        %v4111 = vpop.f32.mrf.mxu0
        %4112 = vmatprep.mubr.bf16.mxu0 0
        %4113 = vmatmul.mubr.bf16.gmra.mxu0 %v3985
        %v4114 = vpop.f32.mrf.mxu0
        %v4115 = vadd.f32 0.0, %v4114
        %v4116 = vpop.f32.mrf.mxu0
        %v4117 = vpop.f32.mrf.mxu0
        %v4118 = vadd.f32 0.0, %v4117
        %v4119 = vpop.f32.mrf.mxu0
        %4120 = vmatprep.mubr.bf16.mxu0 0
        %4121 = vmatmul.mubr.bf16.gmra.mxu0 %v3988
        %v4122 = vpop.f32.mrf.mxu0
        %v4123 = vadd.f32 0.0, %v4122
        %v4124 = vpop.f32.mrf.mxu0
        %v4125 = vpop.f32.mrf.mxu0
        %v4126 = vadd.f32 0.0, %v4125
        %v4127 = vpop.f32.mrf.mxu0
        %4128 = vmatprep.mubr.bf16.mxu0 0
        %4129 = vmatmul.mubr.bf16.gmra.mxu0 %v3991
        %v4130 = vpop.f32.mrf.mxu0
        %v4131 = vadd.f32 0.0, %v4130
        %v4132 = vpop.f32.mrf.mxu0
        %v4133 = vpop.f32.mrf.mxu0
        %v4134 = vadd.f32 0.0, %v4133
        %v4135 = vpop.f32.mrf.mxu0
        %4136 = vmatprep.mubr.bf16.mxu0 0
        %4137 = vmatmul.mubr.bf16.gmra.mxu0 %v3994
        %v4138 = vpop.f32.mrf.mxu0
        %v4139 = vadd.f32 0.0, %v4138
        %v4140 = vpop.f32.mrf.mxu0
        %v4141 = vpop.f32.mrf.mxu0
        %v4142 = vadd.f32 0.0, %v4141
        %v4143 = vpop.f32.mrf.mxu0
        %4144 = vmatprep.mubr.bf16.mxu0 0
        %4145 = vmatmul.mubr.bf16.gmra.mxu0 %v3997
        %v4146 = vpop.f32.mrf.mxu0
        %v4147 = vadd.f32 0.0, %v4146
        %v4148 = vpop.f32.mrf.mxu0
        %v4149 = vpop.f32.mrf.mxu0
        %v4150 = vadd.f32 0.0, %v4149
        %v4151 = vpop.f32.mrf.mxu0
        %4152 = vmatprep.mubr.bf16.mxu0 0
        %4153 = vmatmul.mubr.bf16.gmra.mxu0 %v4000
        %v4154 = vpop.f32.mrf.mxu0
        %v4155 = vadd.f32 0.0, %v4154
        %v4156 = vpop.f32.mrf.mxu0
        %v4157 = vpop.f32.mrf.mxu0
        %v4158 = vadd.f32 0.0, %v4157
        %v4159 = vpop.f32.mrf.mxu0
        %4160 = vmatprep.mubr.bf16.mxu0 0
        %4161 = vmatmul.mubr.bf16.gmra.mxu0 %v4003
        %v4162 = vpop.f32.mrf.mxu0
        %v4163 = vadd.f32 0.0, %v4162
        %v4164 = vpop.f32.mrf.mxu0
        %v4165 = vpop.f32.mrf.mxu0
        %v4166 = vadd.f32 0.0, %v4165
        %v4167 = vpop.f32.mrf.mxu0
        %4168 = vdwg.mxu0
        %v4169 = vadd.f32 %v3843, %v4043
        %v4170 = vadd.f32 %v3844, %v4046
        %v4171 = vadd.f32 %v3845, %v4051
        %v4172 = vadd.f32 %v3846, %v4054
        %v4173 = vadd.f32 %v3847, %v4059
        %v4174 = vadd.f32 %v3848, %v4062
        %v4175 = vadd.f32 %v3849, %v4067
        %v4176 = vadd.f32 %v3850, %v4070
        %v4177 = vadd.f32 %v3851, %v4075
        %v4178 = vadd.f32 %v3852, %v4078
        %v4179 = vadd.f32 %v3853, %v4083
        %v4180 = vadd.f32 %v3854, %v4086
        %v4181 = vadd.f32 %v3855, %v4091
        %v4182 = vadd.f32 %v3856, %v4094
        %v4183 = vadd.f32 %v3857, %v4099
        %v4184 = vadd.f32 %v3858, %v4102
        %v4185 = vadd.f32 %v3859, %v4107
        %v4186 = vadd.f32 %v3860, %v4110
        %v4187 = vadd.f32 %v3861, %v4115
        %v4188 = vadd.f32 %v3862, %v4118
        %v4189 = vadd.f32 %v3863, %v4123
        %v4190 = vadd.f32 %v3864, %v4126
        %v4191 = vadd.f32 %v3865, %v4131
        %v4192 = vadd.f32 %v3866, %v4134
        %v4193 = vadd.f32 %v3867, %v4139
        %v4194 = vadd.f32 %v3868, %v4142
        %v4195 = vadd.f32 %v3869, %v4147
        %v4196 = vadd.f32 %v3870, %v4150
        %v4197 = vadd.f32 %v3871, %v4155
        %v4198 = vadd.f32 %v3872, %v4158
        %v4199 = vadd.f32 %v3873, %v4163
        %v4200 = vadd.f32 %v3874, %v4166
        %4201 = vst [vmem:[#allocation2] sm:$0xff] %v4169
        %4202 = vst [vmem:[#allocation2 + $0x8] sm:$0xff] %v4170
        %4203 = vst [vmem:[#allocation2 + $0x10] sm:$0xff] %v4171
        %4204 = vst [vmem:[#allocation2 + $0x18] sm:$0xff] %v4172
        %4205 = vst [vmem:[#allocation2 + $0x20] sm:$0xff] %v4173
        %4206 = vst [vmem:[#allocation2 + $0x28] sm:$0xff] %v4174
        %4207 = vst [vmem:[#allocation2 + $0x30] sm:$0xff] %v4175
        %4208 = vst [vmem:[#allocation2 + $0x38] sm:$0xff] %v4176
        %4209 = vst [vmem:[#allocation2 + $0x40] sm:$0xff] %v4177
        %4210 = vst [vmem:[#allocation2 + $0x48] sm:$0xff] %v4178
        %4211 = vst [vmem:[#allocation2 + $0x50] sm:$0xff] %v4179
        %4212 = vst [vmem:[#allocation2 + $0x58] sm:$0xff] %v4180
        %4213 = vst [vmem:[#allocation2 + $0x60] sm:$0xff] %v4181
        %4214 = vst [vmem:[#allocation2 + $0x68] sm:$0xff] %v4182
        %4215 = vst [vmem:[#allocation2 + $0x70] sm:$0xff] %v4183
        %4216 = vst [vmem:[#allocation2 + $0x78] sm:$0xff] %v4184
        %4217 = vst [vmem:[#allocation2 + $0x80] sm:$0xff] %v4185
        %4218 = vst [vmem:[#allocation2 + $0x88] sm:$0xff] %v4186
        %4219 = vst [vmem:[#allocation2 + $0x90] sm:$0xff] %v4187
        %4220 = vst [vmem:[#allocation2 + $0x98] sm:$0xff] %v4188
        %4221 = vst [vmem:[#allocation2 + $0xa0] sm:$0xff] %v4189
        %4222 = vst [vmem:[#allocation2 + $0xa8] sm:$0xff] %v4190
        %4223 = vst [vmem:[#allocation2 + $0xb0] sm:$0xff] %v4191
        %4224 = vst [vmem:[#allocation2 + $0xb8] sm:$0xff] %v4192
        %4225 = vst [vmem:[#allocation2 + $0xc0] sm:$0xff] %v4193
        %4226 = vst [vmem:[#allocation2 + $0xc8] sm:$0xff] %v4194
        %4227 = vst [vmem:[#allocation2 + $0xd0] sm:$0xff] %v4195
        %4228 = vst [vmem:[#allocation2 + $0xd8] sm:$0xff] %v4196
        %4229 = vst [vmem:[#allocation2 + $0xe0] sm:$0xff] %v4197
        %4230 = vst [vmem:[#allocation2 + $0xe8] sm:$0xff] %v4198
        %4231 = vst [vmem:[#allocation2 + $0xf0] sm:$0xff] %v4199
        %4232 = vst [vmem:[#allocation2 + $0xf8] sm:$0xff] %v4200
        %v4233 = vld [vmem:[%s3810] sm:$0xf]
        %v4234 = vld [vmem:[%s3810 + $0x4] sm:$0xf]
        %v4235 = vld [vmem:[%s3810 + $0x8] sm:$0x1]
        %v4236 = vld [vmem:[%s3810 + $0xc] sm:$0xf]
        %v4237 = vld [vmem:[%s3810 + $0x10] sm:$0xf]
        %v4238 = vld [vmem:[%s3810 + $0x14] sm:$0x1]
        %v4239 = vld [vmem:[%s3810 + $0x18] sm:$0xf]
        %v4240 = vld [vmem:[%s3810 + $0x1c] sm:$0xf]
        %v4241 = vld [vmem:[%s3810 + $0x20] sm:$0x1]
        %v4242 = vld [vmem:[%s3810 + $0x24] sm:$0xf]
        %v4243 = vld [vmem:[%s3810 + $0x28] sm:$0xf]
        %v4244 = vld [vmem:[%s3810 + $0x2c] sm:$0x1]
        %v4245 = vld [vmem:[%s3810 + $0x30] sm:$0xf]
        %v4246 = vld [vmem:[%s3810 + $0x34] sm:$0xf]
        %v4247 = vld [vmem:[%s3810 + $0x38] sm:$0x1]
        %v4248 = vld [vmem:[%s3810 + $0x3c] sm:$0xf]
        %v4249 = vld [vmem:[%s3810 + $0x40] sm:$0xf]
        %v4250 = vld [vmem:[%s3810 + $0x44] sm:$0x1]
        %v4251 = vld [vmem:[%s3810 + $0x48] sm:$0xf]
        %v4252 = vld [vmem:[%s3810 + $0x4c] sm:$0xf]
        %v4253 = vld [vmem:[%s3810 + $0x50] sm:$0x1]
        %v4254 = vld [vmem:[%s3810 + $0x54] sm:$0xf]
        %v4255 = vld [vmem:[%s3810 + $0x58] sm:$0xf]
        %v4256 = vld [vmem:[%s3810 + $0x5c] sm:$0x1]
        %v4257 = vld [vmem:[%s3810 + $0x60] sm:$0xf]
        %v4258 = vld [vmem:[%s3810 + $0x64] sm:$0xf]
        %v4259 = vld [vmem:[%s3810 + $0x68] sm:$0x1]
        %v4260 = vld [vmem:[%s3810 + $0x6c] sm:$0xf]
        %v4261 = vld [vmem:[%s3810 + $0x70] sm:$0xf]
        %v4262 = vld [vmem:[%s3810 + $0x74] sm:$0x1]
        %v4263 = vld [vmem:[%s3810 + $0x78] sm:$0xf]
        %v4264 = vld [vmem:[%s3810 + $0x7c] sm:$0xf]
        %v4265 = vld [vmem:[%s3810 + $0x80] sm:$0x1]
        %v4266 = vld [vmem:[%s3810 + $0x84] sm:$0xf]
        %v4267 = vld [vmem:[%s3810 + $0x88] sm:$0xf]
        %v4268 = vld [vmem:[%s3810 + $0x8c] sm:$0x1]
        %v4269 = vld [vmem:[%s3810 + $0x90] sm:$0xf]
        %v4270 = vld [vmem:[%s3810 + $0x94] sm:$0xf]
        %v4271 = vld [vmem:[%s3810 + $0x98] sm:$0x1]
        %v4272 = vld [vmem:[%s3810 + $0x9c] sm:$0xf]
        %v4273 = vld [vmem:[%s3810 + $0xa0] sm:$0xf]
        %v4274 = vld [vmem:[%s3810 + $0xa4] sm:$0x1]
        %v4275 = vld [vmem:[%s3810 + $0xa8] sm:$0xf]
        %v4276 = vld [vmem:[%s3810 + $0xac] sm:$0xf]
        %v4277 = vld [vmem:[%s3810 + $0xb0] sm:$0x1]
        %v4278 = vld [vmem:[%s3810 + $0xb4] sm:$0xf]
        %v4279 = vld [vmem:[%s3810 + $0xb8] sm:$0xf]
        %v4280 = vld [vmem:[%s3810 + $0xbc] sm:$0x1]
        %v4282 = vshrl.u32 %v4233, 16
        %v4284 = vrot.slane %v4282, 4
        %v4285 = vshll.u32 %v4233, 16
        %v4287 = vrot.slane %v4285, 5
        %v4288 = vor.u32 %v4284, %v4287
        %v4289 = vrot.slane %v4288, 4
        %v4291 = vshll.u32 %v4234, 16
        %v4293 = vrot.slane %v4291, 5
        %v4294 = vsel %vm719, %v4289, %v4293
        %v4295 = vshrl.u32 %v4234, 16
        %v4297 = vrot.slane %v4295, 4
        %v4298 = vor.u32 %v4297, %v4293
        %v4299 = vrot.slane %v4298, 4
        %v4301 = vshll.u32 %v4235, 16
        %v4303 = vrot.slane %v4301, 5
        %v4304 = vsel %vm719, %v4299, %v4303
        %v4306 = vshrl.u32 %v4236, 16
        %v4308 = vrot.slane %v4306, 4
        %v4309 = vshll.u32 %v4236, 16
        %v4311 = vrot.slane %v4309, 5
        %v4312 = vor.u32 %v4308, %v4311
        %v4313 = vrot.slane %v4312, 4
        %v4315 = vshll.u32 %v4237, 16
        %v4317 = vrot.slane %v4315, 5
        %v4318 = vsel %vm719, %v4313, %v4317
        %v4319 = vshrl.u32 %v4237, 16
        %v4321 = vrot.slane %v4319, 4
        %v4322 = vor.u32 %v4321, %v4317
        %v4323 = vrot.slane %v4322, 4
        %v4325 = vshll.u32 %v4238, 16
        %v4327 = vrot.slane %v4325, 5
        %v4328 = vsel %vm719, %v4323, %v4327
        %v4330 = vshrl.u32 %v4239, 16
        %v4332 = vrot.slane %v4330, 4
        %v4333 = vshll.u32 %v4239, 16
        %v4335 = vrot.slane %v4333, 5
        %v4336 = vor.u32 %v4332, %v4335
        %v4337 = vrot.slane %v4336, 4
        %v4339 = vshll.u32 %v4240, 16
        %v4341 = vrot.slane %v4339, 5
        %v4342 = vsel %vm719, %v4337, %v4341
        %v4343 = vshrl.u32 %v4240, 16
        %v4345 = vrot.slane %v4343, 4
        %v4346 = vor.u32 %v4345, %v4341
        %v4347 = vrot.slane %v4346, 4
        %v4349 = vshll.u32 %v4241, 16
        %v4351 = vrot.slane %v4349, 5
        %v4352 = vsel %vm719, %v4347, %v4351
        %v4354 = vshrl.u32 %v4242, 16
        %v4356 = vrot.slane %v4354, 4
        %v4357 = vshll.u32 %v4242, 16
        %v4359 = vrot.slane %v4357, 5
        %v4360 = vor.u32 %v4356, %v4359
        %v4361 = vrot.slane %v4360, 4
        %v4363 = vshll.u32 %v4243, 16
        %v4365 = vrot.slane %v4363, 5
        %v4366 = vsel %vm719, %v4361, %v4365
        %v4367 = vshrl.u32 %v4243, 16
        %v4369 = vrot.slane %v4367, 4
        %v4370 = vor.u32 %v4369, %v4365
        %v4371 = vrot.slane %v4370, 4
        %v4373 = vshll.u32 %v4244, 16
        %v4375 = vrot.slane %v4373, 5
        %v4376 = vsel %vm719, %v4371, %v4375
        %v4378 = vshrl.u32 %v4245, 16
        %v4380 = vrot.slane %v4378, 4
        %v4381 = vshll.u32 %v4245, 16
        %v4383 = vrot.slane %v4381, 5
        %v4384 = vor.u32 %v4380, %v4383
        %v4385 = vrot.slane %v4384, 4
        %v4387 = vshll.u32 %v4246, 16
        %v4389 = vrot.slane %v4387, 5
        %v4390 = vsel %vm719, %v4385, %v4389
        %v4391 = vshrl.u32 %v4246, 16
        %v4393 = vrot.slane %v4391, 4
        %v4394 = vor.u32 %v4393, %v4389
        %v4395 = vrot.slane %v4394, 4
        %v4397 = vshll.u32 %v4247, 16
        %v4399 = vrot.slane %v4397, 5
        %v4400 = vsel %vm719, %v4395, %v4399
        %v4402 = vshrl.u32 %v4248, 16
        %v4404 = vrot.slane %v4402, 4
        %v4405 = vshll.u32 %v4248, 16
        %v4407 = vrot.slane %v4405, 5
        %v4408 = vor.u32 %v4404, %v4407
        %v4409 = vrot.slane %v4408, 4
        %v4411 = vshll.u32 %v4249, 16
        %v4413 = vrot.slane %v4411, 5
        %v4414 = vsel %vm719, %v4409, %v4413
        %v4415 = vshrl.u32 %v4249, 16
        %v4417 = vrot.slane %v4415, 4
        %v4418 = vor.u32 %v4417, %v4413
        %v4419 = vrot.slane %v4418, 4
        %v4421 = vshll.u32 %v4250, 16
        %v4423 = vrot.slane %v4421, 5
        %v4424 = vsel %vm719, %v4419, %v4423
        %v4426 = vshrl.u32 %v4251, 16
        %v4428 = vrot.slane %v4426, 4
        %v4429 = vshll.u32 %v4251, 16
        %v4431 = vrot.slane %v4429, 5
        %v4432 = vor.u32 %v4428, %v4431
        %v4433 = vrot.slane %v4432, 4
        %v4435 = vshll.u32 %v4252, 16
        %v4437 = vrot.slane %v4435, 5
        %v4438 = vsel %vm719, %v4433, %v4437
        %v4439 = vshrl.u32 %v4252, 16
        %v4441 = vrot.slane %v4439, 4
        %v4442 = vor.u32 %v4441, %v4437
        %v4443 = vrot.slane %v4442, 4
        %v4445 = vshll.u32 %v4253, 16
        %v4447 = vrot.slane %v4445, 5
        %v4448 = vsel %vm719, %v4443, %v4447
        %v4450 = vshrl.u32 %v4254, 16
        %v4452 = vrot.slane %v4450, 4
        %v4453 = vshll.u32 %v4254, 16
        %v4455 = vrot.slane %v4453, 5
        %v4456 = vor.u32 %v4452, %v4455
        %v4457 = vrot.slane %v4456, 4
        %v4459 = vshll.u32 %v4255, 16
        %v4461 = vrot.slane %v4459, 5
        %v4462 = vsel %vm719, %v4457, %v4461
        %v4463 = vshrl.u32 %v4255, 16
        %v4465 = vrot.slane %v4463, 4
        %v4466 = vor.u32 %v4465, %v4461
        %v4467 = vrot.slane %v4466, 4
        %v4469 = vshll.u32 %v4256, 16
        %v4471 = vrot.slane %v4469, 5
        %v4472 = vsel %vm719, %v4467, %v4471
        %v4474 = vshrl.u32 %v4257, 16
        %v4476 = vrot.slane %v4474, 4
        %v4477 = vshll.u32 %v4257, 16
        %v4479 = vrot.slane %v4477, 5
        %v4480 = vor.u32 %v4476, %v4479
        %v4481 = vrot.slane %v4480, 4
        %v4483 = vshll.u32 %v4258, 16
        %v4485 = vrot.slane %v4483, 5
        %v4486 = vsel %vm719, %v4481, %v4485
        %v4487 = vshrl.u32 %v4258, 16
        %v4489 = vrot.slane %v4487, 4
        %v4490 = vor.u32 %v4489, %v4485
        %v4491 = vrot.slane %v4490, 4
        %v4493 = vshll.u32 %v4259, 16
        %v4495 = vrot.slane %v4493, 5
        %v4496 = vsel %vm719, %v4491, %v4495
        %v4498 = vshrl.u32 %v4260, 16
        %v4500 = vrot.slane %v4498, 4
        %v4501 = vshll.u32 %v4260, 16
        %v4503 = vrot.slane %v4501, 5
        %v4504 = vor.u32 %v4500, %v4503
        %v4505 = vrot.slane %v4504, 4
        %v4507 = vshll.u32 %v4261, 16
        %v4509 = vrot.slane %v4507, 5
        %v4510 = vsel %vm719, %v4505, %v4509
        %v4511 = vshrl.u32 %v4261, 16
        %v4513 = vrot.slane %v4511, 4
        %v4514 = vor.u32 %v4513, %v4509
        %v4515 = vrot.slane %v4514, 4
        %v4517 = vshll.u32 %v4262, 16
        %v4519 = vrot.slane %v4517, 5
        %v4520 = vsel %vm719, %v4515, %v4519
        %v4522 = vshrl.u32 %v4263, 16
        %v4524 = vrot.slane %v4522, 4
        %v4525 = vshll.u32 %v4263, 16
        %v4527 = vrot.slane %v4525, 5
        %v4528 = vor.u32 %v4524, %v4527
        %v4529 = vrot.slane %v4528, 4
        %v4531 = vshll.u32 %v4264, 16
        %v4533 = vrot.slane %v4531, 5
        %v4534 = vsel %vm719, %v4529, %v4533
        %v4535 = vshrl.u32 %v4264, 16
        %v4537 = vrot.slane %v4535, 4
        %v4538 = vor.u32 %v4537, %v4533
        %v4539 = vrot.slane %v4538, 4
        %v4541 = vshll.u32 %v4265, 16
        %v4543 = vrot.slane %v4541, 5
        %v4544 = vsel %vm719, %v4539, %v4543
        %v4546 = vshrl.u32 %v4266, 16
        %v4548 = vrot.slane %v4546, 4
        %v4549 = vshll.u32 %v4266, 16
        %v4551 = vrot.slane %v4549, 5
        %v4552 = vor.u32 %v4548, %v4551
        %v4553 = vrot.slane %v4552, 4
        %v4555 = vshll.u32 %v4267, 16
        %v4557 = vrot.slane %v4555, 5
        %v4558 = vsel %vm719, %v4553, %v4557
        %v4559 = vshrl.u32 %v4267, 16
        %v4561 = vrot.slane %v4559, 4
        %v4562 = vor.u32 %v4561, %v4557
        %v4563 = vrot.slane %v4562, 4
        %v4565 = vshll.u32 %v4268, 16
        %v4567 = vrot.slane %v4565, 5
        %v4568 = vsel %vm719, %v4563, %v4567
        %v4570 = vshrl.u32 %v4269, 16
        %v4572 = vrot.slane %v4570, 4
        %v4573 = vshll.u32 %v4269, 16
        %v4575 = vrot.slane %v4573, 5
        %v4576 = vor.u32 %v4572, %v4575
        %v4577 = vrot.slane %v4576, 4
        %v4579 = vshll.u32 %v4270, 16
        %v4581 = vrot.slane %v4579, 5
        %v4582 = vsel %vm719, %v4577, %v4581
        %v4583 = vshrl.u32 %v4270, 16
        %v4585 = vrot.slane %v4583, 4
        %v4586 = vor.u32 %v4585, %v4581
        %v4587 = vrot.slane %v4586, 4
        %v4589 = vshll.u32 %v4271, 16
        %v4591 = vrot.slane %v4589, 5
        %v4592 = vsel %vm719, %v4587, %v4591
        %v4594 = vshrl.u32 %v4272, 16
        %v4596 = vrot.slane %v4594, 4
        %v4597 = vshll.u32 %v4272, 16
        %v4599 = vrot.slane %v4597, 5
        %v4600 = vor.u32 %v4596, %v4599
        %v4601 = vrot.slane %v4600, 4
        %v4603 = vshll.u32 %v4273, 16
        %v4605 = vrot.slane %v4603, 5
        %v4606 = vsel %vm719, %v4601, %v4605
        %v4607 = vshrl.u32 %v4273, 16
        %v4609 = vrot.slane %v4607, 4
        %v4610 = vor.u32 %v4609, %v4605
        %v4611 = vrot.slane %v4610, 4
        %v4613 = vshll.u32 %v4274, 16
        %v4615 = vrot.slane %v4613, 5
        %v4616 = vsel %vm719, %v4611, %v4615
        %v4618 = vshrl.u32 %v4275, 16
        %v4620 = vrot.slane %v4618, 4
        %v4621 = vshll.u32 %v4275, 16
        %v4623 = vrot.slane %v4621, 5
        %v4624 = vor.u32 %v4620, %v4623
        %v4625 = vrot.slane %v4624, 4
        %v4627 = vshll.u32 %v4276, 16
        %v4629 = vrot.slane %v4627, 5
        %v4630 = vsel %vm719, %v4625, %v4629
        %v4631 = vshrl.u32 %v4276, 16
        %v4633 = vrot.slane %v4631, 4
        %v4634 = vor.u32 %v4633, %v4629
        %v4635 = vrot.slane %v4634, 4
        %v4637 = vshll.u32 %v4277, 16
        %v4639 = vrot.slane %v4637, 5
        %v4640 = vsel %vm719, %v4635, %v4639
        %v4642 = vshrl.u32 %v4278, 16
        %v4644 = vrot.slane %v4642, 4
        %v4645 = vshll.u32 %v4278, 16
        %v4647 = vrot.slane %v4645, 5
        %v4648 = vor.u32 %v4644, %v4647
        %v4649 = vrot.slane %v4648, 4
        %v4651 = vshll.u32 %v4279, 16
        %v4653 = vrot.slane %v4651, 5
        %v4654 = vsel %vm719, %v4649, %v4653
        %v4655 = vshrl.u32 %v4279, 16
        %v4657 = vrot.slane %v4655, 4
        %v4658 = vor.u32 %v4657, %v4653
        %v4659 = vrot.slane %v4658, 4
        %v4661 = vshll.u32 %v4280, 16
        %v4663 = vrot.slane %v4661, 5
        %v4664 = vsel %vm719, %v4659, %v4663
        %v4665 = vld [vmem:[#allocation2] sm:$0xff]
        %v4666 = vld [vmem:[#allocation2 + $0x8] sm:$0xff]
        %v4667 = vld [vmem:[#allocation2 + $0x10] sm:$0xff]
        %v4668 = vld [vmem:[#allocation2 + $0x18] sm:$0xff]
        %v4669 = vld [vmem:[#allocation2 + $0x20] sm:$0xff]
        %v4670 = vld [vmem:[#allocation2 + $0x28] sm:$0xff]
        %v4671 = vld [vmem:[#allocation2 + $0x30] sm:$0xff]
        %v4672 = vld [vmem:[#allocation2 + $0x38] sm:$0xff]
        %v4673 = vld [vmem:[#allocation2 + $0x40] sm:$0xff]
        %v4674 = vld [vmem:[#allocation2 + $0x48] sm:$0xff]
        %v4675 = vld [vmem:[#allocation2 + $0x50] sm:$0xff]
        %v4676 = vld [vmem:[#allocation2 + $0x58] sm:$0xff]
        %v4677 = vld [vmem:[#allocation2 + $0x60] sm:$0xff]
        %v4678 = vld [vmem:[#allocation2 + $0x68] sm:$0xff]
        %v4679 = vld [vmem:[#allocation2 + $0x70] sm:$0xff]
        %v4680 = vld [vmem:[#allocation2 + $0x78] sm:$0xff]
        %v4681 = vld [vmem:[#allocation2 + $0x80] sm:$0xff]
        %v4682 = vld [vmem:[#allocation2 + $0x88] sm:$0xff]
        %v4683 = vld [vmem:[#allocation2 + $0x90] sm:$0xff]
        %v4684 = vld [vmem:[#allocation2 + $0x98] sm:$0xff]
        %v4685 = vld [vmem:[#allocation2 + $0xa0] sm:$0xff]
        %v4686 = vld [vmem:[#allocation2 + $0xa8] sm:$0xff]
        %v4687 = vld [vmem:[#allocation2 + $0xb0] sm:$0xff]
        %v4688 = vld [vmem:[#allocation2 + $0xb8] sm:$0xff]
        %v4689 = vld [vmem:[#allocation2 + $0xc0] sm:$0xff]
        %v4690 = vld [vmem:[#allocation2 + $0xc8] sm:$0xff]
        %v4691 = vld [vmem:[#allocation2 + $0xd0] sm:$0xff]
        %v4692 = vld [vmem:[#allocation2 + $0xd8] sm:$0xff]
        %v4693 = vld [vmem:[#allocation2 + $0xe0] sm:$0xff]
        %v4694 = vld [vmem:[#allocation2 + $0xe8] sm:$0xff]
        %v4695 = vld [vmem:[#allocation2 + $0xf0] sm:$0xff]
        %v4696 = vld [vmem:[#allocation2 + $0xf8] sm:$0xff]
        %s4697 = scalar_lea.vmem %s212, 14
        %v4698 = vld [vmem:[%s4697] sm:$0x3]
        %v4699 = vunpack.c.l.b16 %v4294
        %v4700 = vunpack.c.l.b16 %v4304
        %v4701 = vunpack.c.l.b16 %v4318
        %v4702 = vunpack.c.l.b16 %v4328
        %v4703 = vunpack.c.l.b16 %v4342
        %v4704 = vunpack.c.l.b16 %v4352
        %v4705 = vunpack.c.l.b16 %v4366
        %v4706 = vunpack.c.l.b16 %v4376
        %v4707 = vunpack.c.l.b16 %v4390
        %v4708 = vunpack.c.l.b16 %v4400
        %v4709 = vunpack.c.l.b16 %v4414
        %v4710 = vunpack.c.l.b16 %v4424
        %v4711 = vunpack.c.l.b16 %v4438
        %v4712 = vunpack.c.l.b16 %v4448
        %v4713 = vunpack.c.l.b16 %v4462
        %v4714 = vunpack.c.l.b16 %v4472
        %v4715 = vunpack.c.l.b16 %v4486
        %v4716 = vunpack.c.l.b16 %v4496
        %v4717 = vunpack.c.l.b16 %v4510
        %v4718 = vunpack.c.l.b16 %v4520
        %v4719 = vunpack.c.l.b16 %v4534
        %v4720 = vunpack.c.l.b16 %v4544
        %v4721 = vunpack.c.l.b16 %v4558
        %v4722 = vunpack.c.l.b16 %v4568
        %v4723 = vunpack.c.l.b16 %v4582
        %v4724 = vunpack.c.l.b16 %v4592
        %v4725 = vunpack.c.l.b16 %v4606
        %v4726 = vunpack.c.l.b16 %v4616
        %v4727 = vunpack.c.l.b16 %v4630
        %v4728 = vunpack.c.l.b16 %v4640
        %v4729 = vunpack.c.l.b16 %v4654
        %v4730 = vunpack.c.l.b16 %v4664
        %v4731 = vpack.c.b16 %v4700, %v4699
        %v4732 = vpack.c.b16 %v4702, %v4701
        %v4733 = vpack.c.b16 %v4704, %v4703
        %v4734 = vpack.c.b16 %v4706, %v4705
        %v4735 = vpack.c.b16 %v4708, %v4707
        %v4736 = vpack.c.b16 %v4710, %v4709
        %v4737 = vpack.c.b16 %v4712, %v4711
        %v4738 = vpack.c.b16 %v4714, %v4713
        %v4739 = vpack.c.b16 %v4716, %v4715
        %v4740 = vpack.c.b16 %v4718, %v4717
        %v4741 = vpack.c.b16 %v4720, %v4719
        %v4742 = vpack.c.b16 %v4722, %v4721
        %v4743 = vpack.c.b16 %v4724, %v4723
        %v4744 = vpack.c.b16 %v4726, %v4725
        %v4745 = vpack.c.b16 %v4728, %v4727
        %v4746 = vpack.c.b16 %v4730, %v4729
        %v4748 = vsel %vm391, %v4731, 0
        %v4751 = vsel %vm391, %v4732, 0
        %v4754 = vsel %vm391, %v4733, 0
        %v4757 = vsel %vm391, %v4734, 0
        %v4760 = vsel %vm391, %v4735, 0
        %v4763 = vsel %vm391, %v4736, 0
        %v4766 = vsel %vm391, %v4737, 0
        %v4769 = vsel %vm391, %v4738, 0
        %v4772 = vsel %vm391, %v4739, 0
        %v4775 = vsel %vm391, %v4740, 0
        %v4778 = vsel %vm391, %v4741, 0
        %v4781 = vsel %vm391, %v4742, 0
        %v4784 = vsel %vm391, %v4743, 0
        %v4787 = vsel %vm391, %v4744, 0
        %v4790 = vsel %vm391, %v4745, 0
        %v4793 = vsel %vm391, %v4746, 0
        %v4796 = vsel %vm440, %v4698, 0
        %4798 = vmatprep.subr.bf16.mxu0 0
        %4799 = vmatpush1.bf16.msra.mxu0 0
        %4800 = vmatprep.subr.bf16.mxu0 0
        %4801 = vmatpush1.bf16.msra.mxu0 0
        %4802 = vmatprep.subr.bf16.mxu0 0
        %4803 = vmatpush1.bf16.msra.mxu0 0
        %4804 = vmatprep.subr.bf16.mxu0 0
        %4805 = vmatpush1.bf16.msra.mxu0 0
        %4806 = vmatprep.subr.bf16.mxu0 0
        %4807 = vmatpush1.bf16.msra.mxu0 0
        %4808 = vmatprep.subr.bf16.mxu0 0
        %4809 = vmatpush1.bf16.msra.mxu0 0
        %4810 = vmatprep.subr.bf16.mxu0 0
        %4811 = vmatpush1.bf16.msra.mxu0 0
        %4812 = vmatprep.subr.bf16.mxu0 0
        %4813 = vmatpush1.bf16.msra.mxu0 %v4796
        %4814 = vmatprep.subr.bf16.mxu0 0
        %4815 = vmatpush2.bf16.msra.mxu0 0
        %4816 = vmatprep.subr.bf16.mxu0 0
        %4817 = vmatpush2.bf16.msra.mxu0 0
        %4818 = vmatprep.subr.bf16.mxu0 0
        %4819 = vmatpush2.bf16.msra.mxu0 0
        %4820 = vmatprep.subr.bf16.mxu0 0
        %4821 = vmatpush2.bf16.msra.mxu0 0
        %4822 = vmatprep.subr.bf16.mxu0 0
        %4823 = vmatpush2.bf16.msra.mxu0 0
        %4824 = vmatprep.subr.bf16.mxu0 0
        %4825 = vmatpush2.bf16.msra.mxu0 0
        %4826 = vmatprep.subr.bf16.mxu0 0
        %4827 = vmatpush2.bf16.msra.mxu0 0
        %4828 = vmatprep.subr.bf16.mxu0 0
        %4829 = vmatpush2.bf16.msra.mxu0 0
        %4830 = vmatprep.mubr.bf16.mxu0 0
        %4831 = vmatmul.mubr.bf16.gmra.mxu0 %v4748
        %v4832 = vpop.f32.mrf.mxu0
        %v4833 = vadd.f32 0.0, %v4832
        %v4834 = vpop.f32.mrf.mxu0
        %v4835 = vpop.f32.mrf.mxu0
        %v4836 = vadd.f32 0.0, %v4835
        %v4837 = vpop.f32.mrf.mxu0
        %4838 = vmatprep.mubr.bf16.mxu0 0
        %4839 = vmatmul.mubr.bf16.gmra.mxu0 %v4751
        %v4840 = vpop.f32.mrf.mxu0
        %v4841 = vadd.f32 0.0, %v4840
        %v4842 = vpop.f32.mrf.mxu0
        %v4843 = vpop.f32.mrf.mxu0
        %v4844 = vadd.f32 0.0, %v4843
        %v4845 = vpop.f32.mrf.mxu0
        %4846 = vmatprep.mubr.bf16.mxu0 0
        %4847 = vmatmul.mubr.bf16.gmra.mxu0 %v4754
        %v4848 = vpop.f32.mrf.mxu0
        %v4849 = vadd.f32 0.0, %v4848
        %v4850 = vpop.f32.mrf.mxu0
        %v4851 = vpop.f32.mrf.mxu0
        %v4852 = vadd.f32 0.0, %v4851
        %v4853 = vpop.f32.mrf.mxu0
        %4854 = vmatprep.mubr.bf16.mxu0 0
        %4855 = vmatmul.mubr.bf16.gmra.mxu0 %v4757
        %v4856 = vpop.f32.mrf.mxu0
        %v4857 = vadd.f32 0.0, %v4856
        %v4858 = vpop.f32.mrf.mxu0
        %v4859 = vpop.f32.mrf.mxu0
        %v4860 = vadd.f32 0.0, %v4859
        %v4861 = vpop.f32.mrf.mxu0
        %4862 = vmatprep.mubr.bf16.mxu0 0
        %4863 = vmatmul.mubr.bf16.gmra.mxu0 %v4760
        %v4864 = vpop.f32.mrf.mxu0
        %v4865 = vadd.f32 0.0, %v4864
        %v4866 = vpop.f32.mrf.mxu0
        %v4867 = vpop.f32.mrf.mxu0
        %v4868 = vadd.f32 0.0, %v4867
        %v4869 = vpop.f32.mrf.mxu0
        %4870 = vmatprep.mubr.bf16.mxu0 0
        %4871 = vmatmul.mubr.bf16.gmra.mxu0 %v4763
        %v4872 = vpop.f32.mrf.mxu0
        %v4873 = vadd.f32 0.0, %v4872
        %v4874 = vpop.f32.mrf.mxu0
        %v4875 = vpop.f32.mrf.mxu0
        %v4876 = vadd.f32 0.0, %v4875
        %v4877 = vpop.f32.mrf.mxu0
        %4878 = vmatprep.mubr.bf16.mxu0 0
        %4879 = vmatmul.mubr.bf16.gmra.mxu0 %v4766
        %v4880 = vpop.f32.mrf.mxu0
        %v4881 = vadd.f32 0.0, %v4880
        %v4882 = vpop.f32.mrf.mxu0
        %v4883 = vpop.f32.mrf.mxu0
        %v4884 = vadd.f32 0.0, %v4883
        %v4885 = vpop.f32.mrf.mxu0
        %4886 = vmatprep.mubr.bf16.mxu0 0
        %4887 = vmatmul.mubr.bf16.gmra.mxu0 %v4769
        %v4888 = vpop.f32.mrf.mxu0
        %v4889 = vadd.f32 0.0, %v4888
        %v4890 = vpop.f32.mrf.mxu0
        %v4891 = vpop.f32.mrf.mxu0
        %v4892 = vadd.f32 0.0, %v4891
        %v4893 = vpop.f32.mrf.mxu0
        %4894 = vmatprep.mubr.bf16.mxu0 0
        %4895 = vmatmul.mubr.bf16.gmra.mxu0 %v4772
        %v4896 = vpop.f32.mrf.mxu0
        %v4897 = vadd.f32 0.0, %v4896
        %v4898 = vpop.f32.mrf.mxu0
        %v4899 = vpop.f32.mrf.mxu0
        %v4900 = vadd.f32 0.0, %v4899
        %v4901 = vpop.f32.mrf.mxu0
        %4902 = vmatprep.mubr.bf16.mxu0 0
        %4903 = vmatmul.mubr.bf16.gmra.mxu0 %v4775
        %v4904 = vpop.f32.mrf.mxu0
        %v4905 = vadd.f32 0.0, %v4904
        %v4906 = vpop.f32.mrf.mxu0
        %v4907 = vpop.f32.mrf.mxu0
        %v4908 = vadd.f32 0.0, %v4907
        %v4909 = vpop.f32.mrf.mxu0
        %4910 = vmatprep.mubr.bf16.mxu0 0
        %4911 = vmatmul.mubr.bf16.gmra.mxu0 %v4778
        %v4912 = vpop.f32.mrf.mxu0
        %v4913 = vadd.f32 0.0, %v4912
        %v4914 = vpop.f32.mrf.mxu0
        %v4915 = vpop.f32.mrf.mxu0
        %v4916 = vadd.f32 0.0, %v4915
        %v4917 = vpop.f32.mrf.mxu0
        %4918 = vmatprep.mubr.bf16.mxu0 0
        %4919 = vmatmul.mubr.bf16.gmra.mxu0 %v4781
        %v4920 = vpop.f32.mrf.mxu0
        %v4921 = vadd.f32 0.0, %v4920
        %v4922 = vpop.f32.mrf.mxu0
        %v4923 = vpop.f32.mrf.mxu0
        %v4924 = vadd.f32 0.0, %v4923
        %v4925 = vpop.f32.mrf.mxu0
        %4926 = vmatprep.mubr.bf16.mxu0 0
        %4927 = vmatmul.mubr.bf16.gmra.mxu0 %v4784
        %v4928 = vpop.f32.mrf.mxu0
        %v4929 = vadd.f32 0.0, %v4928
        %v4930 = vpop.f32.mrf.mxu0
        %v4931 = vpop.f32.mrf.mxu0
        %v4932 = vadd.f32 0.0, %v4931
        %v4933 = vpop.f32.mrf.mxu0
        %4934 = vmatprep.mubr.bf16.mxu0 0
        %4935 = vmatmul.mubr.bf16.gmra.mxu0 %v4787
        %v4936 = vpop.f32.mrf.mxu0
        %v4937 = vadd.f32 0.0, %v4936
        %v4938 = vpop.f32.mrf.mxu0
        %v4939 = vpop.f32.mrf.mxu0
        %v4940 = vadd.f32 0.0, %v4939
        %v4941 = vpop.f32.mrf.mxu0
        %4942 = vmatprep.mubr.bf16.mxu0 0
        %4943 = vmatmul.mubr.bf16.gmra.mxu0 %v4790
        %v4944 = vpop.f32.mrf.mxu0
        %v4945 = vadd.f32 0.0, %v4944
        %v4946 = vpop.f32.mrf.mxu0
        %v4947 = vpop.f32.mrf.mxu0
        %v4948 = vadd.f32 0.0, %v4947
        %v4949 = vpop.f32.mrf.mxu0
        %4950 = vmatprep.mubr.bf16.mxu0 0
        %4951 = vmatmul.mubr.bf16.gmra.mxu0 %v4793
        %v4952 = vpop.f32.mrf.mxu0
        %v4953 = vadd.f32 0.0, %v4952
        %v4954 = vpop.f32.mrf.mxu0
        %v4955 = vpop.f32.mrf.mxu0
        %v4956 = vadd.f32 0.0, %v4955
        %v4957 = vpop.f32.mrf.mxu0
        %4958 = vdwg.mxu0
        %v4959 = vadd.f32 %v4665, %v4833
        %v4960 = vadd.f32 %v4666, %v4836
        %v4961 = vadd.f32 %v4667, %v4841
        %v4962 = vadd.f32 %v4668, %v4844
        %v4963 = vadd.f32 %v4669, %v4849
        %v4964 = vadd.f32 %v4670, %v4852
        %v4965 = vadd.f32 %v4671, %v4857
        %v4966 = vadd.f32 %v4672, %v4860
        %v4967 = vadd.f32 %v4673, %v4865
        %v4968 = vadd.f32 %v4674, %v4868
        %v4969 = vadd.f32 %v4675, %v4873
        %v4970 = vadd.f32 %v4676, %v4876
        %v4971 = vadd.f32 %v4677, %v4881
        %v4972 = vadd.f32 %v4678, %v4884
        %v4973 = vadd.f32 %v4679, %v4889
        %v4974 = vadd.f32 %v4680, %v4892
        %v4975 = vadd.f32 %v4681, %v4897
        %v4976 = vadd.f32 %v4682, %v4900
        %v4977 = vadd.f32 %v4683, %v4905
        %v4978 = vadd.f32 %v4684, %v4908
        %v4979 = vadd.f32 %v4685, %v4913
        %v4980 = vadd.f32 %v4686, %v4916
        %v4981 = vadd.f32 %v4687, %v4921
        %v4982 = vadd.f32 %v4688, %v4924
        %v4983 = vadd.f32 %v4689, %v4929
        %v4984 = vadd.f32 %v4690, %v4932
        %v4985 = vadd.f32 %v4691, %v4937
        %v4986 = vadd.f32 %v4692, %v4940
        %v4987 = vadd.f32 %v4693, %v4945
        %v4988 = vadd.f32 %v4694, %v4948
        %v4989 = vadd.f32 %v4695, %v4953
        %v4990 = vadd.f32 %v4696, %v4956
        %4991 = vst [vmem:[#allocation2] sm:$0xff] %v4959
        %4992 = vst [vmem:[#allocation2 + $0x8] sm:$0xff] %v4960
        %4993 = vst [vmem:[#allocation2 + $0x10] sm:$0xff] %v4961
        %4994 = vst [vmem:[#allocation2 + $0x18] sm:$0xff] %v4962
        %4995 = vst [vmem:[#allocation2 + $0x20] sm:$0xff] %v4963
        %4996 = vst [vmem:[#allocation2 + $0x28] sm:$0xff] %v4964
        %4997 = vst [vmem:[#allocation2 + $0x30] sm:$0xff] %v4965
        %4998 = vst [vmem:[#allocation2 + $0x38] sm:$0xff] %v4966
        %4999 = vst [vmem:[#allocation2 + $0x40] sm:$0xff] %v4967
        %5000 = vst [vmem:[#allocation2 + $0x48] sm:$0xff] %v4968
        %5001 = vst [vmem:[#allocation2 + $0x50] sm:$0xff] %v4969
        %5002 = vst [vmem:[#allocation2 + $0x58] sm:$0xff] %v4970
        %5003 = vst [vmem:[#allocation2 + $0x60] sm:$0xff] %v4971
        %5004 = vst [vmem:[#allocation2 + $0x68] sm:$0xff] %v4972
        %5005 = vst [vmem:[#allocation2 + $0x70] sm:$0xff] %v4973
        %5006 = vst [vmem:[#allocation2 + $0x78] sm:$0xff] %v4974
        %5007 = vst [vmem:[#allocation2 + $0x80] sm:$0xff] %v4975
        %5008 = vst [vmem:[#allocation2 + $0x88] sm:$0xff] %v4976
        %5009 = vst [vmem:[#allocation2 + $0x90] sm:$0xff] %v4977
        %5010 = vst [vmem:[#allocation2 + $0x98] sm:$0xff] %v4978
        %5011 = vst [vmem:[#allocation2 + $0xa0] sm:$0xff] %v4979
        %5012 = vst [vmem:[#allocation2 + $0xa8] sm:$0xff] %v4980
        %5013 = vst [vmem:[#allocation2 + $0xb0] sm:$0xff] %v4981
        %5014 = vst [vmem:[#allocation2 + $0xb8] sm:$0xff] %v4982
        %5015 = vst [vmem:[#allocation2 + $0xc0] sm:$0xff] %v4983
        %5016 = vst [vmem:[#allocation2 + $0xc8] sm:$0xff] %v4984
        %5017 = vst [vmem:[#allocation2 + $0xd0] sm:$0xff] %v4985
        %5018 = vst [vmem:[#allocation2 + $0xd8] sm:$0xff] %v4986
        %5019 = vst [vmem:[#allocation2 + $0xe0] sm:$0xff] %v4987
        %5020 = vst [vmem:[#allocation2 + $0xe8] sm:$0xff] %v4988
        %5021 = vst [vmem:[#allocation2 + $0xf0] sm:$0xff] %v4989
        %5022 = vst [vmem:[#allocation2 + $0xf8] sm:$0xff] %v4990
        %v5023 = vld [vmem:[%s3810] sm:$0xe]
        %v5024 = vld [vmem:[%s3810 + $0x4] sm:$0xf]
        %v5025 = vld [vmem:[%s3810 + $0x8] sm:$0x1]
        %v5026 = vld [vmem:[%s3810 + $0xc] sm:$0xe]
        %v5027 = vld [vmem:[%s3810 + $0x10] sm:$0xf]
        %v5028 = vld [vmem:[%s3810 + $0x14] sm:$0x1]
        %v5029 = vld [vmem:[%s3810 + $0x18] sm:$0xe]
        %v5030 = vld [vmem:[%s3810 + $0x1c] sm:$0xf]
        %v5031 = vld [vmem:[%s3810 + $0x20] sm:$0x1]
        %v5032 = vld [vmem:[%s3810 + $0x24] sm:$0xe]
        %v5033 = vld [vmem:[%s3810 + $0x28] sm:$0xf]
        %v5034 = vld [vmem:[%s3810 + $0x2c] sm:$0x1]
        %v5035 = vld [vmem:[%s3810 + $0x30] sm:$0xe]
        %v5036 = vld [vmem:[%s3810 + $0x34] sm:$0xf]
        %v5037 = vld [vmem:[%s3810 + $0x38] sm:$0x1]
        %v5038 = vld [vmem:[%s3810 + $0x3c] sm:$0xe]
        %v5039 = vld [vmem:[%s3810 + $0x40] sm:$0xf]
        %v5040 = vld [vmem:[%s3810 + $0x44] sm:$0x1]
        %v5041 = vld [vmem:[%s3810 + $0x48] sm:$0xe]
        %v5042 = vld [vmem:[%s3810 + $0x4c] sm:$0xf]
        %v5043 = vld [vmem:[%s3810 + $0x50] sm:$0x1]
        %v5044 = vld [vmem:[%s3810 + $0x54] sm:$0xe]
        %v5045 = vld [vmem:[%s3810 + $0x58] sm:$0xf]
        %v5046 = vld [vmem:[%s3810 + $0x5c] sm:$0x1]
        %v5047 = vld [vmem:[%s3810 + $0x60] sm:$0xe]
        %v5048 = vld [vmem:[%s3810 + $0x64] sm:$0xf]
        %v5049 = vld [vmem:[%s3810 + $0x68] sm:$0x1]
        %v5050 = vld [vmem:[%s3810 + $0x6c] sm:$0xe]
        %v5051 = vld [vmem:[%s3810 + $0x70] sm:$0xf]
        %v5052 = vld [vmem:[%s3810 + $0x74] sm:$0x1]
        %v5053 = vld [vmem:[%s3810 + $0x78] sm:$0xe]
        %v5054 = vld [vmem:[%s3810 + $0x7c] sm:$0xf]
        %v5055 = vld [vmem:[%s3810 + $0x80] sm:$0x1]
        %v5056 = vld [vmem:[%s3810 + $0x84] sm:$0xe]
        %v5057 = vld [vmem:[%s3810 + $0x88] sm:$0xf]
        %v5058 = vld [vmem:[%s3810 + $0x8c] sm:$0x1]
        %v5059 = vld [vmem:[%s3810 + $0x90] sm:$0xe]
        %v5060 = vld [vmem:[%s3810 + $0x94] sm:$0xf]
        %v5061 = vld [vmem:[%s3810 + $0x98] sm:$0x1]
        %v5062 = vld [vmem:[%s3810 + $0x9c] sm:$0xe]
        %v5063 = vld [vmem:[%s3810 + $0xa0] sm:$0xf]
        %v5064 = vld [vmem:[%s3810 + $0xa4] sm:$0x1]
        %v5065 = vld [vmem:[%s3810 + $0xa8] sm:$0xe]
        %v5066 = vld [vmem:[%s3810 + $0xac] sm:$0xf]
        %v5067 = vld [vmem:[%s3810 + $0xb0] sm:$0x1]
        %v5068 = vld [vmem:[%s3810 + $0xb4] sm:$0xe]
        %v5069 = vld [vmem:[%s3810 + $0xb8] sm:$0xf]
        %v5070 = vld [vmem:[%s3810 + $0xbc] sm:$0x1]
        %v5119 = vrot.slane %v5023, 5
        %v5120 = vrot.slane %v5119, 4
        %v5121 = vrot.slane %v5024, 5
        %v5122 = vsel %vm1560, %v5120, %v5121
        %v5123 = vrot.slane %v5121, 4
        %v5124 = vrot.slane %v5025, 5
        %v5125 = vsel %vm1560, %v5123, %v5124
        %v5126 = vrot.slane %v5026, 5
        %v5127 = vrot.slane %v5126, 4
        %v5128 = vrot.slane %v5027, 5
        %v5129 = vsel %vm1560, %v5127, %v5128
        %v5130 = vrot.slane %v5128, 4
        %v5131 = vrot.slane %v5028, 5
        %v5132 = vsel %vm1560, %v5130, %v5131
        %v5133 = vrot.slane %v5029, 5
        %v5134 = vrot.slane %v5133, 4
        %v5135 = vrot.slane %v5030, 5
        %v5136 = vsel %vm1560, %v5134, %v5135
        %v5137 = vrot.slane %v5135, 4
        %v5138 = vrot.slane %v5031, 5
        %v5139 = vsel %vm1560, %v5137, %v5138
        %v5140 = vrot.slane %v5032, 5
        %v5141 = vrot.slane %v5140, 4
        %v5142 = vrot.slane %v5033, 5
        %v5143 = vsel %vm1560, %v5141, %v5142
        %v5144 = vrot.slane %v5142, 4
        %v5145 = vrot.slane %v5034, 5
        %v5146 = vsel %vm1560, %v5144, %v5145
        %v5147 = vrot.slane %v5035, 5
        %v5148 = vrot.slane %v5147, 4
        %v5149 = vrot.slane %v5036, 5
        %v5150 = vsel %vm1560, %v5148, %v5149
        %v5151 = vrot.slane %v5149, 4
        %v5152 = vrot.slane %v5037, 5
        %v5153 = vsel %vm1560, %v5151, %v5152
        %v5154 = vrot.slane %v5038, 5
        %v5155 = vrot.slane %v5154, 4
        %v5156 = vrot.slane %v5039, 5
        %v5157 = vsel %vm1560, %v5155, %v5156
        %v5158 = vrot.slane %v5156, 4
        %v5159 = vrot.slane %v5040, 5
        %v5160 = vsel %vm1560, %v5158, %v5159
        %v5161 = vrot.slane %v5041, 5
        %v5162 = vrot.slane %v5161, 4
        %v5163 = vrot.slane %v5042, 5
        %v5164 = vsel %vm1560, %v5162, %v5163
        %v5165 = vrot.slane %v5163, 4
        %v5166 = vrot.slane %v5043, 5
        %v5167 = vsel %vm1560, %v5165, %v5166
        %v5168 = vrot.slane %v5044, 5
        %v5169 = vrot.slane %v5168, 4
        %v5170 = vrot.slane %v5045, 5
        %v5171 = vsel %vm1560, %v5169, %v5170
        %v5172 = vrot.slane %v5170, 4
        %v5173 = vrot.slane %v5046, 5
        %v5174 = vsel %vm1560, %v5172, %v5173
        %v5175 = vrot.slane %v5047, 5
        %v5176 = vrot.slane %v5175, 4
        %v5177 = vrot.slane %v5048, 5
        %v5178 = vsel %vm1560, %v5176, %v5177
        %v5179 = vrot.slane %v5177, 4
        %v5180 = vrot.slane %v5049, 5
        %v5181 = vsel %vm1560, %v5179, %v5180
        %v5182 = vrot.slane %v5050, 5
        %v5183 = vrot.slane %v5182, 4
        %v5184 = vrot.slane %v5051, 5
        %v5185 = vsel %vm1560, %v5183, %v5184
        %v5186 = vrot.slane %v5184, 4
        %v5187 = vrot.slane %v5052, 5
        %v5188 = vsel %vm1560, %v5186, %v5187
        %v5189 = vrot.slane %v5053, 5
        %v5190 = vrot.slane %v5189, 4
        %v5191 = vrot.slane %v5054, 5
        %v5192 = vsel %vm1560, %v5190, %v5191
        %v5193 = vrot.slane %v5191, 4
        %v5194 = vrot.slane %v5055, 5
        %v5195 = vsel %vm1560, %v5193, %v5194
        %v5196 = vrot.slane %v5056, 5
        %v5197 = vrot.slane %v5196, 4
        %v5198 = vrot.slane %v5057, 5
        %v5199 = vsel %vm1560, %v5197, %v5198
        %v5200 = vrot.slane %v5198, 4
        %v5201 = vrot.slane %v5058, 5
        %v5202 = vsel %vm1560, %v5200, %v5201
        %v5203 = vrot.slane %v5059, 5
        %v5204 = vrot.slane %v5203, 4
        %v5205 = vrot.slane %v5060, 5
        %v5206 = vsel %vm1560, %v5204, %v5205
        %v5207 = vrot.slane %v5205, 4
        %v5208 = vrot.slane %v5061, 5
        %v5209 = vsel %vm1560, %v5207, %v5208
        %v5210 = vrot.slane %v5062, 5
        %v5211 = vrot.slane %v5210, 4
        %v5212 = vrot.slane %v5063, 5
        %v5213 = vsel %vm1560, %v5211, %v5212
        %v5214 = vrot.slane %v5212, 4
        %v5215 = vrot.slane %v5064, 5
        %v5216 = vsel %vm1560, %v5214, %v5215
        %v5217 = vrot.slane %v5065, 5
        %v5218 = vrot.slane %v5217, 4
        %v5219 = vrot.slane %v5066, 5
        %v5220 = vsel %vm1560, %v5218, %v5219
        %v5221 = vrot.slane %v5219, 4
        %v5222 = vrot.slane %v5067, 5
        %v5223 = vsel %vm1560, %v5221, %v5222
        %v5224 = vrot.slane %v5068, 5
        %v5225 = vrot.slane %v5224, 4
        %v5226 = vrot.slane %v5069, 5
        %v5227 = vsel %vm1560, %v5225, %v5226
        %v5228 = vrot.slane %v5226, 4
        %v5229 = vrot.slane %v5070, 5
        %v5230 = vsel %vm1560, %v5228, %v5229
        %v5231 = vld [vmem:[#allocation2] sm:$0xff]
        %v5232 = vld [vmem:[#allocation2 + $0x8] sm:$0xff]
        %v5233 = vld [vmem:[#allocation2 + $0x10] sm:$0xff]
        %v5234 = vld [vmem:[#allocation2 + $0x18] sm:$0xff]
        %v5235 = vld [vmem:[#allocation2 + $0x20] sm:$0xff]
        %v5236 = vld [vmem:[#allocation2 + $0x28] sm:$0xff]
        %v5237 = vld [vmem:[#allocation2 + $0x30] sm:$0xff]
        %v5238 = vld [vmem:[#allocation2 + $0x38] sm:$0xff]
        %v5239 = vld [vmem:[#allocation2 + $0x40] sm:$0xff]
        %v5240 = vld [vmem:[#allocation2 + $0x48] sm:$0xff]
        %v5241 = vld [vmem:[#allocation2 + $0x50] sm:$0xff]
        %v5242 = vld [vmem:[#allocation2 + $0x58] sm:$0xff]
        %v5243 = vld [vmem:[#allocation2 + $0x60] sm:$0xff]
        %v5244 = vld [vmem:[#allocation2 + $0x68] sm:$0xff]
        %v5245 = vld [vmem:[#allocation2 + $0x70] sm:$0xff]
        %v5246 = vld [vmem:[#allocation2 + $0x78] sm:$0xff]
        %v5247 = vld [vmem:[#allocation2 + $0x80] sm:$0xff]
        %v5248 = vld [vmem:[#allocation2 + $0x88] sm:$0xff]
        %v5249 = vld [vmem:[#allocation2 + $0x90] sm:$0xff]
        %v5250 = vld [vmem:[#allocation2 + $0x98] sm:$0xff]
        %v5251 = vld [vmem:[#allocation2 + $0xa0] sm:$0xff]
        %v5252 = vld [vmem:[#allocation2 + $0xa8] sm:$0xff]
        %v5253 = vld [vmem:[#allocation2 + $0xb0] sm:$0xff]
        %v5254 = vld [vmem:[#allocation2 + $0xb8] sm:$0xff]
        %v5255 = vld [vmem:[#allocation2 + $0xc0] sm:$0xff]
        %v5256 = vld [vmem:[#allocation2 + $0xc8] sm:$0xff]
        %v5257 = vld [vmem:[#allocation2 + $0xd0] sm:$0xff]
        %v5258 = vld [vmem:[#allocation2 + $0xd8] sm:$0xff]
        %v5259 = vld [vmem:[#allocation2 + $0xe0] sm:$0xff]
        %v5260 = vld [vmem:[#allocation2 + $0xe8] sm:$0xff]
        %v5261 = vld [vmem:[#allocation2 + $0xf0] sm:$0xff]
        %v5262 = vld [vmem:[#allocation2 + $0xf8] sm:$0xff]
        %s5263 = scalar_lea.vmem %s212, 16
        %v5264 = vld [vmem:[%s5263] sm:$0x3]
        %v5265 = vunpack.c.l.b16 %v5122
        %v5266 = vunpack.c.l.b16 %v5125
        %v5267 = vunpack.c.l.b16 %v5129
        %v5268 = vunpack.c.l.b16 %v5132
        %v5269 = vunpack.c.l.b16 %v5136
        %v5270 = vunpack.c.l.b16 %v5139
        %v5271 = vunpack.c.l.b16 %v5143
        %v5272 = vunpack.c.l.b16 %v5146
        %v5273 = vunpack.c.l.b16 %v5150
        %v5274 = vunpack.c.l.b16 %v5153
        %v5275 = vunpack.c.l.b16 %v5157
        %v5276 = vunpack.c.l.b16 %v5160
        %v5277 = vunpack.c.l.b16 %v5164
        %v5278 = vunpack.c.l.b16 %v5167
        %v5279 = vunpack.c.l.b16 %v5171
        %v5280 = vunpack.c.l.b16 %v5174
        %v5281 = vunpack.c.l.b16 %v5178
        %v5282 = vunpack.c.l.b16 %v5181
        %v5283 = vunpack.c.l.b16 %v5185
        %v5284 = vunpack.c.l.b16 %v5188
        %v5285 = vunpack.c.l.b16 %v5192
        %v5286 = vunpack.c.l.b16 %v5195
        %v5287 = vunpack.c.l.b16 %v5199
        %v5288 = vunpack.c.l.b16 %v5202
        %v5289 = vunpack.c.l.b16 %v5206
        %v5290 = vunpack.c.l.b16 %v5209
        %v5291 = vunpack.c.l.b16 %v5213
        %v5292 = vunpack.c.l.b16 %v5216
        %v5293 = vunpack.c.l.b16 %v5220
        %v5294 = vunpack.c.l.b16 %v5223
        %v5295 = vunpack.c.l.b16 %v5227
        %v5296 = vunpack.c.l.b16 %v5230
        %v5297 = vpack.c.b16 %v5266, %v5265
        %v5298 = vpack.c.b16 %v5268, %v5267
        %v5299 = vpack.c.b16 %v5270, %v5269
        %v5300 = vpack.c.b16 %v5272, %v5271
        %v5301 = vpack.c.b16 %v5274, %v5273
        %v5302 = vpack.c.b16 %v5276, %v5275
        %v5303 = vpack.c.b16 %v5278, %v5277
        %v5304 = vpack.c.b16 %v5280, %v5279
        %v5305 = vpack.c.b16 %v5282, %v5281
        %v5306 = vpack.c.b16 %v5284, %v5283
        %v5307 = vpack.c.b16 %v5286, %v5285
        %v5308 = vpack.c.b16 %v5288, %v5287
        %v5309 = vpack.c.b16 %v5290, %v5289
        %v5310 = vpack.c.b16 %v5292, %v5291
        %v5311 = vpack.c.b16 %v5294, %v5293
        %v5312 = vpack.c.b16 %v5296, %v5295
        %v5314 = vsel %vm391, %v5297, 0
        %v5317 = vsel %vm391, %v5298, 0
        %v5320 = vsel %vm391, %v5299, 0
        %v5323 = vsel %vm391, %v5300, 0
        %v5326 = vsel %vm391, %v5301, 0
        %v5329 = vsel %vm391, %v5302, 0
        %v5332 = vsel %vm391, %v5303, 0
        %v5335 = vsel %vm391, %v5304, 0
        %v5338 = vsel %vm391, %v5305, 0
        %v5341 = vsel %vm391, %v5306, 0
        %v5344 = vsel %vm391, %v5307, 0
        %v5347 = vsel %vm391, %v5308, 0
        %v5350 = vsel %vm391, %v5309, 0
        %v5353 = vsel %vm391, %v5310, 0
        %v5356 = vsel %vm391, %v5311, 0
        %v5359 = vsel %vm391, %v5312, 0
        %v5362 = vsel %vm440, %v5264, 0
        %5364 = vmatprep.subr.bf16.mxu0 0
        %5365 = vmatpush1.bf16.msra.mxu0 0
        %5366 = vmatprep.subr.bf16.mxu0 0
        %5367 = vmatpush1.bf16.msra.mxu0 0
        %5368 = vmatprep.subr.bf16.mxu0 0
        %5369 = vmatpush1.bf16.msra.mxu0 0
        %5370 = vmatprep.subr.bf16.mxu0 0
        %5371 = vmatpush1.bf16.msra.mxu0 0
        %5372 = vmatprep.subr.bf16.mxu0 0
        %5373 = vmatpush1.bf16.msra.mxu0 0
        %5374 = vmatprep.subr.bf16.mxu0 0
        %5375 = vmatpush1.bf16.msra.mxu0 0
        %5376 = vmatprep.subr.bf16.mxu0 0
        %5377 = vmatpush1.bf16.msra.mxu0 0
        %5378 = vmatprep.subr.bf16.mxu0 0
        %5379 = vmatpush1.bf16.msra.mxu0 %v5362
        %5380 = vmatprep.subr.bf16.mxu0 0
        %5381 = vmatpush2.bf16.msra.mxu0 0
        %5382 = vmatprep.subr.bf16.mxu0 0
        %5383 = vmatpush2.bf16.msra.mxu0 0
        %5384 = vmatprep.subr.bf16.mxu0 0
        %5385 = vmatpush2.bf16.msra.mxu0 0
        %5386 = vmatprep.subr.bf16.mxu0 0
        %5387 = vmatpush2.bf16.msra.mxu0 0
        %5388 = vmatprep.subr.bf16.mxu0 0
        %5389 = vmatpush2.bf16.msra.mxu0 0
        %5390 = vmatprep.subr.bf16.mxu0 0
        %5391 = vmatpush2.bf16.msra.mxu0 0
        %5392 = vmatprep.subr.bf16.mxu0 0
        %5393 = vmatpush2.bf16.msra.mxu0 0
        %5394 = vmatprep.subr.bf16.mxu0 0
        %5395 = vmatpush2.bf16.msra.mxu0 0
        %5396 = vmatprep.mubr.bf16.mxu0 0
        %5397 = vmatmul.mubr.bf16.gmra.mxu0 %v5314
        %v5398 = vpop.f32.mrf.mxu0
        %v5399 = vadd.f32 0.0, %v5398
        %v5400 = vpop.f32.mrf.mxu0
        %v5401 = vpop.f32.mrf.mxu0
        %v5402 = vadd.f32 0.0, %v5401
        %v5403 = vpop.f32.mrf.mxu0
        %5404 = vmatprep.mubr.bf16.mxu0 0
        %5405 = vmatmul.mubr.bf16.gmra.mxu0 %v5317
        %v5406 = vpop.f32.mrf.mxu0
        %v5407 = vadd.f32 0.0, %v5406
        %v5408 = vpop.f32.mrf.mxu0
        %v5409 = vpop.f32.mrf.mxu0
        %v5410 = vadd.f32 0.0, %v5409
        %v5411 = vpop.f32.mrf.mxu0
        %5412 = vmatprep.mubr.bf16.mxu0 0
        %5413 = vmatmul.mubr.bf16.gmra.mxu0 %v5320
        %v5414 = vpop.f32.mrf.mxu0
        %v5415 = vadd.f32 0.0, %v5414
        %v5416 = vpop.f32.mrf.mxu0
        %v5417 = vpop.f32.mrf.mxu0
        %v5418 = vadd.f32 0.0, %v5417
        %v5419 = vpop.f32.mrf.mxu0
        %5420 = vmatprep.mubr.bf16.mxu0 0
        %5421 = vmatmul.mubr.bf16.gmra.mxu0 %v5323
        %v5422 = vpop.f32.mrf.mxu0
        %v5423 = vadd.f32 0.0, %v5422
        %v5424 = vpop.f32.mrf.mxu0
        %v5425 = vpop.f32.mrf.mxu0
        %v5426 = vadd.f32 0.0, %v5425
        %v5427 = vpop.f32.mrf.mxu0
        %5428 = vmatprep.mubr.bf16.mxu0 0
        %5429 = vmatmul.mubr.bf16.gmra.mxu0 %v5326
        %v5430 = vpop.f32.mrf.mxu0
        %v5431 = vadd.f32 0.0, %v5430
        %v5432 = vpop.f32.mrf.mxu0
        %v5433 = vpop.f32.mrf.mxu0
        %v5434 = vadd.f32 0.0, %v5433
        %v5435 = vpop.f32.mrf.mxu0
        %5436 = vmatprep.mubr.bf16.mxu0 0
        %5437 = vmatmul.mubr.bf16.gmra.mxu0 %v5329
        %v5438 = vpop.f32.mrf.mxu0
        %v5439 = vadd.f32 0.0, %v5438
        %v5440 = vpop.f32.mrf.mxu0
        %v5441 = vpop.f32.mrf.mxu0
        %v5442 = vadd.f32 0.0, %v5441
        %v5443 = vpop.f32.mrf.mxu0
        %5444 = vmatprep.mubr.bf16.mxu0 0
        %5445 = vmatmul.mubr.bf16.gmra.mxu0 %v5332
        %v5446 = vpop.f32.mrf.mxu0
        %v5447 = vadd.f32 0.0, %v5446
        %v5448 = vpop.f32.mrf.mxu0
        %v5449 = vpop.f32.mrf.mxu0
        %v5450 = vadd.f32 0.0, %v5449
        %v5451 = vpop.f32.mrf.mxu0
        %5452 = vmatprep.mubr.bf16.mxu0 0
        %5453 = vmatmul.mubr.bf16.gmra.mxu0 %v5335
        %v5454 = vpop.f32.mrf.mxu0
        %v5455 = vadd.f32 0.0, %v5454
        %v5456 = vpop.f32.mrf.mxu0
        %v5457 = vpop.f32.mrf.mxu0
        %v5458 = vadd.f32 0.0, %v5457
        %v5459 = vpop.f32.mrf.mxu0
        %5460 = vmatprep.mubr.bf16.mxu0 0
        %5461 = vmatmul.mubr.bf16.gmra.mxu0 %v5338
        %v5462 = vpop.f32.mrf.mxu0
        %v5463 = vadd.f32 0.0, %v5462
        %v5464 = vpop.f32.mrf.mxu0
        %v5465 = vpop.f32.mrf.mxu0
        %v5466 = vadd.f32 0.0, %v5465
        %v5467 = vpop.f32.mrf.mxu0
        %5468 = vmatprep.mubr.bf16.mxu0 0
        %5469 = vmatmul.mubr.bf16.gmra.mxu0 %v5341
        %v5470 = vpop.f32.mrf.mxu0
        %v5471 = vadd.f32 0.0, %v5470
        %v5472 = vpop.f32.mrf.mxu0
        %v5473 = vpop.f32.mrf.mxu0
        %v5474 = vadd.f32 0.0, %v5473
        %v5475 = vpop.f32.mrf.mxu0
        %5476 = vmatprep.mubr.bf16.mxu0 0
        %5477 = vmatmul.mubr.bf16.gmra.mxu0 %v5344
        %v5478 = vpop.f32.mrf.mxu0
        %v5479 = vadd.f32 0.0, %v5478
        %v5480 = vpop.f32.mrf.mxu0
        %v5481 = vpop.f32.mrf.mxu0
        %v5482 = vadd.f32 0.0, %v5481
        %v5483 = vpop.f32.mrf.mxu0
        %5484 = vmatprep.mubr.bf16.mxu0 0
        %5485 = vmatmul.mubr.bf16.gmra.mxu0 %v5347
        %v5486 = vpop.f32.mrf.mxu0
        %v5487 = vadd.f32 0.0, %v5486
        %v5488 = vpop.f32.mrf.mxu0
        %v5489 = vpop.f32.mrf.mxu0
        %v5490 = vadd.f32 0.0, %v5489
        %v5491 = vpop.f32.mrf.mxu0
        %5492 = vmatprep.mubr.bf16.mxu0 0
        %5493 = vmatmul.mubr.bf16.gmra.mxu0 %v5350
        %v5494 = vpop.f32.mrf.mxu0
        %v5495 = vadd.f32 0.0, %v5494
        %v5496 = vpop.f32.mrf.mxu0
        %v5497 = vpop.f32.mrf.mxu0
        %v5498 = vadd.f32 0.0, %v5497
        %v5499 = vpop.f32.mrf.mxu0
        %5500 = vmatprep.mubr.bf16.mxu0 0
        %5501 = vmatmul.mubr.bf16.gmra.mxu0 %v5353
        %v5502 = vpop.f32.mrf.mxu0
        %v5503 = vadd.f32 0.0, %v5502
        %v5504 = vpop.f32.mrf.mxu0
        %v5505 = vpop.f32.mrf.mxu0
        %v5506 = vadd.f32 0.0, %v5505
        %v5507 = vpop.f32.mrf.mxu0
        %5508 = vmatprep.mubr.bf16.mxu0 0
        %5509 = vmatmul.mubr.bf16.gmra.mxu0 %v5356
        %v5510 = vpop.f32.mrf.mxu0
        %v5511 = vadd.f32 0.0, %v5510
        %v5512 = vpop.f32.mrf.mxu0
        %v5513 = vpop.f32.mrf.mxu0
        %v5514 = vadd.f32 0.0, %v5513
        %v5515 = vpop.f32.mrf.mxu0
        %5516 = vmatprep.mubr.bf16.mxu0 0
        %5517 = vmatmul.mubr.bf16.gmra.mxu0 %v5359
        %v5518 = vpop.f32.mrf.mxu0
        %v5519 = vadd.f32 0.0, %v5518
        %v5520 = vpop.f32.mrf.mxu0
        %v5521 = vpop.f32.mrf.mxu0
        %v5522 = vadd.f32 0.0, %v5521
        %v5523 = vpop.f32.mrf.mxu0
        %5524 = vdwg.mxu0
        %v5525 = vadd.f32 %v5231, %v5399
        %v5526 = vadd.f32 %v5232, %v5402
        %v5527 = vadd.f32 %v5233, %v5407
        %v5528 = vadd.f32 %v5234, %v5410
        %v5529 = vadd.f32 %v5235, %v5415
        %v5530 = vadd.f32 %v5236, %v5418
        %v5531 = vadd.f32 %v5237, %v5423
        %v5532 = vadd.f32 %v5238, %v5426
        %v5533 = vadd.f32 %v5239, %v5431
        %v5534 = vadd.f32 %v5240, %v5434
        %v5535 = vadd.f32 %v5241, %v5439
        %v5536 = vadd.f32 %v5242, %v5442
        %v5537 = vadd.f32 %v5243, %v5447
        %v5538 = vadd.f32 %v5244, %v5450
        %v5539 = vadd.f32 %v5245, %v5455
        %v5540 = vadd.f32 %v5246, %v5458
        %v5541 = vadd.f32 %v5247, %v5463
        %v5542 = vadd.f32 %v5248, %v5466
        %v5543 = vadd.f32 %v5249, %v5471
        %v5544 = vadd.f32 %v5250, %v5474
        %v5545 = vadd.f32 %v5251, %v5479
        %v5546 = vadd.f32 %v5252, %v5482
        %v5547 = vadd.f32 %v5253, %v5487
        %v5548 = vadd.f32 %v5254, %v5490
        %v5549 = vadd.f32 %v5255, %v5495
        %v5550 = vadd.f32 %v5256, %v5498
        %v5551 = vadd.f32 %v5257, %v5503
        %v5552 = vadd.f32 %v5258, %v5506
        %v5553 = vadd.f32 %v5259, %v5511
        %v5554 = vadd.f32 %v5260, %v5514
        %v5555 = vadd.f32 %v5261, %v5519
        %v5556 = vadd.f32 %v5262, %v5522
        %5557 = vst [vmem:[#allocation2] sm:$0xff] %v5525
        %5558 = vst [vmem:[#allocation2 + $0x8] sm:$0xff] %v5526
        %5559 = vst [vmem:[#allocation2 + $0x10] sm:$0xff] %v5527
        %5560 = vst [vmem:[#allocation2 + $0x18] sm:$0xff] %v5528
        %5561 = vst [vmem:[#allocation2 + $0x20] sm:$0xff] %v5529
        %5562 = vst [vmem:[#allocation2 + $0x28] sm:$0xff] %v5530
        %5563 = vst [vmem:[#allocation2 + $0x30] sm:$0xff] %v5531
        %5564 = vst [vmem:[#allocation2 + $0x38] sm:$0xff] %v5532
        %5565 = vst [vmem:[#allocation2 + $0x40] sm:$0xff] %v5533
        %5566 = vst [vmem:[#allocation2 + $0x48] sm:$0xff] %v5534
        %5567 = vst [vmem:[#allocation2 + $0x50] sm:$0xff] %v5535
        %5568 = vst [vmem:[#allocation2 + $0x58] sm:$0xff] %v5536
        %5569 = vst [vmem:[#allocation2 + $0x60] sm:$0xff] %v5537
        %5570 = vst [vmem:[#allocation2 + $0x68] sm:$0xff] %v5538
        %5571 = vst [vmem:[#allocation2 + $0x70] sm:$0xff] %v5539
        %5572 = vst [vmem:[#allocation2 + $0x78] sm:$0xff] %v5540
        %5573 = vst [vmem:[#allocation2 + $0x80] sm:$0xff] %v5541
        %5574 = vst [vmem:[#allocation2 + $0x88] sm:$0xff] %v5542
        %5575 = vst [vmem:[#allocation2 + $0x90] sm:$0xff] %v5543
        %5576 = vst [vmem:[#allocation2 + $0x98] sm:$0xff] %v5544
        %5577 = vst [vmem:[#allocation2 + $0xa0] sm:$0xff] %v5545
        %5578 = vst [vmem:[#allocation2 + $0xa8] sm:$0xff] %v5546
        %5579 = vst [vmem:[#allocation2 + $0xb0] sm:$0xff] %v5547
        %5580 = vst [vmem:[#allocation2 + $0xb8] sm:$0xff] %v5548
        %5581 = vst [vmem:[#allocation2 + $0xc0] sm:$0xff] %v5549
        %5582 = vst [vmem:[#allocation2 + $0xc8] sm:$0xff] %v5550
        %5583 = vst [vmem:[#allocation2 + $0xd0] sm:$0xff] %v5551
        %5584 = vst [vmem:[#allocation2 + $0xd8] sm:$0xff] %v5552
        %5585 = vst [vmem:[#allocation2 + $0xe0] sm:$0xff] %v5553
        %5586 = vst [vmem:[#allocation2 + $0xe8] sm:$0xff] %v5554
        %5587 = vst [vmem:[#allocation2 + $0xf0] sm:$0xff] %v5555
        %5588 = vst [vmem:[#allocation2 + $0xf8] sm:$0xff] %v5556
        %v5589 = vld [vmem:[#allocation2] sm:$0xff]
        %v5590 = vld [vmem:[#allocation2 + $0x8] sm:$0xff]
        %v5591 = vld [vmem:[#allocation2 + $0x10] sm:$0xff]
        %v5592 = vld [vmem:[#allocation2 + $0x18] sm:$0xff]
        %v5593 = vld [vmem:[#allocation2 + $0x20] sm:$0xff]
        %v5594 = vld [vmem:[#allocation2 + $0x28] sm:$0xff]
        %v5595 = vld [vmem:[#allocation2 + $0x30] sm:$0xff]
        %v5596 = vld [vmem:[#allocation2 + $0x38] sm:$0xff]
        %v5597 = vld [vmem:[#allocation2 + $0x40] sm:$0xff]
        %v5598 = vld [vmem:[#allocation2 + $0x48] sm:$0xff]
        %v5599 = vld [vmem:[#allocation2 + $0x50] sm:$0xff]
        %v5600 = vld [vmem:[#allocation2 + $0x58] sm:$0xff]
        %v5601 = vld [vmem:[#allocation2 + $0x60] sm:$0xff]
        %v5602 = vld [vmem:[#allocation2 + $0x68] sm:$0xff]
        %v5603 = vld [vmem:[#allocation2 + $0x70] sm:$0xff]
        %v5604 = vld [vmem:[#allocation2 + $0x78] sm:$0xff]
        %v5605 = vld [vmem:[#allocation2 + $0x80] sm:$0xff]
        %v5606 = vld [vmem:[#allocation2 + $0x88] sm:$0xff]
        %v5607 = vld [vmem:[#allocation2 + $0x90] sm:$0xff]
        %v5608 = vld [vmem:[#allocation2 + $0x98] sm:$0xff]
        %v5609 = vld [vmem:[#allocation2 + $0xa0] sm:$0xff]
        %v5610 = vld [vmem:[#allocation2 + $0xa8] sm:$0xff]
        %v5611 = vld [vmem:[#allocation2 + $0xb0] sm:$0xff]
        %v5612 = vld [vmem:[#allocation2 + $0xb8] sm:$0xff]
        %v5613 = vld [vmem:[#allocation2 + $0xc0] sm:$0xff]
        %v5614 = vld [vmem:[#allocation2 + $0xc8] sm:$0xff]
        %v5615 = vld [vmem:[#allocation2 + $0xd0] sm:$0xff]
        %v5616 = vld [vmem:[#allocation2 + $0xd8] sm:$0xff]
        %v5617 = vld [vmem:[#allocation2 + $0xe0] sm:$0xff]
        %v5618 = vld [vmem:[#allocation2 + $0xe8] sm:$0xff]
        %v5619 = vld [vmem:[#allocation2 + $0xf0] sm:$0xff]
        %v5620 = vld [vmem:[#allocation2 + $0xf8] sm:$0xff]
        %5621 = vst [vmem:[%s196] sm:$0xff] %v5589
        %5622 = vst [vmem:[%s196 + $0x8] sm:$0xff] %v5590
        %5623 = vst [vmem:[%s196 + $0x10] sm:$0xff] %v5591
        %5624 = vst [vmem:[%s196 + $0x18] sm:$0xff] %v5592
        %5625 = vst [vmem:[%s196 + $0x20] sm:$0xff] %v5593
        %5626 = vst [vmem:[%s196 + $0x28] sm:$0xff] %v5594
        %5627 = vst [vmem:[%s196 + $0x30] sm:$0xff] %v5595
        %5628 = vst [vmem:[%s196 + $0x38] sm:$0xff] %v5596
        %5629 = vst [vmem:[%s196 + $0x40] sm:$0xff] %v5597
        %5630 = vst [vmem:[%s196 + $0x48] sm:$0xff] %v5598
        %5631 = vst [vmem:[%s196 + $0x50] sm:$0xff] %v5599
        %5632 = vst [vmem:[%s196 + $0x58] sm:$0xff] %v5600
        %5633 = vst [vmem:[%s196 + $0x60] sm:$0xff] %v5601
        %5634 = vst [vmem:[%s196 + $0x68] sm:$0xff] %v5602
        %5635 = vst [vmem:[%s196 + $0x70] sm:$0xff] %v5603
        %5636 = vst [vmem:[%s196 + $0x78] sm:$0xff] %v5604
        %5637 = vst [vmem:[%s196 + $0x80] sm:$0xff] %v5605
        %5638 = vst [vmem:[%s196 + $0x88] sm:$0xff] %v5606
        %5639 = vst [vmem:[%s196 + $0x90] sm:$0xff] %v5607
        %5640 = vst [vmem:[%s196 + $0x98] sm:$0xff] %v5608
        %5641 = vst [vmem:[%s196 + $0xa0] sm:$0xff] %v5609
        %5642 = vst [vmem:[%s196 + $0xa8] sm:$0xff] %v5610
        %5643 = vst [vmem:[%s196 + $0xb0] sm:$0xff] %v5611
        %5644 = vst [vmem:[%s196 + $0xb8] sm:$0xff] %v5612
        %5645 = vst [vmem:[%s196 + $0xc0] sm:$0xff] %v5613
        %5646 = vst [vmem:[%s196 + $0xc8] sm:$0xff] %v5614
        %5647 = vst [vmem:[%s196 + $0xd0] sm:$0xff] %v5615
        %5648 = vst [vmem:[%s196 + $0xd8] sm:$0xff] %v5616
        %5649 = vst [vmem:[%s196 + $0xe0] sm:$0xff] %v5617
        %5650 = vst [vmem:[%s196 + $0xe8] sm:$0xff] %v5618
        %5651 = vst [vmem:[%s196 + $0xf0] sm:$0xff] %v5619
        %5652 = vst [vmem:[%s196 + $0xf8] sm:$0xff] %v5620
        %v5653 = vadd.f32 %v5589, %v5590
        %v5654 = vadd.f32 %v5653, %v5591
        %v5655 = vadd.f32 %v5654, %v5592
        %v5656 = vadd.f32 %v5655, %v5593
        %v5657 = vadd.f32 %v5656, %v5594
        %v5658 = vadd.f32 %v5657, %v5595
        %v5659 = vadd.f32 %v5658, %v5596
        %v5660 = vadd.f32 %v5659, %v5597
        %v5661 = vadd.f32 %v5660, %v5598
        %v5662 = vadd.f32 %v5661, %v5599
        %v5663 = vadd.f32 %v5662, %v5600
        %v5664 = vadd.f32 %v5663, %v5601
        %v5665 = vadd.f32 %v5664, %v5602
        %v5666 = vadd.f32 %v5665, %v5603
        %v5667 = vadd.f32 %v5666, %v5604
        %v5668 = vadd.f32 %v5667, %v5605
        %v5669 = vadd.f32 %v5668, %v5606
        %v5670 = vadd.f32 %v5669, %v5607
        %v5671 = vadd.f32 %v5670, %v5608
        %v5672 = vadd.f32 %v5671, %v5609
        %v5673 = vadd.f32 %v5672, %v5610
        %v5674 = vadd.f32 %v5673, %v5611
        %v5675 = vadd.f32 %v5674, %v5612
        %v5676 = vadd.f32 %v5675, %v5613
        %v5677 = vadd.f32 %v5676, %v5614
        %v5678 = vadd.f32 %v5677, %v5615
        %v5679 = vadd.f32 %v5678, %v5616
        %v5680 = vadd.f32 %v5679, %v5617
        %v5681 = vadd.f32 %v5680, %v5618
        %v5682 = vadd.f32 %v5681, %v5619
        %v5683 = vadd.f32 %v5682, %v5620
        %v5684 = vrot.slane %v5683, 4
        %v5685 = vadd.f32 %v5683, %v5684
        %v5686 = vrot.slane %v5685, 2
        %v5687 = vadd.f32 %v5685, %v5686
        %v5688 = vrot.slane %v5687, 1
        %v5689 = vadd.f32 %v5687, %v5688
        %v5690 = vmul.f32 %v5589, %v5589
        %v5691 = vmul.f32 %v5590, %v5590
        %v5692 = vmul.f32 %v5591, %v5591
        %v5693 = vmul.f32 %v5592, %v5592
        %v5694 = vmul.f32 %v5593, %v5593
        %v5695 = vmul.f32 %v5594, %v5594
        %v5696 = vmul.f32 %v5595, %v5595
        %v5697 = vmul.f32 %v5596, %v5596
        %v5698 = vmul.f32 %v5597, %v5597
        %v5699 = vmul.f32 %v5598, %v5598
        %v5700 = vmul.f32 %v5599, %v5599
        %v5701 = vmul.f32 %v5600, %v5600
        %v5702 = vmul.f32 %v5601, %v5601
        %v5703 = vmul.f32 %v5602, %v5602
        %v5704 = vmul.f32 %v5603, %v5603
        %v5705 = vmul.f32 %v5604, %v5604
        %v5706 = vmul.f32 %v5605, %v5605
        %v5707 = vmul.f32 %v5606, %v5606
        %v5708 = vmul.f32 %v5607, %v5607
        %v5709 = vmul.f32 %v5608, %v5608
        %v5710 = vmul.f32 %v5609, %v5609
        %v5711 = vmul.f32 %v5610, %v5610
        %v5712 = vmul.f32 %v5611, %v5611
        %v5713 = vmul.f32 %v5612, %v5612
        %v5714 = vmul.f32 %v5613, %v5613
        %v5715 = vmul.f32 %v5614, %v5614
        %v5716 = vmul.f32 %v5615, %v5615
        %v5717 = vmul.f32 %v5616, %v5616
        %v5718 = vmul.f32 %v5617, %v5617
        %v5719 = vmul.f32 %v5618, %v5618
        %v5720 = vmul.f32 %v5619, %v5619
        %v5721 = vmul.f32 %v5620, %v5620
        %v5722 = vadd.f32 %v5690, %v5691
        %v5723 = vadd.f32 %v5722, %v5692
        %v5724 = vadd.f32 %v5723, %v5693
        %v5725 = vadd.f32 %v5724, %v5694
        %v5726 = vadd.f32 %v5725, %v5695
        %v5727 = vadd.f32 %v5726, %v5696
        %v5728 = vadd.f32 %v5727, %v5697
        %v5729 = vadd.f32 %v5728, %v5698
        %v5730 = vadd.f32 %v5729, %v5699
        %v5731 = vadd.f32 %v5730, %v5700
        %v5732 = vadd.f32 %v5731, %v5701
        %v5733 = vadd.f32 %v5732, %v5702
        %v5734 = vadd.f32 %v5733, %v5703
        %v5735 = vadd.f32 %v5734, %v5704
        %v5736 = vadd.f32 %v5735, %v5705
        %v5737 = vadd.f32 %v5736, %v5706
        %v5738 = vadd.f32 %v5737, %v5707
        %v5739 = vadd.f32 %v5738, %v5708
        %v5740 = vadd.f32 %v5739, %v5709
        %v5741 = vadd.f32 %v5740, %v5710
        %v5742 = vadd.f32 %v5741, %v5711
        %v5743 = vadd.f32 %v5742, %v5712
        %v5744 = vadd.f32 %v5743, %v5713
        %v5745 = vadd.f32 %v5744, %v5714
        %v5746 = vadd.f32 %v5745, %v5715
        %v5747 = vadd.f32 %v5746, %v5716
        %v5748 = vadd.f32 %v5747, %v5717
        %v5749 = vadd.f32 %v5748, %v5718
        %v5750 = vadd.f32 %v5749, %v5719
        %v5751 = vadd.f32 %v5750, %v5720
        %v5752 = vadd.f32 %v5751, %v5721
        %v5753 = vrot.slane %v5752, 4
        %v5754 = vadd.f32 %v5752, %v5753
        %v5755 = vrot.slane %v5754, 2
        %v5756 = vadd.f32 %v5754, %v5755
        %v5757 = vrot.slane %v5756, 1
        %v5758 = vadd.f32 %v5756, %v5757
        %vm5759 = vcmask 1040384
        %v5760 = vsel %vm5759, %v5689, %v5758
        %5761 = vst [vmem:[%s203] sm:$0x3] %v5760
        %s5762 = sand.u32 %s95, 1
        %s5763 = scalar_lea.sflag [#allocation4], %s5762
        %s5764 = sand.u32 %s95, 1
        %s5765 = smul.addr %s5764, 256
        %s5766 = scalar_lea.vmem [#allocation3], %s5765
        %s5767 = sand.u32 %s123, 1
        %s5768 = scalar_lea.sflag [#allocation6], %s5767
        %s5769 = sand.u32 %s123, 1
        %s5770 = smul.addr %s5769, 2
        %s5771 = scalar_lea.vmem [#allocation5], %s5770
        // Predicated region
        $region29: #{tpu_custom_call.1} parent=27 // pred_check
          %p5772 = pneg %p105
        $region30: #{tpu_custom_call.1} parent=27 // pred_check_branch
          %5774 = sbr.rel (%p5772) target = $region32
        $region31: #{tpu_custom_call.1} parent=27 // pred_region
          %s5776 = ssub.s32 4096, 4096
          %5777 = vsyncadd %s5763, %s5776
          %s5778 = smul.addr %s25, 32
          %s5779 = sadd.s32 %s26, %s5778
          %s5780 = smul.addr %s5779, 128
          %s5781 = scalar_lea.hbm %s2, %s5780
          %s5782 = sshll.u32 %s5766, 4
          %s5783 = int_to_ptr.vmem [resolvable:$true] %s5782
          %5788 = dma.vmem_to_hbm [thread:$0]  %s5783, 4096, %s5781, %s5763, 128, 128, 8
        $region32: #{tpu_custom_call.1} parent=27 // pred_fallthru
          _
        // Predicated region
        $region33: #{tpu_custom_call.1} parent=27 // pred_check
          %p5789 = pneg %p133
        $region34: #{tpu_custom_call.1} parent=27 // pred_check_branch
          %5791 = sbr.rel (%p5789) target = $region36
        $region35: #{tpu_custom_call.1} parent=27 // pred_region
          %s5793 = ssub.s32 32, 32
          %5794 = vsyncadd %s5768, %s5793
          %s5795 = sadd.s32 %s26, %s25
          %s5796 = smul.addr %s5795, 32
          %s5797 = scalar_lea.hbm %s3, %s5796
          %s5799 = sshll.u32 %s5771, 4
          %s5800 = int_to_ptr.vmem [resolvable:$true] %s5799
          %5802 = dma.vmem_to_hbm [thread:$0]  %s5800, 32, %s5797, %s5768
        $region36: #{tpu_custom_call.1} parent=27 // pred_fallthru
          _
      $region28: #{tpu_custom_call.1} parent=5 // pred_fallthru
        _
      %p5803 = scmp.le.s32.totalorder 2, %s16
      // Predicated region
      $region37: #{tpu_custom_call.1} parent=5 // pred_check
        %p5804 = pneg %p5803
      $region38: #{tpu_custom_call.1} parent=5 // pred_check_branch
        %5806 = sbr.rel (%p5804) target = $region40
      $region39: #{tpu_custom_call.1} parent=5 // pred_region
        %s5807 = ssub.s32 %s16, 2
        // Predicated region
        $region41: #{tpu_custom_call.1} parent=39 // pred_check
          %p5808 = pneg %p111
        $region42: #{tpu_custom_call.1} parent=39 // pred_check_branch
          %5810 = sbr.rel (%p5808) target = $region44
        $region43: #{tpu_custom_call.1} parent=39 // pred_region
          %s5811 = sand.u32 %s96, 1
          %s5812 = scalar_lea.sflag [#allocation4], %s5811
          %s5813 = sand.u32 %s96, 1
          %s5814 = smul.addr %s5813, 256
          %s5815 = scalar_lea.vmem [#allocation3], %s5814
          %5816 = dma.done %s5812, 4096
        $region44: #{tpu_custom_call.1} parent=39 // pred_fallthru
          _
        // Predicated region
        $region45: #{tpu_custom_call.1} parent=39 // pred_check
          %p5817 = pneg %p139
        $region46: #{tpu_custom_call.1} parent=39 // pred_check_branch
          %5819 = sbr.rel (%p5817) target = $region48
        $region47: #{tpu_custom_call.1} parent=39 // pred_region
          %s5820 = sand.u32 %s124, 1
          %s5821 = scalar_lea.sflag [#allocation6], %s5820
          %s5822 = sand.u32 %s124, 1
          %s5823 = smul.addr %s5822, 2
          %s5824 = scalar_lea.vmem [#allocation5], %s5823
          %5825 = dma.done %s5821, 32
        $region48: #{tpu_custom_call.1} parent=39 // pred_fallthru
          _
      $region40: #{tpu_custom_call.1} parent=5 // pred_fallthru
        _
    $region6: #{tpu_custom_call.1} parent=1 // loop_footer
      %s20 = sadd.s32 1, %s16
    $region7: #{tpu_custom_call.1} parent=1 // loop_footer_branch
      %15 = sbr.rel target = $region3
    $region8: #{tpu_custom_call.1} parent=1 // loop_exit
      _
    %5826 = vsyncpa [#allocation4], 1
    %s5827 = scalar_lea.sflag [#allocation4], 1
    %5828 = vsyncpa %s5827, 1
    %5829 = vsyncpa [#allocation6], 1
    %s5830 = scalar_lea.sflag [#allocation6], 1
    %5831 = vsyncpa %s5830, 1

</llo_original>
